<compile_context>
chip_gen: v6e
topology: v6e:2x2x1
jax: 0.10.0
libtpu: 0.0.40
codegen_flags: <defaults>
</compile_context>

<pallas_src>
import functools

import jax
import jax.numpy as jnp
from jax import lax
from jax.experimental import pallas as pl
from jax.experimental.pallas import tpu as pltpu

EPS = 1e-5


def _residual_block_kernel(x_ref, w1_ref, w2_ref, out_ref, pad_ref, acc_ref,
                           *, H, W):
    """Fused ResidualBlock for one batch element (NHWC, C on lanes).

    x_ref:   (H, W, C)     unpadded f32 input block (also the f32 residual)
    w1_ref:  (3, 3C, C)    conv1 weight packed as [dx, dy*C + cin, cout]
    w2_ref:  (3, 3C, C)    conv2 weight, same packing
    out_ref: (H, W, C)     output block
    pad_ref: (H+2, W, C)   VMEM scratch: row-reflected slab (compute dtype)
    acc_ref: (H*W, C)      VMEM scratch: f32 conv accumulator (reused twice)
    """
    C = out_ref.shape[-1]
    HW = H * W
    inv_hw = 1.0 / float(HW)
    cdt = pad_ref.dtype

    def row_reflect_store(src):
        # src: (H, W, C) value, compute dtype.  ReflectionPad2d(1) on rows:
        # padded row 0 <- row 1, padded row H+1 <- row H-2.  All stores are
        # full-width and sublane-aligned (column offset 0).
        pad_ref[1:H + 1, :, :] = src
        pad_ref[0:1, :, :] = src[1:2]
        pad_ref[H + 1:H + 2, :, :] = src[H - 2:H - 1]

    def conv3x3_into_acc(w_ref):
        # 3 matmuls (one per dx tap), each contracting over (dy, cin), K = 3C.
        slab = pad_ref[...]                                  # (H+2, W, C)
        for dx in range(3):
            # Column window for this dx.  Column reflection is folded in:
            # padded col 0 == interior col 1, padded col W+1 == interior W-2.
            if dx == 0:
                win = jnp.concatenate(
                    [slab[:, 1:2, :], slab[:, 0:W - 1, :]], axis=1)
            elif dx == 1:
                win = slab
            else:
                win = jnp.concatenate(
                    [slab[:, 1:W, :], slab[:, W - 2:W - 1, :]], axis=1)
            # dy taps slice the untiled outer (row) axis -- free views --
            # and are concatenated on the lane axis (contraction depth 3C).
            cat = jnp.concatenate(
                [win[dy:dy + H].reshape(HW, C) for dy in range(3)], axis=-1)
            contrib = jnp.dot(cat, w_ref[dx],
                              preferred_element_type=jnp.float32)
            if dx == 0:
                acc_ref[...] = contrib           # init from first dot
            else:
                acc_ref[...] += contrib

    def instance_norm_of_acc():
        # affine=False InstanceNorm over the spatial axis, f32 statistics.
        y = acc_ref[...]
        mean = jnp.sum(y, axis=0, keepdims=True) * inv_hw
        # TODO(synk): fold sum / sum-of-squares into the conv epilogue
        # (strip-wise) to avoid materialising the y*y temporary.
        var = jnp.sum(y * y, axis=0, keepdims=True) * inv_hw - mean * mean
        return (y - mean) * lax.rsqrt(var + EPS)

    # ---- Block 1: ReflPad -> Conv3x3 -> InstanceNorm -> ReLU ---------------
    row_reflect_store(x_ref[...].astype(cdt))
    conv3x3_into_acc(w1_ref)
    y1 = jnp.maximum(instance_norm_of_acc(), 0.0)

    # ---- Block 2: ReflPad -> Conv3x3 -> InstanceNorm ------------------------
    row_reflect_store(y1.astype(cdt).reshape(H, W, C))
    conv3x3_into_acc(w2_ref)
    y2 = instance_norm_of_acc()

    # ---- Residual add: f32 skip path straight from the resident input block.
    out_ref[...] = (y2.reshape(H, W, C) + x_ref[...]).astype(out_ref.dtype)


def _pack_conv_weight(w, dtype):
    """PyTorch (Cout, Cin, kh, kw) -> (kw, kh*Cin, Cout) = [dx, dy*C+cin, cout]."""
    c = w.shape[0]
    wk = jnp.transpose(w, (3, 2, 1, 0))          # [dx, dy, cin, cout]
    return wk.reshape(3, 3 * c, c).astype(dtype)


def _vmem_limit_bytes(h, w, c, compute_dtype, out_dtype):
    """Size the scoped-VMEM request to the working set, capped per generation."""
    cb = jnp.dtype(compute_dtype).itemsize
    ob = jnp.dtype(out_dtype).itemsize
    hw = h * w
    need = ((h + 2) * w * c * cb          # row-reflected slab scratch
            + hw * c * 4                  # f32 accumulator scratch
            + hw * 3 * c * cb             # lane-concatenated matmul operand
            + 2 * hw * c * 4              # normalisation / y1 temporaries
            + 2 * hw * c * 4              # f32 input block, double-buffered
            + 2 * hw * c * ob             # output block, double-buffered
            + 4 * 9 * c * c * cb)         # two packed weights, double-buffered
    need = int(need * 1.5) + (4 << 20)
    try:
        cap = int(pltpu.get_tpu_info().vmem_capacity_bytes)
    except Exception:  # pragma: no cover - conservative fallback
        cap = 64 << 20
    return max(32 << 20, min(need, cap * 4 // 5))


def residual_block_nhwc(x_nhwc, w1, w2, *, compute_dtype=jnp.bfloat16,
                        out_dtype=jnp.float32):
    """ResidualBlock on NHWC activations.  x_nhwc: (N, H, W, C) float32."""
    n, h, w, c = x_nhwc.shape
    assert h >= 2 and w >= 2, "ReflectionPad2d(1) needs H, W >= 2"
    assert w % 8 == 0, "kernel assumes W % 8 == 0 (layout-preserving reshapes)"

    w1k = _pack_conv_weight(w1, compute_dtype)
    w2k = _pack_conv_weight(w2, compute_dtype)

    kernel = functools.partial(_residual_block_kernel, H=h, W=w)
    return pl.pallas_call(
        kernel,
        out_shape=jax.ShapeDtypeStruct((n, h, w, c), out_dtype),
        grid_spec=pltpu.PrefetchScalarGridSpec(
            num_scalar_prefetch=0,
            grid=(n,),
            in_specs=[
                pl.BlockSpec((None, h, w, c), lambda i: (i, 0, 0, 0)),
                pl.BlockSpec((3, 3 * c, c), lambda i: (0, 0, 0)),
                pl.BlockSpec((3, 3 * c, c), lambda i: (0, 0, 0)),
            ],
            out_specs=pl.BlockSpec((None, h, w, c), lambda i: (i, 0, 0, 0)),
            scratch_shapes=[
                pltpu.VMEM((h + 2, w, c), compute_dtype),
                pltpu.VMEM((h * w, c), jnp.float32),
            ],
        ),
        compiler_params=pltpu.CompilerParams(
            dimension_semantics=("parallel",),
            vmem_limit_bytes=_vmem_limit_bytes(h, w, c, compute_dtype,
                                               out_dtype),
        ),
    )(x_nhwc.astype(jnp.float32), w1k, w2k)


def residual_block_forward(x, w1, b1, w2, b2, *, compute_dtype=jnp.bfloat16):
    """PyTorch-interface forward.  x: (N, C, H, W) f32; weights (C, C, 3, 3).

    Biases are dropped: a per-channel constant before an affine=False
    InstanceNorm cancels exactly.  For stacked blocks prefer
    `residual_block_nhwc` so activations stay NHWC between blocks.
    """
    del b1, b2
    x_nhwc = jnp.transpose(x, (0, 2, 3, 1))
    y = residual_block_nhwc(x_nhwc, w1, w2, compute_dtype=compute_dtype)
    return jnp.transpose(y, (0, 3, 1, 2))


def _ref_forward(x, w1, b1, w2, b2):
    """Pure-JAX reference matching the PyTorch module semantics (with biases)."""
    def block(z, wt, b, relu):
        zp = jnp.pad(z, ((0, 0), (0, 0), (1, 1), (1, 1)), mode="reflect")
        y = lax.conv_general_dilated(
            zp, wt, window_strides=(1, 1), padding="VALID",
            dimension_numbers=("NCHW", "OIHW", "NCHW"))
        y = y + b[None, :, None, None]
        mean = y.mean(axis=(2, 3), keepdims=True)
        var = y.var(axis=(2, 3), keepdims=True)
        y = (y - mean) / jnp.sqrt(var + EPS)
        return jnp.maximum(y, 0.0) if relu else y

    return x + block(block(x, w1, b1, True), w2, b2, False)


if __name__ == "__main__":
    # Small deterministic shapes: N=2, C=4, H=W=16.
    N, C, H, W = 2, 4, 16, 16
    key = jax.random.PRNGKey(0)
    kx, kw1, kb1, kw2, kb2 = jax.random.split(key, 5)

    x = jax.random.normal(kx, (N, C, H, W), dtype=jnp.float32)

    # Conv2d(C, C, 3) parameters, PyTorch-style uniform(-bound, bound) init.
    fan_in = C * 3 * 3
    bound = 1.0 / jnp.sqrt(float(fan_in))
    w1 = jax.random.uniform(kw1, (C, C, 3, 3), jnp.float32, -bound, bound)
    b1 = jax.random.uniform(kb1, (C,), jnp.float32, -bound, bound)
    w2 = jax.random.uniform(kw2, (C, C, 3, 3), jnp.float32, -bound, bound)
    b2 = jax.random.uniform(kb2, (C,), jnp.float32, -bound, bound)

    fwd = jax.jit(residual_block_forward, static_argnames=("compute_dtype",))

    # f32 compute path: tight check against the reference.
    out_f32 = jax.block_until_ready(
        fwd(x, w1, b1, w2, b2, compute_dtype=jnp.float32))
    # bf16 compute path (production configuration): loose check.
    out_bf16 = jax.block_until_ready(
        fwd(x, w1, b1, w2, b2, compute_dtype=jnp.bfloat16))

    ref = _ref_forward(x, w1, b1, w2, b2)
    assert out_f32.shape == (N, C, H, W)

    err_f32 = float(jnp.max(jnp.abs(out_f32 - ref)))
    err_bf16 = float(jnp.max(jnp.abs(out_bf16 - ref)))
    assert jnp.allclose(out_f32, ref, atol=1e-4, rtol=1e-4), (
        f"f32 max abs err = {err_f32}")
    assert err_bf16 < 7.5e-2, f"bf16 max abs err = {err_bf16}"

    print("KERNEL_OK")
</pallas_src>

<mosaic_0001>
module attributes {stable_mosaic.version = 11 : i64} {
  func.func @_residual_block_kernel(%arg0: i32, %arg1: memref<1x16x16x4xf32, #tpu.memory_space<vmem>>, %arg2: memref<3x12x4xf32, #tpu.memory_space<vmem>>, %arg3: memref<3x12x4xf32, #tpu.memory_space<vmem>>, %arg4: memref<1x16x16x4xf32, #tpu.memory_space<vmem>>, %arg5: memref<18x16x4xf32, #tpu.memory_space<vmem>>, %arg6: memref<256x4xf32, #tpu.memory_space<vmem>>) attributes {dimension_semantics = [#tpu.dimension_semantics<parallel>], iteration_bounds = array<i64: 2>, scalar_prefetch = 0 : i64, scratch_operands = 2 : i64, tpu.core_type = #tpu.core_type<tc>, window_params = [{transform_indices = @transform_0, window_bounds = array<i64: 1, 16, 16, 4>}, {pipeline_mode = #tpu.pipeline_mode<synchronous>, transform_indices = @transform_1, window_bounds = array<i64: 3, 12, 4>}, {pipeline_mode = #tpu.pipeline_mode<synchronous>, transform_indices = @transform_2, window_bounds = array<i64: 3, 12, 4>}, {transform_indices = @transform_3, window_bounds = array<i64: 1, 16, 16, 4>}]} {
    %c0 = arith.constant 0 : index
    %c0_0 = arith.constant 0 : index
    %c0_1 = arith.constant 0 : index
    %c0_2 = arith.constant 0 : index
    %0 = vector.load %arg1[%c0, %c0_0, %c0_1, %c0_2] : memref<1x16x16x4xf32, #tpu.memory_space<vmem>>, vector<1x16x16x4xf32>
    %1 = vector.shape_cast %0 : vector<1x16x16x4xf32> to vector<16x16x4xf32>
    %c1 = arith.constant 1 : index
    %c0_3 = arith.constant 0 : index
    %c0_4 = arith.constant 0 : index
    %2 = vector.load %arg5[%c1, %c0_3, %c0_4] : memref<18x16x4xf32, #tpu.memory_space<vmem>>, vector<16x16x4xf32>
    tpu.vector_store %arg5[%c1, %c0_3, %c0_4], %1 {strides = array<i32>} : memref<18x16x4xf32, #tpu.memory_space<vmem>>, vector<16x16x4xf32>,
    %3 = vector.extract_strided_slice %1 {offsets = [1, 0, 0], sizes = [1, 16, 4], strides = [1, 1, 1]} : vector<16x16x4xf32> to vector<1x16x4xf32>
    %c0_5 = arith.constant 0 : index
    %c0_6 = arith.constant 0 : index
    %c0_7 = arith.constant 0 : index
    %4 = vector.load %arg5[%c0_5, %c0_6, %c0_7] : memref<18x16x4xf32, #tpu.memory_space<vmem>>, vector<1x16x4xf32>
    tpu.vector_store %arg5[%c0_5, %c0_6, %c0_7], %3 {strides = array<i32>} : memref<18x16x4xf32, #tpu.memory_space<vmem>>, vector<1x16x4xf32>,
    %5 = vector.extract_strided_slice %1 {offsets = [14, 0, 0], sizes = [1, 16, 4], strides = [1, 1, 1]} : vector<16x16x4xf32> to vector<1x16x4xf32>
    %c17 = arith.constant 17 : index
    %c0_8 = arith.constant 0 : index
    %c0_9 = arith.constant 0 : index
    %6 = vector.load %arg5[%c17, %c0_8, %c0_9] : memref<18x16x4xf32, #tpu.memory_space<vmem>>, vector<1x16x4xf32>
    tpu.vector_store %arg5[%c17, %c0_8, %c0_9], %5 {strides = array<i32>} : memref<18x16x4xf32, #tpu.memory_space<vmem>>, vector<1x16x4xf32>,
    %c0_10 = arith.constant 0 : index
    %c0_11 = arith.constant 0 : index
    %c0_12 = arith.constant 0 : index
    %7 = vector.load %arg5[%c0_10, %c0_11, %c0_12] : memref<18x16x4xf32, #tpu.memory_space<vmem>>, vector<18x16x4xf32>
    %8 = vector.extract_strided_slice %7 {offsets = [0, 1, 0], sizes = [18, 1, 4], strides = [1, 1, 1]} : vector<18x16x4xf32> to vector<18x1x4xf32>
    %9 = vector.extract_strided_slice %7 {offsets = [0, 0, 0], sizes = [18, 15, 4], strides = [1, 1, 1]} : vector<18x16x4xf32> to vector<18x15x4xf32>
    %10 = tpu.concatenate %8, %9 in 1 : vector<18x1x4xf32>, vector<18x15x4xf32> -> vector<18x16x4xf32>
    %11 = vector.extract_strided_slice %10 {offsets = [0, 0, 0], sizes = [16, 16, 4], strides = [1, 1, 1]} : vector<18x16x4xf32> to vector<16x16x4xf32>
    %12 = vector.shape_cast %11 : vector<16x16x4xf32> to vector<256x4xf32>
    %13 = vector.extract_strided_slice %10 {offsets = [1, 0, 0], sizes = [16, 16, 4], strides = [1, 1, 1]} : vector<18x16x4xf32> to vector<16x16x4xf32>
    %14 = vector.shape_cast %13 : vector<16x16x4xf32> to vector<256x4xf32>
    %15 = vector.extract_strided_slice %10 {offsets = [2, 0, 0], sizes = [16, 16, 4], strides = [1, 1, 1]} : vector<18x16x4xf32> to vector<16x16x4xf32>
    %16 = vector.shape_cast %15 : vector<16x16x4xf32> to vector<256x4xf32>
    %17 = tpu.concatenate %12, %14, %16 in 1 : vector<256x4xf32>, vector<256x4xf32>, vector<256x4xf32> -> vector<256x12xf32>
    %c0_13 = arith.constant 0 : index
    %c0_14 = arith.constant 0 : index
    %c0_15 = arith.constant 0 : index
    %18 = vector.load %arg2[%c0_13, %c0_14, %c0_15] : memref<3x12x4xf32, #tpu.memory_space<vmem>>, vector<1x12x4xf32>
    %19 = vector.shape_cast %18 : vector<1x12x4xf32> to vector<12x4xf32>
    %cst = arith.constant dense<0.000000e+00> : vector<256x4xf32>
    %20 = tpu.matmul %17, %19, %cst {dimension_numbers = #tpu.dot_dimension_numbers<[1], [0], [0], [1], [0, 0, 1, 1], [], []>} : vector<256x12xf32>, vector<12x4xf32>, vector<256x4xf32> -> vector<256x4xf32>
    %c0_16 = arith.constant 0 : index
    %c0_17 = arith.constant 0 : index
    %21 = vector.load %arg6[%c0_16, %c0_17] : memref<256x4xf32, #tpu.memory_space<vmem>>, vector<256x4xf32>
    tpu.vector_store %arg6[%c0_16, %c0_17], %20 {strides = array<i32>} : memref<256x4xf32, #tpu.memory_space<vmem>>, vector<256x4xf32>,
    %22 = vector.extract_strided_slice %7 {offsets = [0, 0, 0], sizes = [16, 16, 4], strides = [1, 1, 1]} : vector<18x16x4xf32> to vector<16x16x4xf32>
    %23 = vector.shape_cast %22 : vector<16x16x4xf32> to vector<256x4xf32>
    %24 = vector.extract_strided_slice %7 {offsets = [1, 0, 0], sizes = [16, 16, 4], strides = [1, 1, 1]} : vector<18x16x4xf32> to vector<16x16x4xf32>
    %25 = vector.shape_cast %24 : vector<16x16x4xf32> to vector<256x4xf32>
    %26 = vector.extract_strided_slice %7 {offsets = [2, 0, 0], sizes = [16, 16, 4], strides = [1, 1, 1]} : vector<18x16x4xf32> to vector<16x16x4xf32>
    %27 = vector.shape_cast %26 : vector<16x16x4xf32> to vector<256x4xf32>
    %28 = tpu.concatenate %23, %25, %27 in 1 : vector<256x4xf32>, vector<256x4xf32>, vector<256x4xf32> -> vector<256x12xf32>
    %c1_18 = arith.constant 1 : index
    %c0_19 = arith.constant 0 : index
    %c0_20 = arith.constant 0 : index
    %29 = vector.load %arg2[%c1_18, %c0_19, %c0_20] : memref<3x12x4xf32, #tpu.memory_space<vmem>>, vector<1x12x4xf32>
    %30 = vector.shape_cast %29 : vector<1x12x4xf32> to vector<12x4xf32>
    %cst_21 = arith.constant dense<0.000000e+00> : vector<256x4xf32>
    %31 = tpu.matmul %28, %30, %cst_21 {dimension_numbers = #tpu.dot_dimension_numbers<[1], [0], [0], [1], [0, 0, 1, 1], [], []>} : vector<256x12xf32>, vector<12x4xf32>, vector<256x4xf32> -> vector<256x4xf32>
    %c0_22 = arith.constant 0 : index
    %c0_23 = arith.constant 0 : index
    %32 = vector.load %arg6[%c0_22, %c0_23] : memref<256x4xf32, #tpu.memory_space<vmem>>, vector<256x4xf32>
    %33 = arith.addf %32, %31 : vector<256x4xf32>
    %c0_24 = arith.constant 0 : index
    %c0_25 = arith.constant 0 : index
    %34 = vector.load %arg6[%c0_24, %c0_25] : memref<256x4xf32, #tpu.memory_space<vmem>>, vector<256x4xf32>
    tpu.vector_store %arg6[%c0_24, %c0_25], %33 {strides = array<i32>} : memref<256x4xf32, #tpu.memory_space<vmem>>, vector<256x4xf32>,
    %35 = vector.extract_strided_slice %7 {offsets = [0, 1, 0], sizes = [18, 15, 4], strides = [1, 1, 1]} : vector<18x16x4xf32> to vector<18x15x4xf32>
    %36 = vector.extract_strided_slice %7 {offsets = [0, 14, 0], sizes = [18, 1, 4], strides = [1, 1, 1]} : vector<18x16x4xf32> to vector<18x1x4xf32>
    %37 = tpu.concatenate %35, %36 in 1 : vector<18x15x4xf32>, vector<18x1x4xf32> -> vector<18x16x4xf32>
    %38 = vector.extract_strided_slice %37 {offsets = [0, 0, 0], sizes = [16, 16, 4], strides = [1, 1, 1]} : vector<18x16x4xf32> to vector<16x16x4xf32>
    %39 = vector.shape_cast %38 : vector<16x16x4xf32> to vector<256x4xf32>
    %40 = vector.extract_strided_slice %37 {offsets = [1, 0, 0], sizes = [16, 16, 4], strides = [1, 1, 1]} : vector<18x16x4xf32> to vector<16x16x4xf32>
    %41 = vector.shape_cast %40 : vector<16x16x4xf32> to vector<256x4xf32>
    %42 = vector.extract_strided_slice %37 {offsets = [2, 0, 0], sizes = [16, 16, 4], strides = [1, 1, 1]} : vector<18x16x4xf32> to vector<16x16x4xf32>
    %43 = vector.shape_cast %42 : vector<16x16x4xf32> to vector<256x4xf32>
    %44 = tpu.concatenate %39, %41, %43 in 1 : vector<256x4xf32>, vector<256x4xf32>, vector<256x4xf32> -> vector<256x12xf32>
    %c2 = arith.constant 2 : index
    %c0_26 = arith.constant 0 : index
    %c0_27 = arith.constant 0 : index
    %45 = vector.load %arg2[%c2, %c0_26, %c0_27] : memref<3x12x4xf32, #tpu.memory_space<vmem>>, vector<1x12x4xf32>
    %46 = vector.shape_cast %45 : vector<1x12x4xf32> to vector<12x4xf32>
    %cst_28 = arith.constant dense<0.000000e+00> : vector<256x4xf32>
    %47 = tpu.matmul %44, %46, %cst_28 {dimension_numbers = #tpu.dot_dimension_numbers<[1], [0], [0], [1], [0, 0, 1, 1], [], []>} : vector<256x12xf32>, vector<12x4xf32>, vector<256x4xf32> -> vector<256x4xf32>
    %c0_29 = arith.constant 0 : index
    %c0_30 = arith.constant 0 : index
    %48 = vector.load %arg6[%c0_29, %c0_30] : memref<256x4xf32, #tpu.memory_space<vmem>>, vector<256x4xf32>
    %49 = arith.addf %48, %47 : vector<256x4xf32>
    %c0_31 = arith.constant 0 : index
    %c0_32 = arith.constant 0 : index
    %50 = vector.load %arg6[%c0_31, %c0_32] : memref<256x4xf32, #tpu.memory_space<vmem>>, vector<256x4xf32>
    tpu.vector_store %arg6[%c0_31, %c0_32], %49 {strides = array<i32>} : memref<256x4xf32, #tpu.memory_space<vmem>>, vector<256x4xf32>,
    %c0_33 = arith.constant 0 : index
    %c0_34 = arith.constant 0 : index
    %51 = vector.load %arg6[%c0_33, %c0_34] : memref<256x4xf32, #tpu.memory_space<vmem>>, vector<256x4xf32>
    %cst_35 = arith.constant dense<0.000000e+00> : vector<4xf32>
    %52 = vector.multi_reduction <add>, %51, %cst_35 [0] : vector<256x4xf32> to vector<4xf32>
    %53 = vector.shape_cast %52 : vector<4xf32> to vector<1x4xf32>
    %cst_36 = arith.constant 3.906250e-03 : f32
    %54 = vector.broadcast %cst_36 : f32 to vector<1x4xf32>
    %55 = arith.mulf %53, %54 : vector<1x4xf32>
    %56 = arith.mulf %51, %51 : vector<256x4xf32>
    %cst_37 = arith.constant dense<0.000000e+00> : vector<4xf32>
    %57 = vector.multi_reduction <add>, %56, %cst_37 [0] : vector<256x4xf32> to vector<4xf32>
    %58 = vector.shape_cast %57 : vector<4xf32> to vector<1x4xf32>
    %cst_38 = arith.constant 3.906250e-03 : f32
    %59 = vector.broadcast %cst_38 : f32 to vector<1x4xf32>
    %60 = arith.mulf %58, %59 : vector<1x4xf32>
    %61 = arith.mulf %55, %55 : vector<1x4xf32>
    %62 = arith.subf %60, %61 : vector<1x4xf32>
    %63 = vector.broadcast %55 : vector<1x4xf32> to vector<256x4xf32>
    %64 = arith.subf %51, %63 : vector<256x4xf32>
    %cst_39 = arith.constant 9.99999974E-6 : f32
    %65 = vector.broadcast %cst_39 : f32 to vector<1x4xf32>
    %66 = arith.addf %62, %65 : vector<1x4xf32>
    %67 = math.rsqrt %66 : vector<1x4xf32>
    %68 = vector.broadcast %67 : vector<1x4xf32> to vector<256x4xf32>
    %69 = arith.mulf %64, %68 : vector<256x4xf32>
    %cst_40 = arith.constant 0.000000e+00 : f32
    %70 = vector.broadcast %cst_40 : f32 to vector<256x4xf32>
    %71 = arith.maximumf %69, %70 : vector<256x4xf32>
    %72 = vector.shape_cast %71 : vector<256x4xf32> to vector<16x16x4xf32>
    %c1_41 = arith.constant 1 : index
    %c0_42 = arith.constant 0 : index
    %c0_43 = arith.constant 0 : index
    %73 = vector.load %arg5[%c1_41, %c0_42, %c0_43] : memref<18x16x4xf32, #tpu.memory_space<vmem>>, vector<16x16x4xf32>
    tpu.vector_store %arg5[%c1_41, %c0_42, %c0_43], %72 {strides = array<i32>} : memref<18x16x4xf32, #tpu.memory_space<vmem>>, vector<16x16x4xf32>,
    %74 = vector.extract_strided_slice %72 {offsets = [1, 0, 0], sizes = [1, 16, 4], strides = [1, 1, 1]} : vector<16x16x4xf32> to vector<1x16x4xf32>
    %c0_44 = arith.constant 0 : index
    %c0_45 = arith.constant 0 : index
    %c0_46 = arith.constant 0 : index
    %75 = vector.load %arg5[%c0_44, %c0_45, %c0_46] : memref<18x16x4xf32, #tpu.memory_space<vmem>>, vector<1x16x4xf32>
    tpu.vector_store %arg5[%c0_44, %c0_45, %c0_46], %74 {strides = array<i32>} : memref<18x16x4xf32, #tpu.memory_space<vmem>>, vector<1x16x4xf32>,
    %76 = vector.extract_strided_slice %72 {offsets = [14, 0, 0], sizes = [1, 16, 4], strides = [1, 1, 1]} : vector<16x16x4xf32> to vector<1x16x4xf32>
    %c17_47 = arith.constant 17 : index
    %c0_48 = arith.constant 0 : index
    %c0_49 = arith.constant 0 : index
    %77 = vector.load %arg5[%c17_47, %c0_48, %c0_49] : memref<18x16x4xf32, #tpu.memory_space<vmem>>, vector<1x16x4xf32>
    tpu.vector_store %arg5[%c17_47, %c0_48, %c0_49], %76 {strides = array<i32>} : memref<18x16x4xf32, #tpu.memory_space<vmem>>, vector<1x16x4xf32>,
    %c0_50 = arith.constant 0 : index
    %c0_51 = arith.constant 0 : index
    %c0_52 = arith.constant 0 : index
    %78 = vector.load %arg5[%c0_50, %c0_51, %c0_52] : memref<18x16x4xf32, #tpu.memory_space<vmem>>, vector<18x16x4xf32>
    %79 = vector.extract_strided_slice %78 {offsets = [0, 1, 0], sizes = [18, 1, 4], strides = [1, 1, 1]} : vector<18x16x4xf32> to vector<18x1x4xf32>
    %80 = vector.extract_strided_slice %78 {offsets = [0, 0, 0], sizes = [18, 15, 4], strides = [1, 1, 1]} : vector<18x16x4xf32> to vector<18x15x4xf32>
    %81 = tpu.concatenate %79, %80 in 1 : vector<18x1x4xf32>, vector<18x15x4xf32> -> vector<18x16x4xf32>
    %82 = vector.extract_strided_slice %81 {offsets = [0, 0, 0], sizes = [16, 16, 4], strides = [1, 1, 1]} : vector<18x16x4xf32> to vector<16x16x4xf32>
    %83 = vector.shape_cast %82 : vector<16x16x4xf32> to vector<256x4xf32>
    %84 = vector.extract_strided_slice %81 {offsets = [1, 0, 0], sizes = [16, 16, 4], strides = [1, 1, 1]} : vector<18x16x4xf32> to vector<16x16x4xf32>
    %85 = vector.shape_cast %84 : vector<16x16x4xf32> to vector<256x4xf32>
    %86 = vector.extract_strided_slice %81 {offsets = [2, 0, 0], sizes = [16, 16, 4], strides = [1, 1, 1]} : vector<18x16x4xf32> to vector<16x16x4xf32>
    %87 = vector.shape_cast %86 : vector<16x16x4xf32> to vector<256x4xf32>
    %88 = tpu.concatenate %83, %85, %87 in 1 : vector<256x4xf32>, vector<256x4xf32>, vector<256x4xf32> -> vector<256x12xf32>
    %c0_53 = arith.constant 0 : index
    %c0_54 = arith.constant 0 : index
    %c0_55 = arith.constant 0 : index
    %89 = vector.load %arg3[%c0_53, %c0_54, %c0_55] : memref<3x12x4xf32, #tpu.memory_space<vmem>>, vector<1x12x4xf32>
    %90 = vector.shape_cast %89 : vector<1x12x4xf32> to vector<12x4xf32>
    %cst_56 = arith.constant dense<0.000000e+00> : vector<256x4xf32>
    %91 = tpu.matmul %88, %90, %cst_56 {dimension_numbers = #tpu.dot_dimension_numbers<[1], [0], [0], [1], [0, 0, 1, 1], [], []>} : vector<256x12xf32>, vector<12x4xf32>, vector<256x4xf32> -> vector<256x4xf32>
    %c0_57 = arith.constant 0 : index
    %c0_58 = arith.constant 0 : index
    %92 = vector.load %arg6[%c0_57, %c0_58] : memref<256x4xf32, #tpu.memory_space<vmem>>, vector<256x4xf32>
    tpu.vector_store %arg6[%c0_57, %c0_58], %91 {strides = array<i32>} : memref<256x4xf32, #tpu.memory_space<vmem>>, vector<256x4xf32>,
    %93 = vector.extract_strided_slice %78 {offsets = [0, 0, 0], sizes = [16, 16, 4], strides = [1, 1, 1]} : vector<18x16x4xf32> to vector<16x16x4xf32>
    %94 = vector.shape_cast %93 : vector<16x16x4xf32> to vector<256x4xf32>
    %95 = vector.extract_strided_slice %78 {offsets = [1, 0, 0], sizes = [16, 16, 4], strides = [1, 1, 1]} : vector<18x16x4xf32> to vector<16x16x4xf32>
    %96 = vector.shape_cast %95 : vector<16x16x4xf32> to vector<256x4xf32>
    %97 = vector.extract_strided_slice %78 {offsets = [2, 0, 0], sizes = [16, 16, 4], strides = [1, 1, 1]} : vector<18x16x4xf32> to vector<16x16x4xf32>
    %98 = vector.shape_cast %97 : vector<16x16x4xf32> to vector<256x4xf32>
    %99 = tpu.concatenate %94, %96, %98 in 1 : vector<256x4xf32>, vector<256x4xf32>, vector<256x4xf32> -> vector<256x12xf32>
    %c1_59 = arith.constant 1 : index
    %c0_60 = arith.constant 0 : index
    %c0_61 = arith.constant 0 : index
    %100 = vector.load %arg3[%c1_59, %c0_60, %c0_61] : memref<3x12x4xf32, #tpu.memory_space<vmem>>, vector<1x12x4xf32>
    %101 = vector.shape_cast %100 : vector<1x12x4xf32> to vector<12x4xf32>
    %cst_62 = arith.constant dense<0.000000e+00> : vector<256x4xf32>
    %102 = tpu.matmul %99, %101, %cst_62 {dimension_numbers = #tpu.dot_dimension_numbers<[1], [0], [0], [1], [0, 0, 1, 1], [], []>} : vector<256x12xf32>, vector<12x4xf32>, vector<256x4xf32> -> vector<256x4xf32>
    %c0_63 = arith.constant 0 : index
    %c0_64 = arith.constant 0 : index
    %103 = vector.load %arg6[%c0_63, %c0_64] : memref<256x4xf32, #tpu.memory_space<vmem>>, vector<256x4xf32>
    %104 = arith.addf %103, %102 : vector<256x4xf32>
    %c0_65 = arith.constant 0 : index
    %c0_66 = arith.constant 0 : index
    %105 = vector.load %arg6[%c0_65, %c0_66] : memref<256x4xf32, #tpu.memory_space<vmem>>, vector<256x4xf32>
    tpu.vector_store %arg6[%c0_65, %c0_66], %104 {strides = array<i32>} : memref<256x4xf32, #tpu.memory_space<vmem>>, vector<256x4xf32>,
    %106 = vector.extract_strided_slice %78 {offsets = [0, 1, 0], sizes = [18, 15, 4], strides = [1, 1, 1]} : vector<18x16x4xf32> to vector<18x15x4xf32>
    %107 = vector.extract_strided_slice %78 {offsets = [0, 14, 0], sizes = [18, 1, 4], strides = [1, 1, 1]} : vector<18x16x4xf32> to vector<18x1x4xf32>
    %108 = tpu.concatenate %106, %107 in 1 : vector<18x15x4xf32>, vector<18x1x4xf32> -> vector<18x16x4xf32>
    %109 = vector.extract_strided_slice %108 {offsets = [0, 0, 0], sizes = [16, 16, 4], strides = [1, 1, 1]} : vector<18x16x4xf32> to vector<16x16x4xf32>
    %110 = vector.shape_cast %109 : vector<16x16x4xf32> to vector<256x4xf32>
    %111 = vector.extract_strided_slice %108 {offsets = [1, 0, 0], sizes = [16, 16, 4], strides = [1, 1, 1]} : vector<18x16x4xf32> to vector<16x16x4xf32>
    %112 = vector.shape_cast %111 : vector<16x16x4xf32> to vector<256x4xf32>
    %113 = vector.extract_strided_slice %108 {offsets = [2, 0, 0], sizes = [16, 16, 4], strides = [1, 1, 1]} : vector<18x16x4xf32> to vector<16x16x4xf32>
    %114 = vector.shape_cast %113 : vector<16x16x4xf32> to vector<256x4xf32>
    %115 = tpu.concatenate %110, %112, %114 in 1 : vector<256x4xf32>, vector<256x4xf32>, vector<256x4xf32> -> vector<256x12xf32>
    %c2_67 = arith.constant 2 : index
    %c0_68 = arith.constant 0 : index
    %c0_69 = arith.constant 0 : index
    %116 = vector.load %arg3[%c2_67, %c0_68, %c0_69] : memref<3x12x4xf32, #tpu.memory_space<vmem>>, vector<1x12x4xf32>
    %117 = vector.shape_cast %116 : vector<1x12x4xf32> to vector<12x4xf32>
    %cst_70 = arith.constant dense<0.000000e+00> : vector<256x4xf32>
    %118 = tpu.matmul %115, %117, %cst_70 {dimension_numbers = #tpu.dot_dimension_numbers<[1], [0], [0], [1], [0, 0, 1, 1], [], []>} : vector<256x12xf32>, vector<12x4xf32>, vector<256x4xf32> -> vector<256x4xf32>
    %c0_71 = arith.constant 0 : index
    %c0_72 = arith.constant 0 : index
    %119 = vector.load %arg6[%c0_71, %c0_72] : memref<256x4xf32, #tpu.memory_space<vmem>>, vector<256x4xf32>
    %120 = arith.addf %119, %118 : vector<256x4xf32>
    %c0_73 = arith.constant 0 : index
    %c0_74 = arith.constant 0 : index
    %121 = vector.load %arg6[%c0_73, %c0_74] : memref<256x4xf32, #tpu.memory_space<vmem>>, vector<256x4xf32>
    tpu.vector_store %arg6[%c0_73, %c0_74], %120 {strides = array<i32>} : memref<256x4xf32, #tpu.memory_space<vmem>>, vector<256x4xf32>,
    %c0_75 = arith.constant 0 : index
    %c0_76 = arith.constant 0 : index
    %122 = vector.load %arg6[%c0_75, %c0_76] : memref<256x4xf32, #tpu.memory_space<vmem>>, vector<256x4xf32>
    %cst_77 = arith.constant dense<0.000000e+00> : vector<4xf32>
    %123 = vector.multi_reduction <add>, %122, %cst_77 [0] : vector<256x4xf32> to vector<4xf32>
    %124 = vector.shape_cast %123 : vector<4xf32> to vector<1x4xf32>
    %cst_78 = arith.constant 3.906250e-03 : f32
    %125 = vector.broadcast %cst_78 : f32 to vector<1x4xf32>
    %126 = arith.mulf %124, %125 : vector<1x4xf32>
    %127 = arith.mulf %122, %122 : vector<256x4xf32>
    %cst_79 = arith.constant dense<0.000000e+00> : vector<4xf32>
    %128 = vector.multi_reduction <add>, %127, %cst_79 [0] : vector<256x4xf32> to vector<4xf32>
    %129 = vector.shape_cast %128 : vector<4xf32> to vector<1x4xf32>
    %cst_80 = arith.constant 3.906250e-03 : f32
    %130 = vector.broadcast %cst_80 : f32 to vector<1x4xf32>
    %131 = arith.mulf %129, %130 : vector<1x4xf32>
    %132 = arith.mulf %126, %126 : vector<1x4xf32>
    %133 = arith.subf %131, %132 : vector<1x4xf32>
    %134 = vector.broadcast %126 : vector<1x4xf32> to vector<256x4xf32>
    %135 = arith.subf %122, %134 : vector<256x4xf32>
    %cst_81 = arith.constant 9.99999974E-6 : f32
    %136 = vector.broadcast %cst_81 : f32 to vector<1x4xf32>
    %137 = arith.addf %133, %136 : vector<1x4xf32>
    %138 = math.rsqrt %137 : vector<1x4xf32>
    %139 = vector.broadcast %138 : vector<1x4xf32> to vector<256x4xf32>
    %140 = arith.mulf %135, %139 : vector<256x4xf32>
    %141 = vector.shape_cast %140 : vector<256x4xf32> to vector<16x16x4xf32>
    %c0_82 = arith.constant 0 : index
    %c0_83 = arith.constant 0 : index
    %c0_84 = arith.constant 0 : index
    %c0_85 = arith.constant 0 : index
    %142 = vector.load %arg1[%c0_82, %c0_83, %c0_84, %c0_85] : memref<1x16x16x4xf32, #tpu.memory_space<vmem>>, vector<1x16x16x4xf32>
    %143 = vector.shape_cast %142 : vector<1x16x16x4xf32> to vector<16x16x4xf32>
    %144 = arith.addf %141, %143 : vector<16x16x4xf32>
    %c0_86 = arith.constant 0 : index
    %c0_87 = arith.constant 0 : index
    %c0_88 = arith.constant 0 : index
    %c0_89 = arith.constant 0 : index
    %145 = vector.load %arg4[%c0_86, %c0_87, %c0_88, %c0_89] : memref<1x16x16x4xf32, #tpu.memory_space<vmem>>, vector<1x16x16x4xf32>
    %146 = vector.shape_cast %145 : vector<1x16x16x4xf32> to vector<16x16x4xf32>
    %147 = vector.shape_cast %144 : vector<16x16x4xf32> to vector<1x16x16x4xf32>
    tpu.vector_store %arg4[%c0_86, %c0_87, %c0_88, %c0_89], %147 {strides = array<i32>} : memref<1x16x16x4xf32, #tpu.memory_space<vmem>>, vector<1x16x16x4xf32>,
    return
  }
  func.func @transform_0(%arg0: i32) -> (i32, i32, i32, i32) {
    %c0_i32 = arith.constant 0 : i32
    %c0_i32_0 = arith.constant 0 : i32
    %c0_i32_1 = arith.constant 0 : i32
    %c0_i32_2 = arith.constant 0 : i32
    return %arg0, %c0_i32, %c0_i32_0, %c0_i32_1 : i32, i32, i32, i32
  }
  func.func @transform_1(%arg0: i32) -> (i32, i32, i32) {
    %c0_i32 = arith.constant 0 : i32
    %c0_i32_0 = arith.constant 0 : i32
    %c0_i32_1 = arith.constant 0 : i32
    %c0_i32_2 = arith.constant 0 : i32
    return %c0_i32, %c0_i32_0, %c0_i32_1 : i32, i32, i32
  }
  func.func @transform_2(%arg0: i32) -> (i32, i32, i32) {
    %c0_i32 = arith.constant 0 : i32
    %c0_i32_0 = arith.constant 0 : i32
    %c0_i32_1 = arith.constant 0 : i32
    %c0_i32_2 = arith.constant 0 : i32
    return %c0_i32, %c0_i32_0, %c0_i32_1 : i32, i32, i32
  }
  func.func @transform_3(%arg0: i32) -> (i32, i32, i32, i32) {
    %c0_i32 = arith.constant 0 : i32
    %c0_i32_0 = arith.constant 0 : i32
    %c0_i32_1 = arith.constant 0 : i32
    %c0_i32_2 = arith.constant 0 : i32
    return %arg0, %c0_i32, %c0_i32_0, %c0_i32_1 : i32, i32, i32, i32
  }
}

</mosaic_0001>

<llo_original>
// kernel: residual_block_forward.1
$region0: #{residual_block_forward.1}
  #allocation0 [shape = 'u32[]', space=smem, size = 0x4, offset = 0x4, fixed_abs, tag = 'smem constant byte address 0x4 - core index']
  #allocation1 [shape = 'u32[144,128]{1,0:T(1,128)}', space=vmem, size = 0x12000, scoped, tag = 'internal scratch']
  #allocation2 [shape = 'f32[18,16,4]{2,1,0:T(8,128)}', space=vmem, size = 0x24000, scoped, tag = 'scratch operand']
  #allocation3 [shape = 'f32[256,4]{1,0:T(8,128)}', space=vmem, size = 0x20000, scoped, tag = 'scratch operand']
  %s0 = inlined_call_operand.vmem [shape: f32[2,16,16,4], index: 0, kind: input, shape index: {}]
  %s1 = inlined_call_operand.vmem [shape: f32[3,12,4], index: 1, kind: input, shape index: {}]
  %s2 = inlined_call_operand.vmem [shape: f32[3,12,4], index: 2, kind: input, shape index: {}]
  %s3 = inlined_call_operand.vmem [shape: f32[2,16,16,4], index: 3, kind: output, shape index: {}]
  %s4 = sld [smem:[#allocation0]]
  $region45: #{residual_block_forward.1} parent=0
    _
  %s6 = ssub.s32 1, %s4
  %s7 = scalar_select 0, %s6, %s4
  loop: start=0, step=1, limit=4
  $region2: #{residual_block_forward.1} parent=0 // loop_pre_header
    _
  $region3: #{residual_block_forward.1} parent=0 // loop_header
    %s9 = sphi 0, %s13
    %p10 = scmp.ge.s32.totalorder %s9, 4
    %s19 = sphi 0, %s21
    %s22 = sphi 0, %s19
    %s23 = sphi 0, %s22
    %s39 = sphi 0, %s23
    %s43 = sphi 0, %s43
    %s45 = sphi 0, %s43
    %s46 = sphi 0, %s45
    %s60 = sphi 0, %s46
    %s64 = sphi 0, %s64
    %s66 = sphi 0, %s64
    %s67 = sphi 0, %s66
    %s81 = sphi 0, %s67
    %s87 = sphi 0, %s89
    %s90 = sphi 0, %s87
    %s91 = sphi 0, %s90
    %s107 = sphi 0, %s91
  $region4: #{residual_block_forward.1} parent=0 // loop_header_branch
    %12 = sbr.rel (%p10) target = $region8
  $region5: #{residual_block_forward.1} parent=0 // loop_body
    %s14 = ssub.s32 %s9, 1
    %s15 = ssub.s32 %s9, 2
    %s16 = sadd.s32 %s9, 1
    %s17 = ssub.s32 %s9, %s16
    %p18 = scmp.eq.s32.totalorder %s17, 0
    %s20 = sadd.s32 %s19, 1
    %s21 = scalar_select %p18, %s19, %s20
    %p24 = pneg %p18
    %p25 = scmp.eq.s32.totalorder %s9, 1
    %p26 = por %p24, %p25
    %p27 = scmp.ne.s32.totalorder %s19, %s22
    %p28 = scmp.eq.s32.totalorder %s9, 0
    %p29 = por %p27, %p28
    %p30 = scmp.ne.s32.totalorder %s19, %s22
    %p31 = scmp.eq.s32.totalorder %s14, 1
    %p32 = por %p30, %p31
    %p33 = scmp.ne.s32.totalorder %s22, %s23
    %p34 = scmp.eq.s32.totalorder %s14, 0
    %p35 = por %p33, %p34
    %p36 = scmp.ne.s32.totalorder %s22, %s23
    %p37 = scmp.eq.s32.totalorder %s15, 1
    %p38 = por %p36, %p37
    %p40 = scmp.ne.s32.totalorder %s23, %s39
    %p41 = scmp.eq.s32.totalorder %s15, 0
    %p42 = por %p40, %p41
    %s44 = sadd.s32 %s43, 1
    %p47 = scmp.eq.s32.totalorder %s9, 1
    %p48 = scmp.ne.s32.totalorder %s43, %s45
    %p49 = scmp.eq.s32.totalorder %s9, 0
    %p50 = por %p48, %p49
    %p51 = scmp.ne.s32.totalorder %s43, %s45
    %p52 = scmp.eq.s32.totalorder %s14, 1
    %p53 = por %p51, %p52
    %p54 = scmp.ne.s32.totalorder %s45, %s46
    %p55 = scmp.eq.s32.totalorder %s14, 0
    %p56 = por %p54, %p55
    %p57 = scmp.ne.s32.totalorder %s45, %s46
    %p58 = scmp.eq.s32.totalorder %s15, 1
    %p59 = por %p57, %p58
    %p61 = scmp.ne.s32.totalorder %s46, %s60
    %p62 = scmp.eq.s32.totalorder %s15, 0
    %p63 = por %p61, %p62
    %s65 = sadd.s32 %s64, 1
    %p68 = scmp.eq.s32.totalorder %s9, 1
    %p69 = scmp.ne.s32.totalorder %s64, %s66
    %p70 = scmp.eq.s32.totalorder %s9, 0
    %p71 = por %p69, %p70
    %p72 = scmp.ne.s32.totalorder %s64, %s66
    %p73 = scmp.eq.s32.totalorder %s14, 1
    %p74 = por %p72, %p73
    %p75 = scmp.ne.s32.totalorder %s66, %s67
    %p76 = scmp.eq.s32.totalorder %s14, 0
    %p77 = por %p75, %p76
    %p78 = scmp.ne.s32.totalorder %s66, %s67
    %p79 = scmp.eq.s32.totalorder %s15, 1
    %p80 = por %p78, %p79
    %p82 = scmp.ne.s32.totalorder %s67, %s81
    %p83 = scmp.eq.s32.totalorder %s15, 0
    %p84 = por %p82, %p83
    %s85 = ssub.s32 %s9, %s16
    %p86 = scmp.eq.s32.totalorder %s85, 0
    %s88 = sadd.s32 %s87, 1
    %s89 = scalar_select %p86, %s87, %s88
    %p92 = pneg %p86
    %p93 = scmp.eq.s32.totalorder %s9, 1
    %p94 = por %p92, %p93
    %p95 = scmp.ne.s32.totalorder %s87, %s90
    %p96 = scmp.eq.s32.totalorder %s9, 0
    %p97 = por %p95, %p96
    %p98 = scmp.ne.s32.totalorder %s87, %s90
    %p99 = scmp.eq.s32.totalorder %s14, 1
    %p100 = por %p98, %p99
    %p101 = scmp.ne.s32.totalorder %s90, %s91
    %p102 = scmp.eq.s32.totalorder %s14, 0
    %p103 = por %p101, %p102
    %p104 = scmp.ne.s32.totalorder %s90, %s91
    %p105 = scmp.eq.s32.totalorder %s15, 1
    %p106 = por %p104, %p105
    %p108 = scmp.ne.s32.totalorder %s91, %s107
    %p109 = scmp.eq.s32.totalorder %s15, 0
    %p110 = por %p108, %p109
    %p111 = scmp.le.s32.totalorder 1, %s9
    %p112 = scmp.lt.s32.totalorder %s9, 3
    %p113 = pnand %p111, %p112
    %p114 = pneg %p113
    // Predicated region
    $region9: #{residual_block_forward.1} parent=5 // pred_check
      _
    $region10: #{residual_block_forward.1} parent=5 // pred_check_branch
      %116 = sbr.rel (%p113) target = $region12
    $region11: #{residual_block_forward.1} parent=5 // pred_region
      %s117 = ssub.s32 %s9, 1
      // Predicated region
      $region13: #{residual_block_forward.1} parent=11 // pred_check
        %p118 = pneg %p56
      $region14: #{residual_block_forward.1} parent=11 // pred_check_branch
        %120 = sbr.rel (%p118) target = $region16
      $region15: #{residual_block_forward.1} parent=11 // pred_region
        _
      $region16: #{residual_block_forward.1} parent=11 // pred_fallthru
        _
      // Predicated region
      $region17: #{residual_block_forward.1} parent=11 // pred_check
        %p121 = pneg %p77
      $region18: #{residual_block_forward.1} parent=11 // pred_check_branch
        %123 = sbr.rel (%p121) target = $region20
      $region19: #{residual_block_forward.1} parent=11 // pred_region
        _
      $region20: #{residual_block_forward.1} parent=11 // pred_fallthru
        _
    $region12: #{residual_block_forward.1} parent=5 // pred_fallthru
      _
    %p124 = scmp.lt.s32.totalorder %s9, 2
    // Predicated region
    $region21: #{residual_block_forward.1} parent=5 // pred_check
      %p125 = pneg %p124
    $region22: #{residual_block_forward.1} parent=5 // pred_check_branch
      %127 = sbr.rel (%p125) target = $region24
    $region23: #{residual_block_forward.1} parent=5 // pred_region
      // Predicated region
      $region25: #{residual_block_forward.1} parent=23 // pred_check
        %p128 = pneg %p29
      $region26: #{residual_block_forward.1} parent=23 // pred_check_branch
        %130 = sbr.rel (%p128) target = $region28
      $region27: #{residual_block_forward.1} parent=23 // pred_region
        %p131 = scmp.lt.s32.totalorder %s9, 1
        %s132 = scalar_select %p131, %s9, 1
        %s133 = smul.addr %s132, 32
        %s134 = smul.addr %s133, 8
        %s135 = scalar_lea.vmem %s0, %s134
      $region28: #{residual_block_forward.1} parent=23 // pred_fallthru
        _
    $region24: #{residual_block_forward.1} parent=5 // pred_fallthru
      _
    %p136 = scmp.le.s32.totalorder 1, %s9
    %p137 = scmp.lt.s32.totalorder %s9, 3
    %p138 = pnand %p136, %p137
    %p139 = pneg %p138
    // Predicated region
    $region29: #{residual_block_forward.1} parent=5 // pred_check
      _
    $region30: #{residual_block_forward.1} parent=5 // pred_check_branch
      %141 = sbr.rel (%p138) target = $region32
    $region31: #{residual_block_forward.1} parent=5 // pred_region
      %s142 = ssub.s32 %s9, 1
      %p143 = scmp.lt.s32.totalorder %s14, 1
      %s144 = scalar_select %p143, %s14, 1
      %s145 = smul.addr %s144, 32
      %s146 = smul.addr %s145, 8
      %s147 = scalar_lea.vmem %s0, %s146
      %p148 = pneg %p35
      %p149 = pneg %p32
      %p150 = pneg %p56
      %p151 = pneg %p53
      %p152 = pneg %p77
      %p153 = pneg %p74
      %p154 = pneg %p103
      %p155 = pneg %p100
      %p156 = scmp.lt.s32.totalorder %s14, 1
      %s157 = scalar_select %p156, %s14, 1
      %s158 = smul.addr %s157, 32
      %s159 = smul.addr %s158, 8
      %s160 = scalar_lea.vmem %s3, %s159
      %p161 = scmp.lt.s32.totalorder %s14, 1
      %s162 = scalar_select %p161, %s14, 1
      %s163 = smul.addr %s162, 32
      %s164 = smul.addr %s163, 8
      %s165 = scalar_lea.vmem %s0, %s164
      %p166 = scmp.lt.s32.totalorder %s14, 1
      %s167 = scalar_select %p166, %s14, 1
      %s168 = smul.addr %s167, 32
      %s169 = smul.addr %s168, 8
      %s170 = scalar_lea.vmem %s3, %s169
      %v171 = vld [vmem:[%s165] sm:$0xff]
      %v172 = vld [vmem:[%s165 + $0x8] sm:$0xff]
      %v173 = vld [vmem:[%s165 + $0x10] sm:$0xff]
      %v174 = vld [vmem:[%s165 + $0x18] sm:$0xff]
      %v175 = vld [vmem:[%s165 + $0x20] sm:$0xff]
      %v176 = vld [vmem:[%s165 + $0x28] sm:$0xff]
      %v177 = vld [vmem:[%s165 + $0x30] sm:$0xff]
      %v178 = vld [vmem:[%s165 + $0x38] sm:$0xff]
      %v179 = vld [vmem:[%s165 + $0x40] sm:$0xff]
      %v180 = vld [vmem:[%s165 + $0x48] sm:$0xff]
      %v181 = vld [vmem:[%s165 + $0x50] sm:$0xff]
      %v182 = vld [vmem:[%s165 + $0x58] sm:$0xff]
      %v183 = vld [vmem:[%s165 + $0x60] sm:$0xff]
      %v184 = vld [vmem:[%s165 + $0x68] sm:$0xff]
      %v185 = vld [vmem:[%s165 + $0x70] sm:$0xff]
      %v186 = vld [vmem:[%s165 + $0x78] sm:$0xff]
      %v187 = vld [vmem:[%s165 + $0x80] sm:$0xff]
      %v188 = vld [vmem:[%s165 + $0x88] sm:$0xff]
      %v189 = vld [vmem:[%s165 + $0x90] sm:$0xff]
      %v190 = vld [vmem:[%s165 + $0x98] sm:$0xff]
      %v191 = vld [vmem:[%s165 + $0xa0] sm:$0xff]
      %v192 = vld [vmem:[%s165 + $0xa8] sm:$0xff]
      %v193 = vld [vmem:[%s165 + $0xb0] sm:$0xff]
      %v194 = vld [vmem:[%s165 + $0xb8] sm:$0xff]
      %v195 = vld [vmem:[%s165 + $0xc0] sm:$0xff]
      %v196 = vld [vmem:[%s165 + $0xc8] sm:$0xff]
      %v197 = vld [vmem:[%s165 + $0xd0] sm:$0xff]
      %v198 = vld [vmem:[%s165 + $0xd8] sm:$0xff]
      %v199 = vld [vmem:[%s165 + $0xe0] sm:$0xff]
      %v200 = vld [vmem:[%s165 + $0xe8] sm:$0xff]
      %v201 = vld [vmem:[%s165 + $0xf0] sm:$0xff]
      %v202 = vld [vmem:[%s165 + $0xf8] sm:$0xff]
      %s203 = scalar_lea.vmem [#allocation2], 16
      %vm204 = vcmask 31744
      %205 = vst.msk [vmem:[%s203] sm:$0xff] %vm204, %v171
      %206 = vst.msk [vmem:[%s203 + $0x8] sm:$0xff] %vm204, %v172
      %207 = vst.msk [vmem:[%s203 + $0x10] sm:$0xff] %vm204, %v173
      %208 = vst.msk [vmem:[%s203 + $0x18] sm:$0xff] %vm204, %v174
      %209 = vst.msk [vmem:[%s203 + $0x20] sm:$0xff] %vm204, %v175
      %210 = vst.msk [vmem:[%s203 + $0x28] sm:$0xff] %vm204, %v176
      %211 = vst.msk [vmem:[%s203 + $0x30] sm:$0xff] %vm204, %v177
      %212 = vst.msk [vmem:[%s203 + $0x38] sm:$0xff] %vm204, %v178
      %213 = vst.msk [vmem:[%s203 + $0x40] sm:$0xff] %vm204, %v179
      %214 = vst.msk [vmem:[%s203 + $0x48] sm:$0xff] %vm204, %v180
      %215 = vst.msk [vmem:[%s203 + $0x50] sm:$0xff] %vm204, %v181
      %216 = vst.msk [vmem:[%s203 + $0x58] sm:$0xff] %vm204, %v182
      %217 = vst.msk [vmem:[%s203 + $0x60] sm:$0xff] %vm204, %v183
      %218 = vst.msk [vmem:[%s203 + $0x68] sm:$0xff] %vm204, %v184
      %219 = vst.msk [vmem:[%s203 + $0x70] sm:$0xff] %vm204, %v185
      %220 = vst.msk [vmem:[%s203 + $0x78] sm:$0xff] %vm204, %v186
      %221 = vst.msk [vmem:[%s203 + $0x80] sm:$0xff] %vm204, %v187
      %222 = vst.msk [vmem:[%s203 + $0x88] sm:$0xff] %vm204, %v188
      %223 = vst.msk [vmem:[%s203 + $0x90] sm:$0xff] %vm204, %v189
      %224 = vst.msk [vmem:[%s203 + $0x98] sm:$0xff] %vm204, %v190
      %225 = vst.msk [vmem:[%s203 + $0xa0] sm:$0xff] %vm204, %v191
      %226 = vst.msk [vmem:[%s203 + $0xa8] sm:$0xff] %vm204, %v192
      %227 = vst.msk [vmem:[%s203 + $0xb0] sm:$0xff] %vm204, %v193
      %228 = vst.msk [vmem:[%s203 + $0xb8] sm:$0xff] %vm204, %v194
      %229 = vst.msk [vmem:[%s203 + $0xc0] sm:$0xff] %vm204, %v195
      %230 = vst.msk [vmem:[%s203 + $0xc8] sm:$0xff] %vm204, %v196
      %231 = vst.msk [vmem:[%s203 + $0xd0] sm:$0xff] %vm204, %v197
      %232 = vst.msk [vmem:[%s203 + $0xd8] sm:$0xff] %vm204, %v198
      %233 = vst.msk [vmem:[%s203 + $0xe0] sm:$0xff] %vm204, %v199
      %234 = vst.msk [vmem:[%s203 + $0xe8] sm:$0xff] %vm204, %v200
      %235 = vst.msk [vmem:[%s203 + $0xf0] sm:$0xff] %vm204, %v201
      %236 = vst.msk [vmem:[%s203 + $0xf8] sm:$0xff] %vm204, %v202
      %237 = vst.msk [vmem:[#allocation2] sm:$0xff] %vm204, %v173
      %238 = vst.msk [vmem:[#allocation2 + $0x8] sm:$0xff] %vm204, %v174
      %s239 = scalar_lea.vmem [#allocation2], 272
      %240 = vst.msk [vmem:[%s239] sm:$0xff] %vm204, %v199
      %241 = vst.msk [vmem:[%s239 + $0x8] sm:$0xff] %vm204, %v200
      %v242 = vld [vmem:[#allocation2] sm:$0xff]
      %v243 = vld [vmem:[#allocation2 + $0x8] sm:$0xff]
      %v244 = vld [vmem:[#allocation2 + $0x10] sm:$0xff]
      %v245 = vld [vmem:[#allocation2 + $0x18] sm:$0xff]
      %v246 = vld [vmem:[#allocation2 + $0x20] sm:$0xff]
      %v247 = vld [vmem:[#allocation2 + $0x28] sm:$0xff]
      %v248 = vld [vmem:[#allocation2 + $0x30] sm:$0xff]
      %v249 = vld [vmem:[#allocation2 + $0x38] sm:$0xff]
      %v250 = vld [vmem:[#allocation2 + $0x40] sm:$0xff]
      %v251 = vld [vmem:[#allocation2 + $0x48] sm:$0xff]
      %v252 = vld [vmem:[#allocation2 + $0x50] sm:$0xff]
      %v253 = vld [vmem:[#allocation2 + $0x58] sm:$0xff]
      %v254 = vld [vmem:[#allocation2 + $0x60] sm:$0xff]
      %v255 = vld [vmem:[#allocation2 + $0x68] sm:$0xff]
      %v256 = vld [vmem:[#allocation2 + $0x70] sm:$0xff]
      %v257 = vld [vmem:[#allocation2 + $0x78] sm:$0xff]
      %v258 = vld [vmem:[#allocation2 + $0x80] sm:$0xff]
      %v259 = vld [vmem:[#allocation2 + $0x88] sm:$0xff]
      %v260 = vld [vmem:[#allocation2 + $0x90] sm:$0xff]
      %v261 = vld [vmem:[#allocation2 + $0x98] sm:$0xff]
      %v262 = vld [vmem:[#allocation2 + $0xa0] sm:$0xff]
      %v263 = vld [vmem:[#allocation2 + $0xa8] sm:$0xff]
      %v264 = vld [vmem:[#allocation2 + $0xb0] sm:$0xff]
      %v265 = vld [vmem:[#allocation2 + $0xb8] sm:$0xff]
      %v266 = vld [vmem:[#allocation2 + $0xc0] sm:$0xff]
      %v267 = vld [vmem:[#allocation2 + $0xc8] sm:$0xff]
      %v268 = vld [vmem:[#allocation2 + $0xd0] sm:$0xff]
      %v269 = vld [vmem:[#allocation2 + $0xd8] sm:$0xff]
      %v270 = vld [vmem:[#allocation2 + $0xe0] sm:$0xff]
      %v271 = vld [vmem:[#allocation2 + $0xe8] sm:$0xff]
      %v272 = vld [vmem:[#allocation2 + $0xf0] sm:$0xff]
      %v273 = vld [vmem:[#allocation2 + $0xf8] sm:$0xff]
      %v274 = vld [vmem:[#allocation2 + $0x100] sm:$0xff]
      %v275 = vld [vmem:[#allocation2 + $0x108] sm:$0xff]
      %v276 = vld [vmem:[#allocation2 + $0x110] sm:$0xff]
      %v277 = vld [vmem:[#allocation2 + $0x118] sm:$0xff]
      %v296 = vrot.slane %v242, 1
      %v297 = vrot.slane %v244, 1
      %v298 = vrot.slane %v246, 1
      %v299 = vrot.slane %v248, 1
      %v300 = vrot.slane %v250, 1
      %v301 = vrot.slane %v252, 1
      %v302 = vrot.slane %v254, 1
      %v303 = vrot.slane %v256, 1
      %v304 = vrot.slane %v258, 1
      %v305 = vrot.slane %v260, 1
      %v306 = vrot.slane %v262, 1
      %v307 = vrot.slane %v264, 1
      %v308 = vrot.slane %v266, 1
      %v309 = vrot.slane %v268, 1
      %v310 = vrot.slane %v270, 1
      %v311 = vrot.slane %v272, 1
      %v312 = vrot.slane %v274, 1
      %v313 = vrot.slane %v276, 1
      %vm350 = vcmask 1040384
      %v351 = vrot.slane %v242, 7
      %v352 = vrot.slane %v243, 7
      %v353 = vsel %vm350, %v351, %v352
      %v354 = vrot.slane %v244, 7
      %v355 = vrot.slane %v245, 7
      %v356 = vsel %vm350, %v354, %v355
      %v357 = vrot.slane %v246, 7
      %v358 = vrot.slane %v247, 7
      %v359 = vsel %vm350, %v357, %v358
      %v360 = vrot.slane %v248, 7
      %v361 = vrot.slane %v249, 7
      %v362 = vsel %vm350, %v360, %v361
      %v363 = vrot.slane %v250, 7
      %v364 = vrot.slane %v251, 7
      %v365 = vsel %vm350, %v363, %v364
      %v366 = vrot.slane %v252, 7
      %v367 = vrot.slane %v253, 7
      %v368 = vsel %vm350, %v366, %v367
      %v369 = vrot.slane %v254, 7
      %v370 = vrot.slane %v255, 7
      %v371 = vsel %vm350, %v369, %v370
      %v372 = vrot.slane %v256, 7
      %v373 = vrot.slane %v257, 7
      %v374 = vsel %vm350, %v372, %v373
      %v375 = vrot.slane %v258, 7
      %v376 = vrot.slane %v259, 7
      %v377 = vsel %vm350, %v375, %v376
      %v378 = vrot.slane %v260, 7
      %v379 = vrot.slane %v261, 7
      %v380 = vsel %vm350, %v378, %v379
      %v381 = vrot.slane %v262, 7
      %v382 = vrot.slane %v263, 7
      %v383 = vsel %vm350, %v381, %v382
      %v384 = vrot.slane %v264, 7
      %v385 = vrot.slane %v265, 7
      %v386 = vsel %vm350, %v384, %v385
      %v387 = vrot.slane %v266, 7
      %v388 = vrot.slane %v267, 7
      %v389 = vsel %vm350, %v387, %v388
      %v390 = vrot.slane %v268, 7
      %v391 = vrot.slane %v269, 7
      %v392 = vsel %vm350, %v390, %v391
      %v393 = vrot.slane %v270, 7
      %v394 = vrot.slane %v271, 7
      %v395 = vsel %vm350, %v393, %v394
      %v396 = vrot.slane %v272, 7
      %v397 = vrot.slane %v273, 7
      %v398 = vsel %vm350, %v396, %v397
      %v399 = vrot.slane %v274, 7
      %v400 = vrot.slane %v275, 7
      %v401 = vsel %vm350, %v399, %v400
      %v402 = vrot.slane %v276, 7
      %v403 = vrot.slane %v277, 7
      %v404 = vsel %vm350, %v402, %v403
      %v439 = vsel %vm350, %v296, %v351
      %v440 = vsel %vm350, %v297, %v354
      %v441 = vsel %vm350, %v298, %v357
      %v442 = vsel %vm350, %v299, %v360
      %v443 = vsel %vm350, %v300, %v363
      %v444 = vsel %vm350, %v301, %v366
      %v445 = vsel %vm350, %v302, %v369
      %v446 = vsel %vm350, %v303, %v372
      %v447 = vsel %vm350, %v304, %v375
      %v448 = vsel %vm350, %v305, %v378
      %v449 = vsel %vm350, %v306, %v381
      %v450 = vsel %vm350, %v307, %v384
      %v451 = vsel %vm350, %v308, %v387
      %v452 = vsel %vm350, %v309, %v390
      %v453 = vsel %vm350, %v310, %v393
      %v454 = vsel %vm350, %v311, %v396
      %v455 = vsel %vm350, %v312, %v399
      %v456 = vsel %vm350, %v313, %v402
      %473 = vrot.lane.b32.xlu0 %v440, 4
      %v474 = vpop.permute.xlu0 %473
      %475 = vrot.lane.b32.xlu0 %v356, 4
      %v476 = vpop.permute.xlu0 %475
      %477 = vrot.lane.b32.xlu0 %v441, 4
      %v478 = vpop.permute.xlu0 %477
      %479 = vrot.lane.b32.xlu0 %v359, 4
      %v480 = vpop.permute.xlu0 %479
      %481 = vrot.lane.b32.xlu0 %v442, 4
      %v482 = vpop.permute.xlu0 %481
      %483 = vrot.lane.b32.xlu0 %v362, 4
      %v484 = vpop.permute.xlu0 %483
      %485 = vrot.lane.b32.xlu0 %v443, 4
      %v486 = vpop.permute.xlu0 %485
      %487 = vrot.lane.b32.xlu0 %v365, 4
      %v488 = vpop.permute.xlu0 %487
      %489 = vrot.lane.b32.xlu0 %v444, 4
      %v490 = vpop.permute.xlu0 %489
      %491 = vrot.lane.b32.xlu0 %v368, 4
      %v492 = vpop.permute.xlu0 %491
      %493 = vrot.lane.b32.xlu0 %v445, 4
      %v494 = vpop.permute.xlu0 %493
      %495 = vrot.lane.b32.xlu0 %v371, 4
      %v496 = vpop.permute.xlu0 %495
      %497 = vrot.lane.b32.xlu0 %v446, 4
      %v498 = vpop.permute.xlu0 %497
      %499 = vrot.lane.b32.xlu0 %v374, 4
      %v500 = vpop.permute.xlu0 %499
      %501 = vrot.lane.b32.xlu0 %v447, 4
      %v502 = vpop.permute.xlu0 %501
      %503 = vrot.lane.b32.xlu0 %v377, 4
      %v504 = vpop.permute.xlu0 %503
      %505 = vrot.lane.b32.xlu0 %v448, 4
      %v506 = vpop.permute.xlu0 %505
      %507 = vrot.lane.b32.xlu0 %v380, 4
      %v508 = vpop.permute.xlu0 %507
      %509 = vrot.lane.b32.xlu0 %v449, 4
      %v510 = vpop.permute.xlu0 %509
      %511 = vrot.lane.b32.xlu0 %v383, 4
      %v512 = vpop.permute.xlu0 %511
      %513 = vrot.lane.b32.xlu0 %v450, 4
      %v514 = vpop.permute.xlu0 %513
      %515 = vrot.lane.b32.xlu0 %v386, 4
      %v516 = vpop.permute.xlu0 %515
      %517 = vrot.lane.b32.xlu0 %v451, 4
      %v518 = vpop.permute.xlu0 %517
      %519 = vrot.lane.b32.xlu0 %v389, 4
      %v520 = vpop.permute.xlu0 %519
      %521 = vrot.lane.b32.xlu0 %v452, 4
      %v522 = vpop.permute.xlu0 %521
      %523 = vrot.lane.b32.xlu0 %v392, 4
      %v524 = vpop.permute.xlu0 %523
      %525 = vrot.lane.b32.xlu0 %v453, 4
      %v526 = vpop.permute.xlu0 %525
      %527 = vrot.lane.b32.xlu0 %v395, 4
      %v528 = vpop.permute.xlu0 %527
      %529 = vrot.lane.b32.xlu0 %v454, 4
      %v530 = vpop.permute.xlu0 %529
      %531 = vrot.lane.b32.xlu0 %v398, 4
      %v532 = vpop.permute.xlu0 %531
      %533 = vrot.lane.b32.xlu0 %v455, 4
      %v534 = vpop.permute.xlu0 %533
      %535 = vrot.lane.b32.xlu0 %v401, 4
      %v536 = vpop.permute.xlu0 %535
      %570 = vrot.lane.b32.xlu0 %v441, 8
      %v571 = vpop.permute.xlu0 %570
      %572 = vrot.lane.b32.xlu0 %v359, 8
      %v573 = vpop.permute.xlu0 %572
      %574 = vrot.lane.b32.xlu0 %v442, 8
      %v575 = vpop.permute.xlu0 %574
      %576 = vrot.lane.b32.xlu0 %v362, 8
      %v577 = vpop.permute.xlu0 %576
      %578 = vrot.lane.b32.xlu0 %v443, 8
      %v579 = vpop.permute.xlu0 %578
      %580 = vrot.lane.b32.xlu0 %v365, 8
      %v581 = vpop.permute.xlu0 %580
      %582 = vrot.lane.b32.xlu0 %v444, 8
      %v583 = vpop.permute.xlu0 %582
      %584 = vrot.lane.b32.xlu0 %v368, 8
      %v585 = vpop.permute.xlu0 %584
      %586 = vrot.lane.b32.xlu0 %v445, 8
      %v587 = vpop.permute.xlu0 %586
      %588 = vrot.lane.b32.xlu0 %v371, 8
      %v589 = vpop.permute.xlu0 %588
      %590 = vrot.lane.b32.xlu0 %v446, 8
      %v591 = vpop.permute.xlu0 %590
      %592 = vrot.lane.b32.xlu0 %v374, 8
      %v593 = vpop.permute.xlu0 %592
      %594 = vrot.lane.b32.xlu0 %v447, 8
      %v595 = vpop.permute.xlu0 %594
      %596 = vrot.lane.b32.xlu0 %v377, 8
      %v597 = vpop.permute.xlu0 %596
      %598 = vrot.lane.b32.xlu0 %v448, 8
      %v599 = vpop.permute.xlu0 %598
      %600 = vrot.lane.b32.xlu0 %v380, 8
      %v601 = vpop.permute.xlu0 %600
      %602 = vrot.lane.b32.xlu0 %v449, 8
      %v603 = vpop.permute.xlu0 %602
      %604 = vrot.lane.b32.xlu0 %v383, 8
      %v605 = vpop.permute.xlu0 %604
      %606 = vrot.lane.b32.xlu0 %v450, 8
      %v607 = vpop.permute.xlu0 %606
      %608 = vrot.lane.b32.xlu0 %v386, 8
      %v609 = vpop.permute.xlu0 %608
      %610 = vrot.lane.b32.xlu0 %v451, 8
      %v611 = vpop.permute.xlu0 %610
      %612 = vrot.lane.b32.xlu0 %v389, 8
      %v613 = vpop.permute.xlu0 %612
      %614 = vrot.lane.b32.xlu0 %v452, 8
      %v615 = vpop.permute.xlu0 %614
      %616 = vrot.lane.b32.xlu0 %v392, 8
      %v617 = vpop.permute.xlu0 %616
      %618 = vrot.lane.b32.xlu0 %v453, 8
      %v619 = vpop.permute.xlu0 %618
      %620 = vrot.lane.b32.xlu0 %v395, 8
      %v621 = vpop.permute.xlu0 %620
      %622 = vrot.lane.b32.xlu0 %v454, 8
      %v623 = vpop.permute.xlu0 %622
      %624 = vrot.lane.b32.xlu0 %v398, 8
      %v625 = vpop.permute.xlu0 %624
      %626 = vrot.lane.b32.xlu0 %v455, 8
      %v627 = vpop.permute.xlu0 %626
      %628 = vrot.lane.b32.xlu0 %v401, 8
      %v629 = vpop.permute.xlu0 %628
      %630 = vrot.lane.b32.xlu0 %v456, 8
      %v631 = vpop.permute.xlu0 %630
      %632 = vrot.lane.b32.xlu0 %v404, 8
      %v633 = vpop.permute.xlu0 %632
      %v666 = vsel %vm204, %v439, %v474
      %v667 = vsel %vm204, %v353, %v476
      %v668 = vsel %vm204, %v440, %v478
      %v669 = vsel %vm204, %v356, %v480
      %v670 = vsel %vm204, %v441, %v482
      %v671 = vsel %vm204, %v359, %v484
      %v672 = vsel %vm204, %v442, %v486
      %v673 = vsel %vm204, %v362, %v488
      %v674 = vsel %vm204, %v443, %v490
      %v675 = vsel %vm204, %v365, %v492
      %v676 = vsel %vm204, %v444, %v494
      %v677 = vsel %vm204, %v368, %v496
      %v678 = vsel %vm204, %v445, %v498
      %v679 = vsel %vm204, %v371, %v500
      %v680 = vsel %vm204, %v446, %v502
      %v681 = vsel %vm204, %v374, %v504
      %v682 = vsel %vm204, %v447, %v506
      %v683 = vsel %vm204, %v377, %v508
      %v684 = vsel %vm204, %v448, %v510
      %v685 = vsel %vm204, %v380, %v512
      %v686 = vsel %vm204, %v449, %v514
      %v687 = vsel %vm204, %v383, %v516
      %v688 = vsel %vm204, %v450, %v518
      %v689 = vsel %vm204, %v386, %v520
      %v690 = vsel %vm204, %v451, %v522
      %v691 = vsel %vm204, %v389, %v524
      %v692 = vsel %vm204, %v452, %v526
      %v693 = vsel %vm204, %v392, %v528
      %v694 = vsel %vm204, %v453, %v530
      %v695 = vsel %vm204, %v395, %v532
      %v696 = vsel %vm204, %v454, %v534
      %v697 = vsel %vm204, %v398, %v536
      %vm698 = vcmask 64512
      %v699 = vsel %vm698, %v666, %v571
      %v700 = vsel %vm698, %v667, %v573
      %v701 = vsel %vm698, %v668, %v575
      %v702 = vsel %vm698, %v669, %v577
      %v703 = vsel %vm698, %v670, %v579
      %v704 = vsel %vm698, %v671, %v581
      %v705 = vsel %vm698, %v672, %v583
      %v706 = vsel %vm698, %v673, %v585
      %v707 = vsel %vm698, %v674, %v587
      %v708 = vsel %vm698, %v675, %v589
      %v709 = vsel %vm698, %v676, %v591
      %v710 = vsel %vm698, %v677, %v593
      %v711 = vsel %vm698, %v678, %v595
      %v712 = vsel %vm698, %v679, %v597
      %v713 = vsel %vm698, %v680, %v599
      %v714 = vsel %vm698, %v681, %v601
      %v715 = vsel %vm698, %v682, %v603
      %v716 = vsel %vm698, %v683, %v605
      %v717 = vsel %vm698, %v684, %v607
      %v718 = vsel %vm698, %v685, %v609
      %v719 = vsel %vm698, %v686, %v611
      %v720 = vsel %vm698, %v687, %v613
      %v721 = vsel %vm698, %v688, %v615
      %v722 = vsel %vm698, %v689, %v617
      %v723 = vsel %vm698, %v690, %v619
      %v724 = vsel %vm698, %v691, %v621
      %v725 = vsel %vm698, %v692, %v623
      %v726 = vsel %vm698, %v693, %v625
      %v727 = vsel %vm698, %v694, %v627
      %v728 = vsel %vm698, %v695, %v629
      %v729 = vsel %vm698, %v696, %v631
      %v730 = vsel %vm698, %v697, %v633
      %v731 = vld [vmem:[%s1] sm:$0xff]
      %v732 = vld [vmem:[%s1 + $0x8] sm:$0xf]
      %vm733 = vcmask 97280
      %v735 = vsel %vm733, %v699, 0
      %v738 = vsel %vm733, %v700, 0
      %v741 = vsel %vm733, %v701, 0
      %v744 = vsel %vm733, %v702, 0
      %v747 = vsel %vm733, %v703, 0
      %v750 = vsel %vm733, %v704, 0
      %v753 = vsel %vm733, %v705, 0
      %v756 = vsel %vm733, %v706, 0
      %v759 = vsel %vm733, %v707, 0
      %v762 = vsel %vm733, %v708, 0
      %v765 = vsel %vm733, %v709, 0
      %v768 = vsel %vm733, %v710, 0
      %v771 = vsel %vm733, %v711, 0
      %v774 = vsel %vm733, %v712, 0
      %v777 = vsel %vm733, %v713, 0
      %v780 = vsel %vm733, %v714, 0
      %v783 = vsel %vm733, %v715, 0
      %v786 = vsel %vm733, %v716, 0
      %v789 = vsel %vm733, %v717, 0
      %v792 = vsel %vm733, %v718, 0
      %v795 = vsel %vm733, %v719, 0
      %v798 = vsel %vm733, %v720, 0
      %v801 = vsel %vm733, %v721, 0
      %v804 = vsel %vm733, %v722, 0
      %v807 = vsel %vm733, %v723, 0
      %v810 = vsel %vm733, %v724, 0
      %v813 = vsel %vm733, %v725, 0
      %v816 = vsel %vm733, %v726, 0
      %v819 = vsel %vm733, %v727, 0
      %v822 = vsel %vm733, %v728, 0
      %v825 = vsel %vm733, %v729, 0
      %v828 = vsel %vm733, %v730, 0
      %vm830 = vcmask 1043456
      %v832 = vsel %vm830, %v732, 0
      %834 = vmatprep.subr.mxu0 0.0
      %835 = vmatpush1.msra.mxu0 0.0
      %836 = vmatprep.subr.mxu0 0.0
      %837 = vmatpush1.msra.mxu0 0.0
      %838 = vmatprep.subr.mxu0 0.0
      %839 = vmatpush1.msra.mxu0 0.0
      %840 = vmatprep.subr.mxu0 0.0
      %841 = vmatpush1.msra.mxu0 0.0
      %842 = vmatprep.subr.mxu0 0.0
      %843 = vmatpush1.msra.mxu0 0.0
      %844 = vmatprep.subr.mxu0 0.0
      %845 = vmatpush1.msra.mxu0 0.0
      %846 = vmatprep.subr.mxu0 0.0
      %847 = vmatpush1.msra.mxu0 0.0
      %848 = vmatprep.subr.mxu0 0.0
      %849 = vmatpush1.msra.mxu0 0.0
      %850 = vmatprep.subr.mxu0 0.0
      %851 = vmatpush1.msra.mxu0 0.0
      %852 = vmatprep.subr.mxu0 0.0
      %853 = vmatpush1.msra.mxu0 0.0
      %854 = vmatprep.subr.mxu0 0.0
      %855 = vmatpush1.msra.mxu0 0.0
      %856 = vmatprep.subr.mxu0 0.0
      %857 = vmatpush1.msra.mxu0 0.0
      %858 = vmatprep.subr.mxu0 0.0
      %859 = vmatpush1.msra.mxu0 0.0
      %860 = vmatprep.subr.mxu0 0.0
      %861 = vmatpush1.msra.mxu0 0.0
      %862 = vmatprep.subr.mxu0 0.0
      %863 = vmatpush1.msra.mxu0 %v832
      %864 = vmatprep.subr.mxu0 0.0
      %865 = vmatpush1.msra.mxu0 %v731
      %866 = vmatprep.subr.mxu0 0.0
      %867 = vmatpush2.msra.mxu0 0.0
      %868 = vmatprep.subr.mxu0 0.0
      %869 = vmatpush2.msra.mxu0 0.0
      %870 = vmatprep.subr.mxu0 0.0
      %871 = vmatpush2.msra.mxu0 0.0
      %872 = vmatprep.subr.mxu0 0.0
      %873 = vmatpush2.msra.mxu0 0.0
      %874 = vmatprep.subr.mxu0 0.0
      %875 = vmatpush2.msra.mxu0 0.0
      %876 = vmatprep.subr.mxu0 0.0
      %877 = vmatpush2.msra.mxu0 0.0
      %878 = vmatprep.subr.mxu0 0.0
      %879 = vmatpush2.msra.mxu0 0.0
      %880 = vmatprep.subr.mxu0 0.0
      %881 = vmatpush2.msra.mxu0 0.0
      %882 = vmatprep.subr.mxu0 0.0
      %883 = vmatpush2.msra.mxu0 0.0
      %884 = vmatprep.subr.mxu0 0.0
      %885 = vmatpush2.msra.mxu0 0.0
      %886 = vmatprep.subr.mxu0 0.0
      %887 = vmatpush2.msra.mxu0 0.0
      %888 = vmatprep.subr.mxu0 0.0
      %889 = vmatpush2.msra.mxu0 0.0
      %890 = vmatprep.subr.mxu0 0.0
      %891 = vmatpush2.msra.mxu0 0.0
      %892 = vmatprep.subr.mxu0 0.0
      %893 = vmatpush2.msra.mxu0 0.0
      %894 = vmatprep.subr.mxu0 0.0
      %895 = vmatpush2.msra.mxu0 0.0
      %896 = vmatprep.subr.mxu0 0.0
      %897 = vmatpush2.msra.mxu0 0.0
      %898 = vmatprep.mubr.f32.mxu0 0.0
      %899 = vmatmul.mubr.f32.gmra.mxu0 %v735
      %v900 = vpop.f32.mrf.mxu0
      %v901 = vadd.f32 0.0, %v900
      %v902 = vpop.f32.mrf.mxu0
      %903 = vmatprep.mubr.f32.mxu0 0.0
      %904 = vmatmul.mubr.f32.gmra.mxu0 %v738
      %v905 = vpop.f32.mrf.mxu0
      %v906 = vadd.f32 0.0, %v905
      %v907 = vpop.f32.mrf.mxu0
      %908 = vmatprep.mubr.f32.mxu0 0.0
      %909 = vmatmul.mubr.f32.gmra.mxu0 %v741
      %v910 = vpop.f32.mrf.mxu0
      %v911 = vadd.f32 0.0, %v910
      %v912 = vpop.f32.mrf.mxu0
      %913 = vmatprep.mubr.f32.mxu0 0.0
      %914 = vmatmul.mubr.f32.gmra.mxu0 %v744
      %v915 = vpop.f32.mrf.mxu0
      %v916 = vadd.f32 0.0, %v915
      %v917 = vpop.f32.mrf.mxu0
      %918 = vmatprep.mubr.f32.mxu0 0.0
      %919 = vmatmul.mubr.f32.gmra.mxu0 %v747
      %v920 = vpop.f32.mrf.mxu0
      %v921 = vadd.f32 0.0, %v920
      %v922 = vpop.f32.mrf.mxu0
      %923 = vmatprep.mubr.f32.mxu0 0.0
      %924 = vmatmul.mubr.f32.gmra.mxu0 %v750
      %v925 = vpop.f32.mrf.mxu0
      %v926 = vadd.f32 0.0, %v925
      %v927 = vpop.f32.mrf.mxu0
      %928 = vmatprep.mubr.f32.mxu0 0.0
      %929 = vmatmul.mubr.f32.gmra.mxu0 %v753
      %v930 = vpop.f32.mrf.mxu0
      %v931 = vadd.f32 0.0, %v930
      %v932 = vpop.f32.mrf.mxu0
      %933 = vmatprep.mubr.f32.mxu0 0.0
      %934 = vmatmul.mubr.f32.gmra.mxu0 %v756
      %v935 = vpop.f32.mrf.mxu0
      %v936 = vadd.f32 0.0, %v935
      %v937 = vpop.f32.mrf.mxu0
      %938 = vmatprep.mubr.f32.mxu0 0.0
      %939 = vmatmul.mubr.f32.gmra.mxu0 %v759
      %v940 = vpop.f32.mrf.mxu0
      %v941 = vadd.f32 0.0, %v940
      %v942 = vpop.f32.mrf.mxu0
      %943 = vmatprep.mubr.f32.mxu0 0.0
      %944 = vmatmul.mubr.f32.gmra.mxu0 %v762
      %v945 = vpop.f32.mrf.mxu0
      %v946 = vadd.f32 0.0, %v945
      %v947 = vpop.f32.mrf.mxu0
      %948 = vmatprep.mubr.f32.mxu0 0.0
      %949 = vmatmul.mubr.f32.gmra.mxu0 %v765
      %v950 = vpop.f32.mrf.mxu0
      %v951 = vadd.f32 0.0, %v950
      %v952 = vpop.f32.mrf.mxu0
      %953 = vmatprep.mubr.f32.mxu0 0.0
      %954 = vmatmul.mubr.f32.gmra.mxu0 %v768
      %v955 = vpop.f32.mrf.mxu0
      %v956 = vadd.f32 0.0, %v955
      %v957 = vpop.f32.mrf.mxu0
      %958 = vmatprep.mubr.f32.mxu0 0.0
      %959 = vmatmul.mubr.f32.gmra.mxu0 %v771
      %v960 = vpop.f32.mrf.mxu0
      %v961 = vadd.f32 0.0, %v960
      %v962 = vpop.f32.mrf.mxu0
      %963 = vmatprep.mubr.f32.mxu0 0.0
      %964 = vmatmul.mubr.f32.gmra.mxu0 %v774
      %v965 = vpop.f32.mrf.mxu0
      %v966 = vadd.f32 0.0, %v965
      %v967 = vpop.f32.mrf.mxu0
      %968 = vmatprep.mubr.f32.mxu0 0.0
      %969 = vmatmul.mubr.f32.gmra.mxu0 %v777
      %v970 = vpop.f32.mrf.mxu0
      %v971 = vadd.f32 0.0, %v970
      %v972 = vpop.f32.mrf.mxu0
      %973 = vmatprep.mubr.f32.mxu0 0.0
      %974 = vmatmul.mubr.f32.gmra.mxu0 %v780
      %v975 = vpop.f32.mrf.mxu0
      %v976 = vadd.f32 0.0, %v975
      %v977 = vpop.f32.mrf.mxu0
      %978 = vmatprep.mubr.f32.mxu0 0.0
      %979 = vmatmul.mubr.f32.gmra.mxu0 %v783
      %v980 = vpop.f32.mrf.mxu0
      %v981 = vadd.f32 0.0, %v980
      %v982 = vpop.f32.mrf.mxu0
      %983 = vmatprep.mubr.f32.mxu0 0.0
      %984 = vmatmul.mubr.f32.gmra.mxu0 %v786
      %v985 = vpop.f32.mrf.mxu0
      %v986 = vadd.f32 0.0, %v985
      %v987 = vpop.f32.mrf.mxu0
      %988 = vmatprep.mubr.f32.mxu0 0.0
      %989 = vmatmul.mubr.f32.gmra.mxu0 %v789
      %v990 = vpop.f32.mrf.mxu0
      %v991 = vadd.f32 0.0, %v990
      %v992 = vpop.f32.mrf.mxu0
      %993 = vmatprep.mubr.f32.mxu0 0.0
      %994 = vmatmul.mubr.f32.gmra.mxu0 %v792
      %v995 = vpop.f32.mrf.mxu0
      %v996 = vadd.f32 0.0, %v995
      %v997 = vpop.f32.mrf.mxu0
      %998 = vmatprep.mubr.f32.mxu0 0.0
      %999 = vmatmul.mubr.f32.gmra.mxu0 %v795
      %v1000 = vpop.f32.mrf.mxu0
      %v1001 = vadd.f32 0.0, %v1000
      %v1002 = vpop.f32.mrf.mxu0
      %1003 = vmatprep.mubr.f32.mxu0 0.0
      %1004 = vmatmul.mubr.f32.gmra.mxu0 %v798
      %v1005 = vpop.f32.mrf.mxu0
      %v1006 = vadd.f32 0.0, %v1005
      %v1007 = vpop.f32.mrf.mxu0
      %1008 = vmatprep.mubr.f32.mxu0 0.0
      %1009 = vmatmul.mubr.f32.gmra.mxu0 %v801
      %v1010 = vpop.f32.mrf.mxu0
      %v1011 = vadd.f32 0.0, %v1010
      %v1012 = vpop.f32.mrf.mxu0
      %1013 = vmatprep.mubr.f32.mxu0 0.0
      %1014 = vmatmul.mubr.f32.gmra.mxu0 %v804
      %v1015 = vpop.f32.mrf.mxu0
      %v1016 = vadd.f32 0.0, %v1015
      %v1017 = vpop.f32.mrf.mxu0
      %1018 = vmatprep.mubr.f32.mxu0 0.0
      %1019 = vmatmul.mubr.f32.gmra.mxu0 %v807
      %v1020 = vpop.f32.mrf.mxu0
      %v1021 = vadd.f32 0.0, %v1020
      %v1022 = vpop.f32.mrf.mxu0
      %1023 = vmatprep.mubr.f32.mxu0 0.0
      %1024 = vmatmul.mubr.f32.gmra.mxu0 %v810
      %v1025 = vpop.f32.mrf.mxu0
      %v1026 = vadd.f32 0.0, %v1025
      %v1027 = vpop.f32.mrf.mxu0
      %1028 = vmatprep.mubr.f32.mxu0 0.0
      %1029 = vmatmul.mubr.f32.gmra.mxu0 %v813
      %v1030 = vpop.f32.mrf.mxu0
      %v1031 = vadd.f32 0.0, %v1030
      %v1032 = vpop.f32.mrf.mxu0
      %1033 = vmatprep.mubr.f32.mxu0 0.0
      %1034 = vmatmul.mubr.f32.gmra.mxu0 %v816
      %v1035 = vpop.f32.mrf.mxu0
      %v1036 = vadd.f32 0.0, %v1035
      %v1037 = vpop.f32.mrf.mxu0
      %1038 = vmatprep.mubr.f32.mxu0 0.0
      %1039 = vmatmul.mubr.f32.gmra.mxu0 %v819
      %v1040 = vpop.f32.mrf.mxu0
      %v1041 = vadd.f32 0.0, %v1040
      %v1042 = vpop.f32.mrf.mxu0
      %1043 = vmatprep.mubr.f32.mxu0 0.0
      %1044 = vmatmul.mubr.f32.gmra.mxu0 %v822
      %v1045 = vpop.f32.mrf.mxu0
      %v1046 = vadd.f32 0.0, %v1045
      %v1047 = vpop.f32.mrf.mxu0
      %1048 = vmatprep.mubr.f32.mxu0 0.0
      %1049 = vmatmul.mubr.f32.gmra.mxu0 %v825
      %v1050 = vpop.f32.mrf.mxu0
      %v1051 = vadd.f32 0.0, %v1050
      %v1052 = vpop.f32.mrf.mxu0
      %1053 = vmatprep.mubr.f32.mxu0 0.0
      %1054 = vmatmul.mubr.f32.gmra.mxu0 %v828
      %v1055 = vpop.f32.mrf.mxu0
      %v1056 = vadd.f32 0.0, %v1055
      %v1057 = vpop.f32.mrf.mxu0
      %1058 = vdwg.mxu0
      %1059 = vst.msk [vmem:[#allocation3] sm:$0xff] %vm204, %v901
      %1060 = vst.msk [vmem:[#allocation3 + $0x8] sm:$0xff] %vm204, %v906
      %1061 = vst.msk [vmem:[#allocation3 + $0x10] sm:$0xff] %vm204, %v911
      %1062 = vst.msk [vmem:[#allocation3 + $0x18] sm:$0xff] %vm204, %v916
      %1063 = vst.msk [vmem:[#allocation3 + $0x20] sm:$0xff] %vm204, %v921
      %1064 = vst.msk [vmem:[#allocation3 + $0x28] sm:$0xff] %vm204, %v926
      %1065 = vst.msk [vmem:[#allocation3 + $0x30] sm:$0xff] %vm204, %v931
      %1066 = vst.msk [vmem:[#allocation3 + $0x38] sm:$0xff] %vm204, %v936
      %1067 = vst.msk [vmem:[#allocation3 + $0x40] sm:$0xff] %vm204, %v941
      %1068 = vst.msk [vmem:[#allocation3 + $0x48] sm:$0xff] %vm204, %v946
      %1069 = vst.msk [vmem:[#allocation3 + $0x50] sm:$0xff] %vm204, %v951
      %1070 = vst.msk [vmem:[#allocation3 + $0x58] sm:$0xff] %vm204, %v956
      %1071 = vst.msk [vmem:[#allocation3 + $0x60] sm:$0xff] %vm204, %v961
      %1072 = vst.msk [vmem:[#allocation3 + $0x68] sm:$0xff] %vm204, %v966
      %1073 = vst.msk [vmem:[#allocation3 + $0x70] sm:$0xff] %vm204, %v971
      %1074 = vst.msk [vmem:[#allocation3 + $0x78] sm:$0xff] %vm204, %v976
      %1075 = vst.msk [vmem:[#allocation3 + $0x80] sm:$0xff] %vm204, %v981
      %1076 = vst.msk [vmem:[#allocation3 + $0x88] sm:$0xff] %vm204, %v986
      %1077 = vst.msk [vmem:[#allocation3 + $0x90] sm:$0xff] %vm204, %v991
      %1078 = vst.msk [vmem:[#allocation3 + $0x98] sm:$0xff] %vm204, %v996
      %1079 = vst.msk [vmem:[#allocation3 + $0xa0] sm:$0xff] %vm204, %v1001
      %1080 = vst.msk [vmem:[#allocation3 + $0xa8] sm:$0xff] %vm204, %v1006
      %1081 = vst.msk [vmem:[#allocation3 + $0xb0] sm:$0xff] %vm204, %v1011
      %1082 = vst.msk [vmem:[#allocation3 + $0xb8] sm:$0xff] %vm204, %v1016
      %1083 = vst.msk [vmem:[#allocation3 + $0xc0] sm:$0xff] %vm204, %v1021
      %1084 = vst.msk [vmem:[#allocation3 + $0xc8] sm:$0xff] %vm204, %v1026
      %1085 = vst.msk [vmem:[#allocation3 + $0xd0] sm:$0xff] %vm204, %v1031
      %1086 = vst.msk [vmem:[#allocation3 + $0xd8] sm:$0xff] %vm204, %v1036
      %1087 = vst.msk [vmem:[#allocation3 + $0xe0] sm:$0xff] %vm204, %v1041
      %1088 = vst.msk [vmem:[#allocation3 + $0xe8] sm:$0xff] %vm204, %v1046
      %1089 = vst.msk [vmem:[#allocation3 + $0xf0] sm:$0xff] %vm204, %v1051
      %1090 = vst.msk [vmem:[#allocation3 + $0xf8] sm:$0xff] %vm204, %v1056
      %1091 = vrot.lane.b32.xlu0 %v244, 4
      %v1092 = vpop.permute.xlu0 %1091
      %1093 = vrot.lane.b32.xlu0 %v245, 4
      %v1094 = vpop.permute.xlu0 %1093
      %1095 = vrot.lane.b32.xlu0 %v246, 4
      %v1096 = vpop.permute.xlu0 %1095
      %1097 = vrot.lane.b32.xlu0 %v247, 4
      %v1098 = vpop.permute.xlu0 %1097
      %1099 = vrot.lane.b32.xlu0 %v248, 4
      %v1100 = vpop.permute.xlu0 %1099
      %1101 = vrot.lane.b32.xlu0 %v249, 4
      %v1102 = vpop.permute.xlu0 %1101
      %1103 = vrot.lane.b32.xlu0 %v250, 4
      %v1104 = vpop.permute.xlu0 %1103
      %1105 = vrot.lane.b32.xlu0 %v251, 4
      %v1106 = vpop.permute.xlu0 %1105
      %1107 = vrot.lane.b32.xlu0 %v252, 4
      %v1108 = vpop.permute.xlu0 %1107
      %1109 = vrot.lane.b32.xlu0 %v253, 4
      %v1110 = vpop.permute.xlu0 %1109
      %1111 = vrot.lane.b32.xlu0 %v254, 4
      %v1112 = vpop.permute.xlu0 %1111
      %1113 = vrot.lane.b32.xlu0 %v255, 4
      %v1114 = vpop.permute.xlu0 %1113
      %1115 = vrot.lane.b32.xlu0 %v256, 4
      %v1116 = vpop.permute.xlu0 %1115
      %1117 = vrot.lane.b32.xlu0 %v257, 4
      %v1118 = vpop.permute.xlu0 %1117
      %1119 = vrot.lane.b32.xlu0 %v258, 4
      %v1120 = vpop.permute.xlu0 %1119
      %1121 = vrot.lane.b32.xlu0 %v259, 4
      %v1122 = vpop.permute.xlu0 %1121
      %1123 = vrot.lane.b32.xlu0 %v260, 4
      %v1124 = vpop.permute.xlu0 %1123
      %1125 = vrot.lane.b32.xlu0 %v261, 4
      %v1126 = vpop.permute.xlu0 %1125
      %1127 = vrot.lane.b32.xlu0 %v262, 4
      %v1128 = vpop.permute.xlu0 %1127
      %1129 = vrot.lane.b32.xlu0 %v263, 4
      %v1130 = vpop.permute.xlu0 %1129
      %1131 = vrot.lane.b32.xlu0 %v264, 4
      %v1132 = vpop.permute.xlu0 %1131
      %1133 = vrot.lane.b32.xlu0 %v265, 4
      %v1134 = vpop.permute.xlu0 %1133
      %1135 = vrot.lane.b32.xlu0 %v266, 4
      %v1136 = vpop.permute.xlu0 %1135
      %1137 = vrot.lane.b32.xlu0 %v267, 4
      %v1138 = vpop.permute.xlu0 %1137
      %1139 = vrot.lane.b32.xlu0 %v268, 4
      %v1140 = vpop.permute.xlu0 %1139
      %1141 = vrot.lane.b32.xlu0 %v269, 4
      %v1142 = vpop.permute.xlu0 %1141
      %1143 = vrot.lane.b32.xlu0 %v270, 4
      %v1144 = vpop.permute.xlu0 %1143
      %1145 = vrot.lane.b32.xlu0 %v271, 4
      %v1146 = vpop.permute.xlu0 %1145
      %1147 = vrot.lane.b32.xlu0 %v272, 4
      %v1148 = vpop.permute.xlu0 %1147
      %1149 = vrot.lane.b32.xlu0 %v273, 4
      %v1150 = vpop.permute.xlu0 %1149
      %1151 = vrot.lane.b32.xlu0 %v274, 4
      %v1152 = vpop.permute.xlu0 %1151
      %1153 = vrot.lane.b32.xlu0 %v275, 4
      %v1154 = vpop.permute.xlu0 %1153
      %1187 = vrot.lane.b32.xlu0 %v246, 8
      %v1188 = vpop.permute.xlu0 %1187
      %1189 = vrot.lane.b32.xlu0 %v247, 8
      %v1190 = vpop.permute.xlu0 %1189
      %1191 = vrot.lane.b32.xlu0 %v248, 8
      %v1192 = vpop.permute.xlu0 %1191
      %1193 = vrot.lane.b32.xlu0 %v249, 8
      %v1194 = vpop.permute.xlu0 %1193
      %1195 = vrot.lane.b32.xlu0 %v250, 8
      %v1196 = vpop.permute.xlu0 %1195
      %1197 = vrot.lane.b32.xlu0 %v251, 8
      %v1198 = vpop.permute.xlu0 %1197
      %1199 = vrot.lane.b32.xlu0 %v252, 8
      %v1200 = vpop.permute.xlu0 %1199
      %1201 = vrot.lane.b32.xlu0 %v253, 8
      %v1202 = vpop.permute.xlu0 %1201
      %1203 = vrot.lane.b32.xlu0 %v254, 8
      %v1204 = vpop.permute.xlu0 %1203
      %1205 = vrot.lane.b32.xlu0 %v255, 8
      %v1206 = vpop.permute.xlu0 %1205
      %1207 = vrot.lane.b32.xlu0 %v256, 8
      %v1208 = vpop.permute.xlu0 %1207
      %1209 = vrot.lane.b32.xlu0 %v257, 8
      %v1210 = vpop.permute.xlu0 %1209
      %1211 = vrot.lane.b32.xlu0 %v258, 8
      %v1212 = vpop.permute.xlu0 %1211
      %1213 = vrot.lane.b32.xlu0 %v259, 8
      %v1214 = vpop.permute.xlu0 %1213
      %1215 = vrot.lane.b32.xlu0 %v260, 8
      %v1216 = vpop.permute.xlu0 %1215
      %1217 = vrot.lane.b32.xlu0 %v261, 8
      %v1218 = vpop.permute.xlu0 %1217
      %1219 = vrot.lane.b32.xlu0 %v262, 8
      %v1220 = vpop.permute.xlu0 %1219
      %1221 = vrot.lane.b32.xlu0 %v263, 8
      %v1222 = vpop.permute.xlu0 %1221
      %1223 = vrot.lane.b32.xlu0 %v264, 8
      %v1224 = vpop.permute.xlu0 %1223
      %1225 = vrot.lane.b32.xlu0 %v265, 8
      %v1226 = vpop.permute.xlu0 %1225
      %1227 = vrot.lane.b32.xlu0 %v266, 8
      %v1228 = vpop.permute.xlu0 %1227
      %1229 = vrot.lane.b32.xlu0 %v267, 8
      %v1230 = vpop.permute.xlu0 %1229
      %1231 = vrot.lane.b32.xlu0 %v268, 8
      %v1232 = vpop.permute.xlu0 %1231
      %1233 = vrot.lane.b32.xlu0 %v269, 8
      %v1234 = vpop.permute.xlu0 %1233
      %1235 = vrot.lane.b32.xlu0 %v270, 8
      %v1236 = vpop.permute.xlu0 %1235
      %1237 = vrot.lane.b32.xlu0 %v271, 8
      %v1238 = vpop.permute.xlu0 %1237
      %1239 = vrot.lane.b32.xlu0 %v272, 8
      %v1240 = vpop.permute.xlu0 %1239
      %1241 = vrot.lane.b32.xlu0 %v273, 8
      %v1242 = vpop.permute.xlu0 %1241
      %1243 = vrot.lane.b32.xlu0 %v274, 8
      %v1244 = vpop.permute.xlu0 %1243
      %1245 = vrot.lane.b32.xlu0 %v275, 8
      %v1246 = vpop.permute.xlu0 %1245
      %1247 = vrot.lane.b32.xlu0 %v276, 8
      %v1248 = vpop.permute.xlu0 %1247
      %1249 = vrot.lane.b32.xlu0 %v277, 8
      %v1250 = vpop.permute.xlu0 %1249
      %v1283 = vsel %vm204, %v242, %v1092
      %v1284 = vsel %vm204, %v243, %v1094
      %v1285 = vsel %vm204, %v244, %v1096
      %v1286 = vsel %vm204, %v245, %v1098
      %v1287 = vsel %vm204, %v246, %v1100
      %v1288 = vsel %vm204, %v247, %v1102
      %v1289 = vsel %vm204, %v248, %v1104
      %v1290 = vsel %vm204, %v249, %v1106
      %v1291 = vsel %vm204, %v250, %v1108
      %v1292 = vsel %vm204, %v251, %v1110
      %v1293 = vsel %vm204, %v252, %v1112
      %v1294 = vsel %vm204, %v253, %v1114
      %v1295 = vsel %vm204, %v254, %v1116
      %v1296 = vsel %vm204, %v255, %v1118
      %v1297 = vsel %vm204, %v256, %v1120
      %v1298 = vsel %vm204, %v257, %v1122
      %v1299 = vsel %vm204, %v258, %v1124
      %v1300 = vsel %vm204, %v259, %v1126
      %v1301 = vsel %vm204, %v260, %v1128
      %v1302 = vsel %vm204, %v261, %v1130
      %v1303 = vsel %vm204, %v262, %v1132
      %v1304 = vsel %vm204, %v263, %v1134
      %v1305 = vsel %vm204, %v264, %v1136
      %v1306 = vsel %vm204, %v265, %v1138
      %v1307 = vsel %vm204, %v266, %v1140
      %v1308 = vsel %vm204, %v267, %v1142
      %v1309 = vsel %vm204, %v268, %v1144
      %v1310 = vsel %vm204, %v269, %v1146
      %v1311 = vsel %vm204, %v270, %v1148
      %v1312 = vsel %vm204, %v271, %v1150
      %v1313 = vsel %vm204, %v272, %v1152
      %v1314 = vsel %vm204, %v273, %v1154
      %v1315 = vsel %vm698, %v1283, %v1188
      %v1316 = vsel %vm698, %v1284, %v1190
      %v1317 = vsel %vm698, %v1285, %v1192
      %v1318 = vsel %vm698, %v1286, %v1194
      %v1319 = vsel %vm698, %v1287, %v1196
      %v1320 = vsel %vm698, %v1288, %v1198
      %v1321 = vsel %vm698, %v1289, %v1200
      %v1322 = vsel %vm698, %v1290, %v1202
      %v1323 = vsel %vm698, %v1291, %v1204
      %v1324 = vsel %vm698, %v1292, %v1206
      %v1325 = vsel %vm698, %v1293, %v1208
      %v1326 = vsel %vm698, %v1294, %v1210
      %v1327 = vsel %vm698, %v1295, %v1212
      %v1328 = vsel %vm698, %v1296, %v1214
      %v1329 = vsel %vm698, %v1297, %v1216
      %v1330 = vsel %vm698, %v1298, %v1218
      %v1331 = vsel %vm698, %v1299, %v1220
      %v1332 = vsel %vm698, %v1300, %v1222
      %v1333 = vsel %vm698, %v1301, %v1224
      %v1334 = vsel %vm698, %v1302, %v1226
      %v1335 = vsel %vm698, %v1303, %v1228
      %v1336 = vsel %vm698, %v1304, %v1230
      %v1337 = vsel %vm698, %v1305, %v1232
      %v1338 = vsel %vm698, %v1306, %v1234
      %v1339 = vsel %vm698, %v1307, %v1236
      %v1340 = vsel %vm698, %v1308, %v1238
      %v1341 = vsel %vm698, %v1309, %v1240
      %v1342 = vsel %vm698, %v1310, %v1242
      %v1343 = vsel %vm698, %v1311, %v1244
      %v1344 = vsel %vm698, %v1312, %v1246
      %v1345 = vsel %vm698, %v1313, %v1248
      %v1346 = vsel %vm698, %v1314, %v1250
      %s1347 = scalar_lea.vmem %s1, 16
      %v1348 = vld [vmem:[%s1347] sm:$0xff]
      %v1349 = vld [vmem:[%s1347 + $0x8] sm:$0xf]
      %v1351 = vsel %vm733, %v1315, 0
      %v1354 = vsel %vm733, %v1316, 0
      %v1357 = vsel %vm733, %v1317, 0
      %v1360 = vsel %vm733, %v1318, 0
      %v1363 = vsel %vm733, %v1319, 0
      %v1366 = vsel %vm733, %v1320, 0
      %v1369 = vsel %vm733, %v1321, 0
      %v1372 = vsel %vm733, %v1322, 0
      %v1375 = vsel %vm733, %v1323, 0
      %v1378 = vsel %vm733, %v1324, 0
      %v1381 = vsel %vm733, %v1325, 0
      %v1384 = vsel %vm733, %v1326, 0
      %v1387 = vsel %vm733, %v1327, 0
      %v1390 = vsel %vm733, %v1328, 0
      %v1393 = vsel %vm733, %v1329, 0
      %v1396 = vsel %vm733, %v1330, 0
      %v1399 = vsel %vm733, %v1331, 0
      %v1402 = vsel %vm733, %v1332, 0
      %v1405 = vsel %vm733, %v1333, 0
      %v1408 = vsel %vm733, %v1334, 0
      %v1411 = vsel %vm733, %v1335, 0
      %v1414 = vsel %vm733, %v1336, 0
      %v1417 = vsel %vm733, %v1337, 0
      %v1420 = vsel %vm733, %v1338, 0
      %v1423 = vsel %vm733, %v1339, 0
      %v1426 = vsel %vm733, %v1340, 0
      %v1429 = vsel %vm733, %v1341, 0
      %v1432 = vsel %vm733, %v1342, 0
      %v1435 = vsel %vm733, %v1343, 0
      %v1438 = vsel %vm733, %v1344, 0
      %v1441 = vsel %vm733, %v1345, 0
      %v1444 = vsel %vm733, %v1346, 0
      %v1447 = vsel %vm830, %v1349, 0
      %1449 = vmatprep.subr.mxu0 0.0
      %1450 = vmatpush1.msra.mxu0 0.0
      %1451 = vmatprep.subr.mxu0 0.0
      %1452 = vmatpush1.msra.mxu0 0.0
      %1453 = vmatprep.subr.mxu0 0.0
      %1454 = vmatpush1.msra.mxu0 0.0
      %1455 = vmatprep.subr.mxu0 0.0
      %1456 = vmatpush1.msra.mxu0 0.0
      %1457 = vmatprep.subr.mxu0 0.0
      %1458 = vmatpush1.msra.mxu0 0.0
      %1459 = vmatprep.subr.mxu0 0.0
      %1460 = vmatpush1.msra.mxu0 0.0
      %1461 = vmatprep.subr.mxu0 0.0
      %1462 = vmatpush1.msra.mxu0 0.0
      %1463 = vmatprep.subr.mxu0 0.0
      %1464 = vmatpush1.msra.mxu0 0.0
      %1465 = vmatprep.subr.mxu0 0.0
      %1466 = vmatpush1.msra.mxu0 0.0
      %1467 = vmatprep.subr.mxu0 0.0
      %1468 = vmatpush1.msra.mxu0 0.0
      %1469 = vmatprep.subr.mxu0 0.0
      %1470 = vmatpush1.msra.mxu0 0.0
      %1471 = vmatprep.subr.mxu0 0.0
      %1472 = vmatpush1.msra.mxu0 0.0
      %1473 = vmatprep.subr.mxu0 0.0
      %1474 = vmatpush1.msra.mxu0 0.0
      %1475 = vmatprep.subr.mxu0 0.0
      %1476 = vmatpush1.msra.mxu0 0.0
      %1477 = vmatprep.subr.mxu0 0.0
      %1478 = vmatpush1.msra.mxu0 %v1447
      %1479 = vmatprep.subr.mxu0 0.0
      %1480 = vmatpush1.msra.mxu0 %v1348
      %1481 = vmatprep.subr.mxu0 0.0
      %1482 = vmatpush2.msra.mxu0 0.0
      %1483 = vmatprep.subr.mxu0 0.0
      %1484 = vmatpush2.msra.mxu0 0.0
      %1485 = vmatprep.subr.mxu0 0.0
      %1486 = vmatpush2.msra.mxu0 0.0
      %1487 = vmatprep.subr.mxu0 0.0
      %1488 = vmatpush2.msra.mxu0 0.0
      %1489 = vmatprep.subr.mxu0 0.0
      %1490 = vmatpush2.msra.mxu0 0.0
      %1491 = vmatprep.subr.mxu0 0.0
      %1492 = vmatpush2.msra.mxu0 0.0
      %1493 = vmatprep.subr.mxu0 0.0
      %1494 = vmatpush2.msra.mxu0 0.0
      %1495 = vmatprep.subr.mxu0 0.0
      %1496 = vmatpush2.msra.mxu0 0.0
      %1497 = vmatprep.subr.mxu0 0.0
      %1498 = vmatpush2.msra.mxu0 0.0
      %1499 = vmatprep.subr.mxu0 0.0
      %1500 = vmatpush2.msra.mxu0 0.0
      %1501 = vmatprep.subr.mxu0 0.0
      %1502 = vmatpush2.msra.mxu0 0.0
      %1503 = vmatprep.subr.mxu0 0.0
      %1504 = vmatpush2.msra.mxu0 0.0
      %1505 = vmatprep.subr.mxu0 0.0
      %1506 = vmatpush2.msra.mxu0 0.0
      %1507 = vmatprep.subr.mxu0 0.0
      %1508 = vmatpush2.msra.mxu0 0.0
      %1509 = vmatprep.subr.mxu0 0.0
      %1510 = vmatpush2.msra.mxu0 0.0
      %1511 = vmatprep.subr.mxu0 0.0
      %1512 = vmatpush2.msra.mxu0 0.0
      %1513 = vmatprep.mubr.f32.mxu0 0.0
      %1514 = vmatmul.mubr.f32.gmra.mxu0 %v1351
      %v1515 = vpop.f32.mrf.mxu0
      %v1516 = vadd.f32 0.0, %v1515
      %v1517 = vpop.f32.mrf.mxu0
      %1518 = vmatprep.mubr.f32.mxu0 0.0
      %1519 = vmatmul.mubr.f32.gmra.mxu0 %v1354
      %v1520 = vpop.f32.mrf.mxu0
      %v1521 = vadd.f32 0.0, %v1520
      %v1522 = vpop.f32.mrf.mxu0
      %1523 = vmatprep.mubr.f32.mxu0 0.0
      %1524 = vmatmul.mubr.f32.gmra.mxu0 %v1357
      %v1525 = vpop.f32.mrf.mxu0
      %v1526 = vadd.f32 0.0, %v1525
      %v1527 = vpop.f32.mrf.mxu0
      %1528 = vmatprep.mubr.f32.mxu0 0.0
      %1529 = vmatmul.mubr.f32.gmra.mxu0 %v1360
      %v1530 = vpop.f32.mrf.mxu0
      %v1531 = vadd.f32 0.0, %v1530
      %v1532 = vpop.f32.mrf.mxu0
      %1533 = vmatprep.mubr.f32.mxu0 0.0
      %1534 = vmatmul.mubr.f32.gmra.mxu0 %v1363
      %v1535 = vpop.f32.mrf.mxu0
      %v1536 = vadd.f32 0.0, %v1535
      %v1537 = vpop.f32.mrf.mxu0
      %1538 = vmatprep.mubr.f32.mxu0 0.0
      %1539 = vmatmul.mubr.f32.gmra.mxu0 %v1366
      %v1540 = vpop.f32.mrf.mxu0
      %v1541 = vadd.f32 0.0, %v1540
      %v1542 = vpop.f32.mrf.mxu0
      %1543 = vmatprep.mubr.f32.mxu0 0.0
      %1544 = vmatmul.mubr.f32.gmra.mxu0 %v1369
      %v1545 = vpop.f32.mrf.mxu0
      %v1546 = vadd.f32 0.0, %v1545
      %v1547 = vpop.f32.mrf.mxu0
      %1548 = vmatprep.mubr.f32.mxu0 0.0
      %1549 = vmatmul.mubr.f32.gmra.mxu0 %v1372
      %v1550 = vpop.f32.mrf.mxu0
      %v1551 = vadd.f32 0.0, %v1550
      %v1552 = vpop.f32.mrf.mxu0
      %1553 = vmatprep.mubr.f32.mxu0 0.0
      %1554 = vmatmul.mubr.f32.gmra.mxu0 %v1375
      %v1555 = vpop.f32.mrf.mxu0
      %v1556 = vadd.f32 0.0, %v1555
      %v1557 = vpop.f32.mrf.mxu0
      %1558 = vmatprep.mubr.f32.mxu0 0.0
      %1559 = vmatmul.mubr.f32.gmra.mxu0 %v1378
      %v1560 = vpop.f32.mrf.mxu0
      %v1561 = vadd.f32 0.0, %v1560
      %v1562 = vpop.f32.mrf.mxu0
      %1563 = vmatprep.mubr.f32.mxu0 0.0
      %1564 = vmatmul.mubr.f32.gmra.mxu0 %v1381
      %v1565 = vpop.f32.mrf.mxu0
      %v1566 = vadd.f32 0.0, %v1565
      %v1567 = vpop.f32.mrf.mxu0
      %1568 = vmatprep.mubr.f32.mxu0 0.0
      %1569 = vmatmul.mubr.f32.gmra.mxu0 %v1384
      %v1570 = vpop.f32.mrf.mxu0
      %v1571 = vadd.f32 0.0, %v1570
      %v1572 = vpop.f32.mrf.mxu0
      %1573 = vmatprep.mubr.f32.mxu0 0.0
      %1574 = vmatmul.mubr.f32.gmra.mxu0 %v1387
      %v1575 = vpop.f32.mrf.mxu0
      %v1576 = vadd.f32 0.0, %v1575
      %v1577 = vpop.f32.mrf.mxu0
      %1578 = vmatprep.mubr.f32.mxu0 0.0
      %1579 = vmatmul.mubr.f32.gmra.mxu0 %v1390
      %v1580 = vpop.f32.mrf.mxu0
      %v1581 = vadd.f32 0.0, %v1580
      %v1582 = vpop.f32.mrf.mxu0
      %1583 = vmatprep.mubr.f32.mxu0 0.0
      %1584 = vmatmul.mubr.f32.gmra.mxu0 %v1393
      %v1585 = vpop.f32.mrf.mxu0
      %v1586 = vadd.f32 0.0, %v1585
      %v1587 = vpop.f32.mrf.mxu0
      %1588 = vmatprep.mubr.f32.mxu0 0.0
      %1589 = vmatmul.mubr.f32.gmra.mxu0 %v1396
      %v1590 = vpop.f32.mrf.mxu0
      %v1591 = vadd.f32 0.0, %v1590
      %v1592 = vpop.f32.mrf.mxu0
      %1593 = vmatprep.mubr.f32.mxu0 0.0
      %1594 = vmatmul.mubr.f32.gmra.mxu0 %v1399
      %v1595 = vpop.f32.mrf.mxu0
      %v1596 = vadd.f32 0.0, %v1595
      %v1597 = vpop.f32.mrf.mxu0
      %1598 = vmatprep.mubr.f32.mxu0 0.0
      %1599 = vmatmul.mubr.f32.gmra.mxu0 %v1402
      %v1600 = vpop.f32.mrf.mxu0
      %v1601 = vadd.f32 0.0, %v1600
      %v1602 = vpop.f32.mrf.mxu0
      %1603 = vmatprep.mubr.f32.mxu0 0.0
      %1604 = vmatmul.mubr.f32.gmra.mxu0 %v1405
      %v1605 = vpop.f32.mrf.mxu0
      %v1606 = vadd.f32 0.0, %v1605
      %v1607 = vpop.f32.mrf.mxu0
      %1608 = vmatprep.mubr.f32.mxu0 0.0
      %1609 = vmatmul.mubr.f32.gmra.mxu0 %v1408
      %v1610 = vpop.f32.mrf.mxu0
      %v1611 = vadd.f32 0.0, %v1610
      %v1612 = vpop.f32.mrf.mxu0
      %1613 = vmatprep.mubr.f32.mxu0 0.0
      %1614 = vmatmul.mubr.f32.gmra.mxu0 %v1411
      %v1615 = vpop.f32.mrf.mxu0
      %v1616 = vadd.f32 0.0, %v1615
      %v1617 = vpop.f32.mrf.mxu0
      %1618 = vmatprep.mubr.f32.mxu0 0.0
      %1619 = vmatmul.mubr.f32.gmra.mxu0 %v1414
      %v1620 = vpop.f32.mrf.mxu0
      %v1621 = vadd.f32 0.0, %v1620
      %v1622 = vpop.f32.mrf.mxu0
      %1623 = vmatprep.mubr.f32.mxu0 0.0
      %1624 = vmatmul.mubr.f32.gmra.mxu0 %v1417
      %v1625 = vpop.f32.mrf.mxu0
      %v1626 = vadd.f32 0.0, %v1625
      %v1627 = vpop.f32.mrf.mxu0
      %1628 = vmatprep.mubr.f32.mxu0 0.0
      %1629 = vmatmul.mubr.f32.gmra.mxu0 %v1420
      %v1630 = vpop.f32.mrf.mxu0
      %v1631 = vadd.f32 0.0, %v1630
      %v1632 = vpop.f32.mrf.mxu0
      %1633 = vmatprep.mubr.f32.mxu0 0.0
      %1634 = vmatmul.mubr.f32.gmra.mxu0 %v1423
      %v1635 = vpop.f32.mrf.mxu0
      %v1636 = vadd.f32 0.0, %v1635
      %v1637 = vpop.f32.mrf.mxu0
      %1638 = vmatprep.mubr.f32.mxu0 0.0
      %1639 = vmatmul.mubr.f32.gmra.mxu0 %v1426
      %v1640 = vpop.f32.mrf.mxu0
      %v1641 = vadd.f32 0.0, %v1640
      %v1642 = vpop.f32.mrf.mxu0
      %1643 = vmatprep.mubr.f32.mxu0 0.0
      %1644 = vmatmul.mubr.f32.gmra.mxu0 %v1429
      %v1645 = vpop.f32.mrf.mxu0
      %v1646 = vadd.f32 0.0, %v1645
      %v1647 = vpop.f32.mrf.mxu0
      %1648 = vmatprep.mubr.f32.mxu0 0.0
      %1649 = vmatmul.mubr.f32.gmra.mxu0 %v1432
      %v1650 = vpop.f32.mrf.mxu0
      %v1651 = vadd.f32 0.0, %v1650
      %v1652 = vpop.f32.mrf.mxu0
      %1653 = vmatprep.mubr.f32.mxu0 0.0
      %1654 = vmatmul.mubr.f32.gmra.mxu0 %v1435
      %v1655 = vpop.f32.mrf.mxu0
      %v1656 = vadd.f32 0.0, %v1655
      %v1657 = vpop.f32.mrf.mxu0
      %1658 = vmatprep.mubr.f32.mxu0 0.0
      %1659 = vmatmul.mubr.f32.gmra.mxu0 %v1438
      %v1660 = vpop.f32.mrf.mxu0
      %v1661 = vadd.f32 0.0, %v1660
      %v1662 = vpop.f32.mrf.mxu0
      %1663 = vmatprep.mubr.f32.mxu0 0.0
      %1664 = vmatmul.mubr.f32.gmra.mxu0 %v1441
      %v1665 = vpop.f32.mrf.mxu0
      %v1666 = vadd.f32 0.0, %v1665
      %v1667 = vpop.f32.mrf.mxu0
      %1668 = vmatprep.mubr.f32.mxu0 0.0
      %1669 = vmatmul.mubr.f32.gmra.mxu0 %v1444
      %v1670 = vpop.f32.mrf.mxu0
      %v1671 = vadd.f32 0.0, %v1670
      %v1672 = vpop.f32.mrf.mxu0
      %1673 = vdwg.mxu0
      %v1674 = vld [vmem:[#allocation3] sm:$0xff]
      %v1675 = vld [vmem:[#allocation3 + $0x8] sm:$0xff]
      %v1676 = vld [vmem:[#allocation3 + $0x10] sm:$0xff]
      %v1677 = vld [vmem:[#allocation3 + $0x18] sm:$0xff]
      %v1678 = vld [vmem:[#allocation3 + $0x20] sm:$0xff]
      %v1679 = vld [vmem:[#allocation3 + $0x28] sm:$0xff]
      %v1680 = vld [vmem:[#allocation3 + $0x30] sm:$0xff]
      %v1681 = vld [vmem:[#allocation3 + $0x38] sm:$0xff]
      %v1682 = vld [vmem:[#allocation3 + $0x40] sm:$0xff]
      %v1683 = vld [vmem:[#allocation3 + $0x48] sm:$0xff]
      %v1684 = vld [vmem:[#allocation3 + $0x50] sm:$0xff]
      %v1685 = vld [vmem:[#allocation3 + $0x58] sm:$0xff]
      %v1686 = vld [vmem:[#allocation3 + $0x60] sm:$0xff]
      %v1687 = vld [vmem:[#allocation3 + $0x68] sm:$0xff]
      %v1688 = vld [vmem:[#allocation3 + $0x70] sm:$0xff]
      %v1689 = vld [vmem:[#allocation3 + $0x78] sm:$0xff]
      %v1690 = vld [vmem:[#allocation3 + $0x80] sm:$0xff]
      %v1691 = vld [vmem:[#allocation3 + $0x88] sm:$0xff]
      %v1692 = vld [vmem:[#allocation3 + $0x90] sm:$0xff]
      %v1693 = vld [vmem:[#allocation3 + $0x98] sm:$0xff]
      %v1694 = vld [vmem:[#allocation3 + $0xa0] sm:$0xff]
      %v1695 = vld [vmem:[#allocation3 + $0xa8] sm:$0xff]
      %v1696 = vld [vmem:[#allocation3 + $0xb0] sm:$0xff]
      %v1697 = vld [vmem:[#allocation3 + $0xb8] sm:$0xff]
      %v1698 = vld [vmem:[#allocation3 + $0xc0] sm:$0xff]
      %v1699 = vld [vmem:[#allocation3 + $0xc8] sm:$0xff]
      %v1700 = vld [vmem:[#allocation3 + $0xd0] sm:$0xff]
      %v1701 = vld [vmem:[#allocation3 + $0xd8] sm:$0xff]
      %v1702 = vld [vmem:[#allocation3 + $0xe0] sm:$0xff]
      %v1703 = vld [vmem:[#allocation3 + $0xe8] sm:$0xff]
      %v1704 = vld [vmem:[#allocation3 + $0xf0] sm:$0xff]
      %v1705 = vld [vmem:[#allocation3 + $0xf8] sm:$0xff]
      %v1706 = vadd.f32 %v1674, %v1516
      %v1707 = vadd.f32 %v1675, %v1521
      %v1708 = vadd.f32 %v1676, %v1526
      %v1709 = vadd.f32 %v1677, %v1531
      %v1710 = vadd.f32 %v1678, %v1536
      %v1711 = vadd.f32 %v1679, %v1541
      %v1712 = vadd.f32 %v1680, %v1546
      %v1713 = vadd.f32 %v1681, %v1551
      %v1714 = vadd.f32 %v1682, %v1556
      %v1715 = vadd.f32 %v1683, %v1561
      %v1716 = vadd.f32 %v1684, %v1566
      %v1717 = vadd.f32 %v1685, %v1571
      %v1718 = vadd.f32 %v1686, %v1576
      %v1719 = vadd.f32 %v1687, %v1581
      %v1720 = vadd.f32 %v1688, %v1586
      %v1721 = vadd.f32 %v1689, %v1591
      %v1722 = vadd.f32 %v1690, %v1596
      %v1723 = vadd.f32 %v1691, %v1601
      %v1724 = vadd.f32 %v1692, %v1606
      %v1725 = vadd.f32 %v1693, %v1611
      %v1726 = vadd.f32 %v1694, %v1616
      %v1727 = vadd.f32 %v1695, %v1621
      %v1728 = vadd.f32 %v1696, %v1626
      %v1729 = vadd.f32 %v1697, %v1631
      %v1730 = vadd.f32 %v1698, %v1636
      %v1731 = vadd.f32 %v1699, %v1641
      %v1732 = vadd.f32 %v1700, %v1646
      %v1733 = vadd.f32 %v1701, %v1651
      %v1734 = vadd.f32 %v1702, %v1656
      %v1735 = vadd.f32 %v1703, %v1661
      %v1736 = vadd.f32 %v1704, %v1666
      %v1737 = vadd.f32 %v1705, %v1671
      %1738 = vst.msk [vmem:[#allocation3] sm:$0xff] %vm204, %v1706
      %1739 = vst.msk [vmem:[#allocation3 + $0x8] sm:$0xff] %vm204, %v1707
      %1740 = vst.msk [vmem:[#allocation3 + $0x10] sm:$0xff] %vm204, %v1708
      %1741 = vst.msk [vmem:[#allocation3 + $0x18] sm:$0xff] %vm204, %v1709
      %1742 = vst.msk [vmem:[#allocation3 + $0x20] sm:$0xff] %vm204, %v1710
      %1743 = vst.msk [vmem:[#allocation3 + $0x28] sm:$0xff] %vm204, %v1711
      %1744 = vst.msk [vmem:[#allocation3 + $0x30] sm:$0xff] %vm204, %v1712
      %1745 = vst.msk [vmem:[#allocation3 + $0x38] sm:$0xff] %vm204, %v1713
      %1746 = vst.msk [vmem:[#allocation3 + $0x40] sm:$0xff] %vm204, %v1714
      %1747 = vst.msk [vmem:[#allocation3 + $0x48] sm:$0xff] %vm204, %v1715
      %1748 = vst.msk [vmem:[#allocation3 + $0x50] sm:$0xff] %vm204, %v1716
      %1749 = vst.msk [vmem:[#allocation3 + $0x58] sm:$0xff] %vm204, %v1717
      %1750 = vst.msk [vmem:[#allocation3 + $0x60] sm:$0xff] %vm204, %v1718
      %1751 = vst.msk [vmem:[#allocation3 + $0x68] sm:$0xff] %vm204, %v1719
      %1752 = vst.msk [vmem:[#allocation3 + $0x70] sm:$0xff] %vm204, %v1720
      %1753 = vst.msk [vmem:[#allocation3 + $0x78] sm:$0xff] %vm204, %v1721
      %1754 = vst.msk [vmem:[#allocation3 + $0x80] sm:$0xff] %vm204, %v1722
      %1755 = vst.msk [vmem:[#allocation3 + $0x88] sm:$0xff] %vm204, %v1723
      %1756 = vst.msk [vmem:[#allocation3 + $0x90] sm:$0xff] %vm204, %v1724
      %1757 = vst.msk [vmem:[#allocation3 + $0x98] sm:$0xff] %vm204, %v1725
      %1758 = vst.msk [vmem:[#allocation3 + $0xa0] sm:$0xff] %vm204, %v1726
      %1759 = vst.msk [vmem:[#allocation3 + $0xa8] sm:$0xff] %vm204, %v1727
      %1760 = vst.msk [vmem:[#allocation3 + $0xb0] sm:$0xff] %vm204, %v1728
      %1761 = vst.msk [vmem:[#allocation3 + $0xb8] sm:$0xff] %vm204, %v1729
      %1762 = vst.msk [vmem:[#allocation3 + $0xc0] sm:$0xff] %vm204, %v1730
      %1763 = vst.msk [vmem:[#allocation3 + $0xc8] sm:$0xff] %vm204, %v1731
      %1764 = vst.msk [vmem:[#allocation3 + $0xd0] sm:$0xff] %vm204, %v1732
      %1765 = vst.msk [vmem:[#allocation3 + $0xd8] sm:$0xff] %vm204, %v1733
      %1766 = vst.msk [vmem:[#allocation3 + $0xe0] sm:$0xff] %vm204, %v1734
      %1767 = vst.msk [vmem:[#allocation3 + $0xe8] sm:$0xff] %vm204, %v1735
      %1768 = vst.msk [vmem:[#allocation3 + $0xf0] sm:$0xff] %vm204, %v1736
      %1769 = vst.msk [vmem:[#allocation3 + $0xf8] sm:$0xff] %vm204, %v1737
      %vm1770 = vcmask 1046528
      %v1771 = vrot.slane %v243, 1
      %v1772 = vsel %vm1770, %v296, %v1771
      %v1773 = vrot.slane %v245, 1
      %v1774 = vsel %vm1770, %v297, %v1773
      %v1775 = vrot.slane %v247, 1
      %v1776 = vsel %vm1770, %v298, %v1775
      %v1777 = vrot.slane %v249, 1
      %v1778 = vsel %vm1770, %v299, %v1777
      %v1779 = vrot.slane %v251, 1
      %v1780 = vsel %vm1770, %v300, %v1779
      %v1781 = vrot.slane %v253, 1
      %v1782 = vsel %vm1770, %v301, %v1781
      %v1783 = vrot.slane %v255, 1
      %v1784 = vsel %vm1770, %v302, %v1783
      %v1785 = vrot.slane %v257, 1
      %v1786 = vsel %vm1770, %v303, %v1785
      %v1787 = vrot.slane %v259, 1
      %v1788 = vsel %vm1770, %v304, %v1787
      %v1789 = vrot.slane %v261, 1
      %v1790 = vsel %vm1770, %v305, %v1789
      %v1791 = vrot.slane %v263, 1
      %v1792 = vsel %vm1770, %v306, %v1791
      %v1793 = vrot.slane %v265, 1
      %v1794 = vsel %vm1770, %v307, %v1793
      %v1795 = vrot.slane %v267, 1
      %v1796 = vsel %vm1770, %v308, %v1795
      %v1797 = vrot.slane %v269, 1
      %v1798 = vsel %vm1770, %v309, %v1797
      %v1799 = vrot.slane %v271, 1
      %v1800 = vsel %vm1770, %v310, %v1799
      %v1801 = vrot.slane %v273, 1
      %v1802 = vsel %vm1770, %v311, %v1801
      %v1803 = vrot.slane %v275, 1
      %v1804 = vsel %vm1770, %v312, %v1803
      %v1805 = vrot.slane %v277, 1
      %v1806 = vsel %vm1770, %v313, %v1805
      %v1859 = vsel %vm1770, %v1771, %v352
      %v1860 = vsel %vm1770, %v1773, %v355
      %v1861 = vsel %vm1770, %v1775, %v358
      %v1862 = vsel %vm1770, %v1777, %v361
      %v1863 = vsel %vm1770, %v1779, %v364
      %v1864 = vsel %vm1770, %v1781, %v367
      %v1865 = vsel %vm1770, %v1783, %v370
      %v1866 = vsel %vm1770, %v1785, %v373
      %v1867 = vsel %vm1770, %v1787, %v376
      %v1868 = vsel %vm1770, %v1789, %v379
      %v1869 = vsel %vm1770, %v1791, %v382
      %v1870 = vsel %vm1770, %v1793, %v385
      %v1871 = vsel %vm1770, %v1795, %v388
      %v1872 = vsel %vm1770, %v1797, %v391
      %v1873 = vsel %vm1770, %v1799, %v394
      %v1874 = vsel %vm1770, %v1801, %v397
      %v1875 = vsel %vm1770, %v1803, %v400
      %v1876 = vsel %vm1770, %v1805, %v403
      %1893 = vrot.lane.b32.xlu0 %v1774, 4
      %v1894 = vpop.permute.xlu0 %1893
      %1895 = vrot.lane.b32.xlu0 %v1860, 4
      %v1896 = vpop.permute.xlu0 %1895
      %1897 = vrot.lane.b32.xlu0 %v1776, 4
      %v1898 = vpop.permute.xlu0 %1897
      %1899 = vrot.lane.b32.xlu0 %v1861, 4
      %v1900 = vpop.permute.xlu0 %1899
      %1901 = vrot.lane.b32.xlu0 %v1778, 4
      %v1902 = vpop.permute.xlu0 %1901
      %1903 = vrot.lane.b32.xlu0 %v1862, 4
      %v1904 = vpop.permute.xlu0 %1903
      %1905 = vrot.lane.b32.xlu0 %v1780, 4
      %v1906 = vpop.permute.xlu0 %1905
      %1907 = vrot.lane.b32.xlu0 %v1863, 4
      %v1908 = vpop.permute.xlu0 %1907
      %1909 = vrot.lane.b32.xlu0 %v1782, 4
      %v1910 = vpop.permute.xlu0 %1909
      %1911 = vrot.lane.b32.xlu0 %v1864, 4
      %v1912 = vpop.permute.xlu0 %1911
      %1913 = vrot.lane.b32.xlu0 %v1784, 4
      %v1914 = vpop.permute.xlu0 %1913
      %1915 = vrot.lane.b32.xlu0 %v1865, 4
      %v1916 = vpop.permute.xlu0 %1915
      %1917 = vrot.lane.b32.xlu0 %v1786, 4
      %v1918 = vpop.permute.xlu0 %1917
      %1919 = vrot.lane.b32.xlu0 %v1866, 4
      %v1920 = vpop.permute.xlu0 %1919
      %1921 = vrot.lane.b32.xlu0 %v1788, 4
      %v1922 = vpop.permute.xlu0 %1921
      %1923 = vrot.lane.b32.xlu0 %v1867, 4
      %v1924 = vpop.permute.xlu0 %1923
      %1925 = vrot.lane.b32.xlu0 %v1790, 4
      %v1926 = vpop.permute.xlu0 %1925
      %1927 = vrot.lane.b32.xlu0 %v1868, 4
      %v1928 = vpop.permute.xlu0 %1927
      %1929 = vrot.lane.b32.xlu0 %v1792, 4
      %v1930 = vpop.permute.xlu0 %1929
      %1931 = vrot.lane.b32.xlu0 %v1869, 4
      %v1932 = vpop.permute.xlu0 %1931
      %1933 = vrot.lane.b32.xlu0 %v1794, 4
      %v1934 = vpop.permute.xlu0 %1933
      %1935 = vrot.lane.b32.xlu0 %v1870, 4
      %v1936 = vpop.permute.xlu0 %1935
      %1937 = vrot.lane.b32.xlu0 %v1796, 4
      %v1938 = vpop.permute.xlu0 %1937
      %1939 = vrot.lane.b32.xlu0 %v1871, 4
      %v1940 = vpop.permute.xlu0 %1939
      %1941 = vrot.lane.b32.xlu0 %v1798, 4
      %v1942 = vpop.permute.xlu0 %1941
      %1943 = vrot.lane.b32.xlu0 %v1872, 4
      %v1944 = vpop.permute.xlu0 %1943
      %1945 = vrot.lane.b32.xlu0 %v1800, 4
      %v1946 = vpop.permute.xlu0 %1945
      %1947 = vrot.lane.b32.xlu0 %v1873, 4
      %v1948 = vpop.permute.xlu0 %1947
      %1949 = vrot.lane.b32.xlu0 %v1802, 4
      %v1950 = vpop.permute.xlu0 %1949
      %1951 = vrot.lane.b32.xlu0 %v1874, 4
      %v1952 = vpop.permute.xlu0 %1951
      %1953 = vrot.lane.b32.xlu0 %v1804, 4
      %v1954 = vpop.permute.xlu0 %1953
      %1955 = vrot.lane.b32.xlu0 %v1875, 4
      %v1956 = vpop.permute.xlu0 %1955
      %1990 = vrot.lane.b32.xlu0 %v1776, 8
      %v1991 = vpop.permute.xlu0 %1990
      %1992 = vrot.lane.b32.xlu0 %v1861, 8
      %v1993 = vpop.permute.xlu0 %1992
      %1994 = vrot.lane.b32.xlu0 %v1778, 8
      %v1995 = vpop.permute.xlu0 %1994
      %1996 = vrot.lane.b32.xlu0 %v1862, 8
      %v1997 = vpop.permute.xlu0 %1996
      %1998 = vrot.lane.b32.xlu0 %v1780, 8
      %v1999 = vpop.permute.xlu0 %1998
      %2000 = vrot.lane.b32.xlu0 %v1863, 8
      %v2001 = vpop.permute.xlu0 %2000
      %2002 = vrot.lane.b32.xlu0 %v1782, 8
      %v2003 = vpop.permute.xlu0 %2002
      %2004 = vrot.lane.b32.xlu0 %v1864, 8
      %v2005 = vpop.permute.xlu0 %2004
      %2006 = vrot.lane.b32.xlu0 %v1784, 8
      %v2007 = vpop.permute.xlu0 %2006
      %2008 = vrot.lane.b32.xlu0 %v1865, 8
      %v2009 = vpop.permute.xlu0 %2008
      %2010 = vrot.lane.b32.xlu0 %v1786, 8
      %v2011 = vpop.permute.xlu0 %2010
      %2012 = vrot.lane.b32.xlu0 %v1866, 8
      %v2013 = vpop.permute.xlu0 %2012
      %2014 = vrot.lane.b32.xlu0 %v1788, 8
      %v2015 = vpop.permute.xlu0 %2014
      %2016 = vrot.lane.b32.xlu0 %v1867, 8
      %v2017 = vpop.permute.xlu0 %2016
      %2018 = vrot.lane.b32.xlu0 %v1790, 8
      %v2019 = vpop.permute.xlu0 %2018
      %2020 = vrot.lane.b32.xlu0 %v1868, 8
      %v2021 = vpop.permute.xlu0 %2020
      %2022 = vrot.lane.b32.xlu0 %v1792, 8
      %v2023 = vpop.permute.xlu0 %2022
      %2024 = vrot.lane.b32.xlu0 %v1869, 8
      %v2025 = vpop.permute.xlu0 %2024
      %2026 = vrot.lane.b32.xlu0 %v1794, 8
      %v2027 = vpop.permute.xlu0 %2026
      %2028 = vrot.lane.b32.xlu0 %v1870, 8
      %v2029 = vpop.permute.xlu0 %2028
      %2030 = vrot.lane.b32.xlu0 %v1796, 8
      %v2031 = vpop.permute.xlu0 %2030
      %2032 = vrot.lane.b32.xlu0 %v1871, 8
      %v2033 = vpop.permute.xlu0 %2032
      %2034 = vrot.lane.b32.xlu0 %v1798, 8
      %v2035 = vpop.permute.xlu0 %2034
      %2036 = vrot.lane.b32.xlu0 %v1872, 8
      %v2037 = vpop.permute.xlu0 %2036
      %2038 = vrot.lane.b32.xlu0 %v1800, 8
      %v2039 = vpop.permute.xlu0 %2038
      %2040 = vrot.lane.b32.xlu0 %v1873, 8
      %v2041 = vpop.permute.xlu0 %2040
      %2042 = vrot.lane.b32.xlu0 %v1802, 8
      %v2043 = vpop.permute.xlu0 %2042
      %2044 = vrot.lane.b32.xlu0 %v1874, 8
      %v2045 = vpop.permute.xlu0 %2044
      %2046 = vrot.lane.b32.xlu0 %v1804, 8
      %v2047 = vpop.permute.xlu0 %2046
      %2048 = vrot.lane.b32.xlu0 %v1875, 8
      %v2049 = vpop.permute.xlu0 %2048
      %2050 = vrot.lane.b32.xlu0 %v1806, 8
      %v2051 = vpop.permute.xlu0 %2050
      %2052 = vrot.lane.b32.xlu0 %v1876, 8
      %v2053 = vpop.permute.xlu0 %2052
      %v2086 = vsel %vm204, %v1772, %v1894
      %v2087 = vsel %vm204, %v1859, %v1896
      %v2088 = vsel %vm204, %v1774, %v1898
      %v2089 = vsel %vm204, %v1860, %v1900
      %v2090 = vsel %vm204, %v1776, %v1902
      %v2091 = vsel %vm204, %v1861, %v1904
      %v2092 = vsel %vm204, %v1778, %v1906
      %v2093 = vsel %vm204, %v1862, %v1908
      %v2094 = vsel %vm204, %v1780, %v1910
      %v2095 = vsel %vm204, %v1863, %v1912
      %v2096 = vsel %vm204, %v1782, %v1914
      %v2097 = vsel %vm204, %v1864, %v1916
      %v2098 = vsel %vm204, %v1784, %v1918
      %v2099 = vsel %vm204, %v1865, %v1920
      %v2100 = vsel %vm204, %v1786, %v1922
      %v2101 = vsel %vm204, %v1866, %v1924
      %v2102 = vsel %vm204, %v1788, %v1926
      %v2103 = vsel %vm204, %v1867, %v1928
      %v2104 = vsel %vm204, %v1790, %v1930
      %v2105 = vsel %vm204, %v1868, %v1932
      %v2106 = vsel %vm204, %v1792, %v1934
      %v2107 = vsel %vm204, %v1869, %v1936
      %v2108 = vsel %vm204, %v1794, %v1938
      %v2109 = vsel %vm204, %v1870, %v1940
      %v2110 = vsel %vm204, %v1796, %v1942
      %v2111 = vsel %vm204, %v1871, %v1944
      %v2112 = vsel %vm204, %v1798, %v1946
      %v2113 = vsel %vm204, %v1872, %v1948
      %v2114 = vsel %vm204, %v1800, %v1950
      %v2115 = vsel %vm204, %v1873, %v1952
      %v2116 = vsel %vm204, %v1802, %v1954
      %v2117 = vsel %vm204, %v1874, %v1956
      %v2118 = vsel %vm698, %v2086, %v1991
      %v2119 = vsel %vm698, %v2087, %v1993
      %v2120 = vsel %vm698, %v2088, %v1995
      %v2121 = vsel %vm698, %v2089, %v1997
      %v2122 = vsel %vm698, %v2090, %v1999
      %v2123 = vsel %vm698, %v2091, %v2001
      %v2124 = vsel %vm698, %v2092, %v2003
      %v2125 = vsel %vm698, %v2093, %v2005
      %v2126 = vsel %vm698, %v2094, %v2007
      %v2127 = vsel %vm698, %v2095, %v2009
      %v2128 = vsel %vm698, %v2096, %v2011
      %v2129 = vsel %vm698, %v2097, %v2013
      %v2130 = vsel %vm698, %v2098, %v2015
      %v2131 = vsel %vm698, %v2099, %v2017
      %v2132 = vsel %vm698, %v2100, %v2019
      %v2133 = vsel %vm698, %v2101, %v2021
      %v2134 = vsel %vm698, %v2102, %v2023
      %v2135 = vsel %vm698, %v2103, %v2025
      %v2136 = vsel %vm698, %v2104, %v2027
      %v2137 = vsel %vm698, %v2105, %v2029
      %v2138 = vsel %vm698, %v2106, %v2031
      %v2139 = vsel %vm698, %v2107, %v2033
      %v2140 = vsel %vm698, %v2108, %v2035
      %v2141 = vsel %vm698, %v2109, %v2037
      %v2142 = vsel %vm698, %v2110, %v2039
      %v2143 = vsel %vm698, %v2111, %v2041
      %v2144 = vsel %vm698, %v2112, %v2043
      %v2145 = vsel %vm698, %v2113, %v2045
      %v2146 = vsel %vm698, %v2114, %v2047
      %v2147 = vsel %vm698, %v2115, %v2049
      %v2148 = vsel %vm698, %v2116, %v2051
      %v2149 = vsel %vm698, %v2117, %v2053
      %s2150 = scalar_lea.vmem %s1, 32
      %v2151 = vld [vmem:[%s2150] sm:$0xff]
      %v2152 = vld [vmem:[%s2150 + $0x8] sm:$0xf]
      %v2154 = vsel %vm733, %v2118, 0
      %v2157 = vsel %vm733, %v2119, 0
      %v2160 = vsel %vm733, %v2120, 0
      %v2163 = vsel %vm733, %v2121, 0
      %v2166 = vsel %vm733, %v2122, 0
      %v2169 = vsel %vm733, %v2123, 0
      %v2172 = vsel %vm733, %v2124, 0
      %v2175 = vsel %vm733, %v2125, 0
      %v2178 = vsel %vm733, %v2126, 0
      %v2181 = vsel %vm733, %v2127, 0
      %v2184 = vsel %vm733, %v2128, 0
      %v2187 = vsel %vm733, %v2129, 0
      %v2190 = vsel %vm733, %v2130, 0
      %v2193 = vsel %vm733, %v2131, 0
      %v2196 = vsel %vm733, %v2132, 0
      %v2199 = vsel %vm733, %v2133, 0
      %v2202 = vsel %vm733, %v2134, 0
      %v2205 = vsel %vm733, %v2135, 0
      %v2208 = vsel %vm733, %v2136, 0
      %v2211 = vsel %vm733, %v2137, 0
      %v2214 = vsel %vm733, %v2138, 0
      %v2217 = vsel %vm733, %v2139, 0
      %v2220 = vsel %vm733, %v2140, 0
      %v2223 = vsel %vm733, %v2141, 0
      %v2226 = vsel %vm733, %v2142, 0
      %v2229 = vsel %vm733, %v2143, 0
      %v2232 = vsel %vm733, %v2144, 0
      %v2235 = vsel %vm733, %v2145, 0
      %v2238 = vsel %vm733, %v2146, 0
      %v2241 = vsel %vm733, %v2147, 0
      %v2244 = vsel %vm733, %v2148, 0
      %v2247 = vsel %vm733, %v2149, 0
      %v2250 = vsel %vm830, %v2152, 0
      %2252 = vmatprep.subr.mxu0 0.0
      %2253 = vmatpush1.msra.mxu0 0.0
      %2254 = vmatprep.subr.mxu0 0.0
      %2255 = vmatpush1.msra.mxu0 0.0
      %2256 = vmatprep.subr.mxu0 0.0
      %2257 = vmatpush1.msra.mxu0 0.0
      %2258 = vmatprep.subr.mxu0 0.0
      %2259 = vmatpush1.msra.mxu0 0.0
      %2260 = vmatprep.subr.mxu0 0.0
      %2261 = vmatpush1.msra.mxu0 0.0
      %2262 = vmatprep.subr.mxu0 0.0
      %2263 = vmatpush1.msra.mxu0 0.0
      %2264 = vmatprep.subr.mxu0 0.0
      %2265 = vmatpush1.msra.mxu0 0.0
      %2266 = vmatprep.subr.mxu0 0.0
      %2267 = vmatpush1.msra.mxu0 0.0
      %2268 = vmatprep.subr.mxu0 0.0
      %2269 = vmatpush1.msra.mxu0 0.0
      %2270 = vmatprep.subr.mxu0 0.0
      %2271 = vmatpush1.msra.mxu0 0.0
      %2272 = vmatprep.subr.mxu0 0.0
      %2273 = vmatpush1.msra.mxu0 0.0
      %2274 = vmatprep.subr.mxu0 0.0
      %2275 = vmatpush1.msra.mxu0 0.0
      %2276 = vmatprep.subr.mxu0 0.0
      %2277 = vmatpush1.msra.mxu0 0.0
      %2278 = vmatprep.subr.mxu0 0.0
      %2279 = vmatpush1.msra.mxu0 0.0
      %2280 = vmatprep.subr.mxu0 0.0
      %2281 = vmatpush1.msra.mxu0 %v2250
      %2282 = vmatprep.subr.mxu0 0.0
      %2283 = vmatpush1.msra.mxu0 %v2151
      %2284 = vmatprep.subr.mxu0 0.0
      %2285 = vmatpush2.msra.mxu0 0.0
      %2286 = vmatprep.subr.mxu0 0.0
      %2287 = vmatpush2.msra.mxu0 0.0
      %2288 = vmatprep.subr.mxu0 0.0
      %2289 = vmatpush2.msra.mxu0 0.0
      %2290 = vmatprep.subr.mxu0 0.0
      %2291 = vmatpush2.msra.mxu0 0.0
      %2292 = vmatprep.subr.mxu0 0.0
      %2293 = vmatpush2.msra.mxu0 0.0
      %2294 = vmatprep.subr.mxu0 0.0
      %2295 = vmatpush2.msra.mxu0 0.0
      %2296 = vmatprep.subr.mxu0 0.0
      %2297 = vmatpush2.msra.mxu0 0.0
      %2298 = vmatprep.subr.mxu0 0.0
      %2299 = vmatpush2.msra.mxu0 0.0
      %2300 = vmatprep.subr.mxu0 0.0
      %2301 = vmatpush2.msra.mxu0 0.0
      %2302 = vmatprep.subr.mxu0 0.0
      %2303 = vmatpush2.msra.mxu0 0.0
      %2304 = vmatprep.subr.mxu0 0.0
      %2305 = vmatpush2.msra.mxu0 0.0
      %2306 = vmatprep.subr.mxu0 0.0
      %2307 = vmatpush2.msra.mxu0 0.0
      %2308 = vmatprep.subr.mxu0 0.0
      %2309 = vmatpush2.msra.mxu0 0.0
      %2310 = vmatprep.subr.mxu0 0.0
      %2311 = vmatpush2.msra.mxu0 0.0
      %2312 = vmatprep.subr.mxu0 0.0
      %2313 = vmatpush2.msra.mxu0 0.0
      %2314 = vmatprep.subr.mxu0 0.0
      %2315 = vmatpush2.msra.mxu0 0.0
      %2316 = vmatprep.mubr.f32.mxu0 0.0
      %2317 = vmatmul.mubr.f32.gmra.mxu0 %v2154
      %v2318 = vpop.f32.mrf.mxu0
      %v2319 = vadd.f32 0.0, %v2318
      %v2320 = vpop.f32.mrf.mxu0
      %2321 = vmatprep.mubr.f32.mxu0 0.0
      %2322 = vmatmul.mubr.f32.gmra.mxu0 %v2157
      %v2323 = vpop.f32.mrf.mxu0
      %v2324 = vadd.f32 0.0, %v2323
      %v2325 = vpop.f32.mrf.mxu0
      %2326 = vmatprep.mubr.f32.mxu0 0.0
      %2327 = vmatmul.mubr.f32.gmra.mxu0 %v2160
      %v2328 = vpop.f32.mrf.mxu0
      %v2329 = vadd.f32 0.0, %v2328
      %v2330 = vpop.f32.mrf.mxu0
      %2331 = vmatprep.mubr.f32.mxu0 0.0
      %2332 = vmatmul.mubr.f32.gmra.mxu0 %v2163
      %v2333 = vpop.f32.mrf.mxu0
      %v2334 = vadd.f32 0.0, %v2333
      %v2335 = vpop.f32.mrf.mxu0
      %2336 = vmatprep.mubr.f32.mxu0 0.0
      %2337 = vmatmul.mubr.f32.gmra.mxu0 %v2166
      %v2338 = vpop.f32.mrf.mxu0
      %v2339 = vadd.f32 0.0, %v2338
      %v2340 = vpop.f32.mrf.mxu0
      %2341 = vmatprep.mubr.f32.mxu0 0.0
      %2342 = vmatmul.mubr.f32.gmra.mxu0 %v2169
      %v2343 = vpop.f32.mrf.mxu0
      %v2344 = vadd.f32 0.0, %v2343
      %v2345 = vpop.f32.mrf.mxu0
      %2346 = vmatprep.mubr.f32.mxu0 0.0
      %2347 = vmatmul.mubr.f32.gmra.mxu0 %v2172
      %v2348 = vpop.f32.mrf.mxu0
      %v2349 = vadd.f32 0.0, %v2348
      %v2350 = vpop.f32.mrf.mxu0
      %2351 = vmatprep.mubr.f32.mxu0 0.0
      %2352 = vmatmul.mubr.f32.gmra.mxu0 %v2175
      %v2353 = vpop.f32.mrf.mxu0
      %v2354 = vadd.f32 0.0, %v2353
      %v2355 = vpop.f32.mrf.mxu0
      %2356 = vmatprep.mubr.f32.mxu0 0.0
      %2357 = vmatmul.mubr.f32.gmra.mxu0 %v2178
      %v2358 = vpop.f32.mrf.mxu0
      %v2359 = vadd.f32 0.0, %v2358
      %v2360 = vpop.f32.mrf.mxu0
      %2361 = vmatprep.mubr.f32.mxu0 0.0
      %2362 = vmatmul.mubr.f32.gmra.mxu0 %v2181
      %v2363 = vpop.f32.mrf.mxu0
      %v2364 = vadd.f32 0.0, %v2363
      %v2365 = vpop.f32.mrf.mxu0
      %2366 = vmatprep.mubr.f32.mxu0 0.0
      %2367 = vmatmul.mubr.f32.gmra.mxu0 %v2184
      %v2368 = vpop.f32.mrf.mxu0
      %v2369 = vadd.f32 0.0, %v2368
      %v2370 = vpop.f32.mrf.mxu0
      %2371 = vmatprep.mubr.f32.mxu0 0.0
      %2372 = vmatmul.mubr.f32.gmra.mxu0 %v2187
      %v2373 = vpop.f32.mrf.mxu0
      %v2374 = vadd.f32 0.0, %v2373
      %v2375 = vpop.f32.mrf.mxu0
      %2376 = vmatprep.mubr.f32.mxu0 0.0
      %2377 = vmatmul.mubr.f32.gmra.mxu0 %v2190
      %v2378 = vpop.f32.mrf.mxu0
      %v2379 = vadd.f32 0.0, %v2378
      %v2380 = vpop.f32.mrf.mxu0
      %2381 = vmatprep.mubr.f32.mxu0 0.0
      %2382 = vmatmul.mubr.f32.gmra.mxu0 %v2193
      %v2383 = vpop.f32.mrf.mxu0
      %v2384 = vadd.f32 0.0, %v2383
      %v2385 = vpop.f32.mrf.mxu0
      %2386 = vmatprep.mubr.f32.mxu0 0.0
      %2387 = vmatmul.mubr.f32.gmra.mxu0 %v2196
      %v2388 = vpop.f32.mrf.mxu0
      %v2389 = vadd.f32 0.0, %v2388
      %v2390 = vpop.f32.mrf.mxu0
      %2391 = vmatprep.mubr.f32.mxu0 0.0
      %2392 = vmatmul.mubr.f32.gmra.mxu0 %v2199
      %v2393 = vpop.f32.mrf.mxu0
      %v2394 = vadd.f32 0.0, %v2393
      %v2395 = vpop.f32.mrf.mxu0
      %2396 = vmatprep.mubr.f32.mxu0 0.0
      %2397 = vmatmul.mubr.f32.gmra.mxu0 %v2202
      %v2398 = vpop.f32.mrf.mxu0
      %v2399 = vadd.f32 0.0, %v2398
      %v2400 = vpop.f32.mrf.mxu0
      %2401 = vmatprep.mubr.f32.mxu0 0.0
      %2402 = vmatmul.mubr.f32.gmra.mxu0 %v2205
      %v2403 = vpop.f32.mrf.mxu0
      %v2404 = vadd.f32 0.0, %v2403
      %v2405 = vpop.f32.mrf.mxu0
      %2406 = vmatprep.mubr.f32.mxu0 0.0
      %2407 = vmatmul.mubr.f32.gmra.mxu0 %v2208
      %v2408 = vpop.f32.mrf.mxu0
      %v2409 = vadd.f32 0.0, %v2408
      %v2410 = vpop.f32.mrf.mxu0
      %2411 = vmatprep.mubr.f32.mxu0 0.0
      %2412 = vmatmul.mubr.f32.gmra.mxu0 %v2211
      %v2413 = vpop.f32.mrf.mxu0
      %v2414 = vadd.f32 0.0, %v2413
      %v2415 = vpop.f32.mrf.mxu0
      %2416 = vmatprep.mubr.f32.mxu0 0.0
      %2417 = vmatmul.mubr.f32.gmra.mxu0 %v2214
      %v2418 = vpop.f32.mrf.mxu0
      %v2419 = vadd.f32 0.0, %v2418
      %v2420 = vpop.f32.mrf.mxu0
      %2421 = vmatprep.mubr.f32.mxu0 0.0
      %2422 = vmatmul.mubr.f32.gmra.mxu0 %v2217
      %v2423 = vpop.f32.mrf.mxu0
      %v2424 = vadd.f32 0.0, %v2423
      %v2425 = vpop.f32.mrf.mxu0
      %2426 = vmatprep.mubr.f32.mxu0 0.0
      %2427 = vmatmul.mubr.f32.gmra.mxu0 %v2220
      %v2428 = vpop.f32.mrf.mxu0
      %v2429 = vadd.f32 0.0, %v2428
      %v2430 = vpop.f32.mrf.mxu0
      %2431 = vmatprep.mubr.f32.mxu0 0.0
      %2432 = vmatmul.mubr.f32.gmra.mxu0 %v2223
      %v2433 = vpop.f32.mrf.mxu0
      %v2434 = vadd.f32 0.0, %v2433
      %v2435 = vpop.f32.mrf.mxu0
      %2436 = vmatprep.mubr.f32.mxu0 0.0
      %2437 = vmatmul.mubr.f32.gmra.mxu0 %v2226
      %v2438 = vpop.f32.mrf.mxu0
      %v2439 = vadd.f32 0.0, %v2438
      %v2440 = vpop.f32.mrf.mxu0
      %2441 = vmatprep.mubr.f32.mxu0 0.0
      %2442 = vmatmul.mubr.f32.gmra.mxu0 %v2229
      %v2443 = vpop.f32.mrf.mxu0
      %v2444 = vadd.f32 0.0, %v2443
      %v2445 = vpop.f32.mrf.mxu0
      %2446 = vmatprep.mubr.f32.mxu0 0.0
      %2447 = vmatmul.mubr.f32.gmra.mxu0 %v2232
      %v2448 = vpop.f32.mrf.mxu0
      %v2449 = vadd.f32 0.0, %v2448
      %v2450 = vpop.f32.mrf.mxu0
      %2451 = vmatprep.mubr.f32.mxu0 0.0
      %2452 = vmatmul.mubr.f32.gmra.mxu0 %v2235
      %v2453 = vpop.f32.mrf.mxu0
      %v2454 = vadd.f32 0.0, %v2453
      %v2455 = vpop.f32.mrf.mxu0
      %2456 = vmatprep.mubr.f32.mxu0 0.0
      %2457 = vmatmul.mubr.f32.gmra.mxu0 %v2238
      %v2458 = vpop.f32.mrf.mxu0
      %v2459 = vadd.f32 0.0, %v2458
      %v2460 = vpop.f32.mrf.mxu0
      %2461 = vmatprep.mubr.f32.mxu0 0.0
      %2462 = vmatmul.mubr.f32.gmra.mxu0 %v2241
      %v2463 = vpop.f32.mrf.mxu0
      %v2464 = vadd.f32 0.0, %v2463
      %v2465 = vpop.f32.mrf.mxu0
      %2466 = vmatprep.mubr.f32.mxu0 0.0
      %2467 = vmatmul.mubr.f32.gmra.mxu0 %v2244
      %v2468 = vpop.f32.mrf.mxu0
      %v2469 = vadd.f32 0.0, %v2468
      %v2470 = vpop.f32.mrf.mxu0
      %2471 = vmatprep.mubr.f32.mxu0 0.0
      %2472 = vmatmul.mubr.f32.gmra.mxu0 %v2247
      %v2473 = vpop.f32.mrf.mxu0
      %v2474 = vadd.f32 0.0, %v2473
      %v2475 = vpop.f32.mrf.mxu0
      %2476 = vdwg.mxu0
      %v2477 = vld [vmem:[#allocation3] sm:$0xff]
      %v2478 = vld [vmem:[#allocation3 + $0x8] sm:$0xff]
      %v2479 = vld [vmem:[#allocation3 + $0x10] sm:$0xff]
      %v2480 = vld [vmem:[#allocation3 + $0x18] sm:$0xff]
      %v2481 = vld [vmem:[#allocation3 + $0x20] sm:$0xff]
      %v2482 = vld [vmem:[#allocation3 + $0x28] sm:$0xff]
      %v2483 = vld [vmem:[#allocation3 + $0x30] sm:$0xff]
      %v2484 = vld [vmem:[#allocation3 + $0x38] sm:$0xff]
      %v2485 = vld [vmem:[#allocation3 + $0x40] sm:$0xff]
      %v2486 = vld [vmem:[#allocation3 + $0x48] sm:$0xff]
      %v2487 = vld [vmem:[#allocation3 + $0x50] sm:$0xff]
      %v2488 = vld [vmem:[#allocation3 + $0x58] sm:$0xff]
      %v2489 = vld [vmem:[#allocation3 + $0x60] sm:$0xff]
      %v2490 = vld [vmem:[#allocation3 + $0x68] sm:$0xff]
      %v2491 = vld [vmem:[#allocation3 + $0x70] sm:$0xff]
      %v2492 = vld [vmem:[#allocation3 + $0x78] sm:$0xff]
      %v2493 = vld [vmem:[#allocation3 + $0x80] sm:$0xff]
      %v2494 = vld [vmem:[#allocation3 + $0x88] sm:$0xff]
      %v2495 = vld [vmem:[#allocation3 + $0x90] sm:$0xff]
      %v2496 = vld [vmem:[#allocation3 + $0x98] sm:$0xff]
      %v2497 = vld [vmem:[#allocation3 + $0xa0] sm:$0xff]
      %v2498 = vld [vmem:[#allocation3 + $0xa8] sm:$0xff]
      %v2499 = vld [vmem:[#allocation3 + $0xb0] sm:$0xff]
      %v2500 = vld [vmem:[#allocation3 + $0xb8] sm:$0xff]
      %v2501 = vld [vmem:[#allocation3 + $0xc0] sm:$0xff]
      %v2502 = vld [vmem:[#allocation3 + $0xc8] sm:$0xff]
      %v2503 = vld [vmem:[#allocation3 + $0xd0] sm:$0xff]
      %v2504 = vld [vmem:[#allocation3 + $0xd8] sm:$0xff]
      %v2505 = vld [vmem:[#allocation3 + $0xe0] sm:$0xff]
      %v2506 = vld [vmem:[#allocation3 + $0xe8] sm:$0xff]
      %v2507 = vld [vmem:[#allocation3 + $0xf0] sm:$0xff]
      %v2508 = vld [vmem:[#allocation3 + $0xf8] sm:$0xff]
      %v2509 = vadd.f32 %v2477, %v2319
      %v2510 = vadd.f32 %v2478, %v2324
      %v2511 = vadd.f32 %v2479, %v2329
      %v2512 = vadd.f32 %v2480, %v2334
      %v2513 = vadd.f32 %v2481, %v2339
      %v2514 = vadd.f32 %v2482, %v2344
      %v2515 = vadd.f32 %v2483, %v2349
      %v2516 = vadd.f32 %v2484, %v2354
      %v2517 = vadd.f32 %v2485, %v2359
      %v2518 = vadd.f32 %v2486, %v2364
      %v2519 = vadd.f32 %v2487, %v2369
      %v2520 = vadd.f32 %v2488, %v2374
      %v2521 = vadd.f32 %v2489, %v2379
      %v2522 = vadd.f32 %v2490, %v2384
      %v2523 = vadd.f32 %v2491, %v2389
      %v2524 = vadd.f32 %v2492, %v2394
      %v2525 = vadd.f32 %v2493, %v2399
      %v2526 = vadd.f32 %v2494, %v2404
      %v2527 = vadd.f32 %v2495, %v2409
      %v2528 = vadd.f32 %v2496, %v2414
      %v2529 = vadd.f32 %v2497, %v2419
      %v2530 = vadd.f32 %v2498, %v2424
      %v2531 = vadd.f32 %v2499, %v2429
      %v2532 = vadd.f32 %v2500, %v2434
      %v2533 = vadd.f32 %v2501, %v2439
      %v2534 = vadd.f32 %v2502, %v2444
      %v2535 = vadd.f32 %v2503, %v2449
      %v2536 = vadd.f32 %v2504, %v2454
      %v2537 = vadd.f32 %v2505, %v2459
      %v2538 = vadd.f32 %v2506, %v2464
      %v2539 = vadd.f32 %v2507, %v2469
      %v2540 = vadd.f32 %v2508, %v2474
      %2541 = vst.msk [vmem:[#allocation3] sm:$0xff] %vm204, %v2509
      %2542 = vst.msk [vmem:[#allocation3 + $0x8] sm:$0xff] %vm204, %v2510
      %2543 = vst.msk [vmem:[#allocation3 + $0x10] sm:$0xff] %vm204, %v2511
      %2544 = vst.msk [vmem:[#allocation3 + $0x18] sm:$0xff] %vm204, %v2512
      %2545 = vst.msk [vmem:[#allocation3 + $0x20] sm:$0xff] %vm204, %v2513
      %2546 = vst.msk [vmem:[#allocation3 + $0x28] sm:$0xff] %vm204, %v2514
      %2547 = vst.msk [vmem:[#allocation3 + $0x30] sm:$0xff] %vm204, %v2515
      %2548 = vst.msk [vmem:[#allocation3 + $0x38] sm:$0xff] %vm204, %v2516
      %2549 = vst.msk [vmem:[#allocation3 + $0x40] sm:$0xff] %vm204, %v2517
      %2550 = vst.msk [vmem:[#allocation3 + $0x48] sm:$0xff] %vm204, %v2518
      %2551 = vst.msk [vmem:[#allocation3 + $0x50] sm:$0xff] %vm204, %v2519
      %2552 = vst.msk [vmem:[#allocation3 + $0x58] sm:$0xff] %vm204, %v2520
      %2553 = vst.msk [vmem:[#allocation3 + $0x60] sm:$0xff] %vm204, %v2521
      %2554 = vst.msk [vmem:[#allocation3 + $0x68] sm:$0xff] %vm204, %v2522
      %2555 = vst.msk [vmem:[#allocation3 + $0x70] sm:$0xff] %vm204, %v2523
      %2556 = vst.msk [vmem:[#allocation3 + $0x78] sm:$0xff] %vm204, %v2524
      %2557 = vst.msk [vmem:[#allocation3 + $0x80] sm:$0xff] %vm204, %v2525
      %2558 = vst.msk [vmem:[#allocation3 + $0x88] sm:$0xff] %vm204, %v2526
      %2559 = vst.msk [vmem:[#allocation3 + $0x90] sm:$0xff] %vm204, %v2527
      %2560 = vst.msk [vmem:[#allocation3 + $0x98] sm:$0xff] %vm204, %v2528
      %2561 = vst.msk [vmem:[#allocation3 + $0xa0] sm:$0xff] %vm204, %v2529
      %2562 = vst.msk [vmem:[#allocation3 + $0xa8] sm:$0xff] %vm204, %v2530
      %2563 = vst.msk [vmem:[#allocation3 + $0xb0] sm:$0xff] %vm204, %v2531
      %2564 = vst.msk [vmem:[#allocation3 + $0xb8] sm:$0xff] %vm204, %v2532
      %2565 = vst.msk [vmem:[#allocation3 + $0xc0] sm:$0xff] %vm204, %v2533
      %2566 = vst.msk [vmem:[#allocation3 + $0xc8] sm:$0xff] %vm204, %v2534
      %2567 = vst.msk [vmem:[#allocation3 + $0xd0] sm:$0xff] %vm204, %v2535
      %2568 = vst.msk [vmem:[#allocation3 + $0xd8] sm:$0xff] %vm204, %v2536
      %2569 = vst.msk [vmem:[#allocation3 + $0xe0] sm:$0xff] %vm204, %v2537
      %2570 = vst.msk [vmem:[#allocation3 + $0xe8] sm:$0xff] %vm204, %v2538
      %2571 = vst.msk [vmem:[#allocation3 + $0xf0] sm:$0xff] %vm204, %v2539
      %2572 = vst.msk [vmem:[#allocation3 + $0xf8] sm:$0xff] %vm204, %v2540
      %v2573 = vld [vmem:[#allocation3] sm:$0xff]
      %v2574 = vld [vmem:[#allocation3 + $0x8] sm:$0xff]
      %v2575 = vld [vmem:[#allocation3 + $0x10] sm:$0xff]
      %v2576 = vld [vmem:[#allocation3 + $0x18] sm:$0xff]
      %v2577 = vld [vmem:[#allocation3 + $0x20] sm:$0xff]
      %v2578 = vld [vmem:[#allocation3 + $0x28] sm:$0xff]
      %v2579 = vld [vmem:[#allocation3 + $0x30] sm:$0xff]
      %v2580 = vld [vmem:[#allocation3 + $0x38] sm:$0xff]
      %v2581 = vld [vmem:[#allocation3 + $0x40] sm:$0xff]
      %v2582 = vld [vmem:[#allocation3 + $0x48] sm:$0xff]
      %v2583 = vld [vmem:[#allocation3 + $0x50] sm:$0xff]
      %v2584 = vld [vmem:[#allocation3 + $0x58] sm:$0xff]
      %v2585 = vld [vmem:[#allocation3 + $0x60] sm:$0xff]
      %v2586 = vld [vmem:[#allocation3 + $0x68] sm:$0xff]
      %v2587 = vld [vmem:[#allocation3 + $0x70] sm:$0xff]
      %v2588 = vld [vmem:[#allocation3 + $0x78] sm:$0xff]
      %v2589 = vld [vmem:[#allocation3 + $0x80] sm:$0xff]
      %v2590 = vld [vmem:[#allocation3 + $0x88] sm:$0xff]
      %v2591 = vld [vmem:[#allocation3 + $0x90] sm:$0xff]
      %v2592 = vld [vmem:[#allocation3 + $0x98] sm:$0xff]
      %v2593 = vld [vmem:[#allocation3 + $0xa0] sm:$0xff]
      %v2594 = vld [vmem:[#allocation3 + $0xa8] sm:$0xff]
      %v2595 = vld [vmem:[#allocation3 + $0xb0] sm:$0xff]
      %v2596 = vld [vmem:[#allocation3 + $0xb8] sm:$0xff]
      %v2597 = vld [vmem:[#allocation3 + $0xc0] sm:$0xff]
      %v2598 = vld [vmem:[#allocation3 + $0xc8] sm:$0xff]
      %v2599 = vld [vmem:[#allocation3 + $0xd0] sm:$0xff]
      %v2600 = vld [vmem:[#allocation3 + $0xd8] sm:$0xff]
      %v2601 = vld [vmem:[#allocation3 + $0xe0] sm:$0xff]
      %v2602 = vld [vmem:[#allocation3 + $0xe8] sm:$0xff]
      %v2603 = vld [vmem:[#allocation3 + $0xf0] sm:$0xff]
      %v2604 = vld [vmem:[#allocation3 + $0xf8] sm:$0xff]
      %v2605 = vsel %vm204, %v2573, 0.0
      %v2606 = vsel %vm204, %v2574, 0.0
      %v2607 = vadd.f32 %v2605, %v2606
      %v2608 = vsel %vm204, %v2575, 0.0
      %v2609 = vadd.f32 %v2607, %v2608
      %v2610 = vsel %vm204, %v2576, 0.0
      %v2611 = vadd.f32 %v2609, %v2610
      %v2612 = vsel %vm204, %v2577, 0.0
      %v2613 = vadd.f32 %v2611, %v2612
      %v2614 = vsel %vm204, %v2578, 0.0
      %v2615 = vadd.f32 %v2613, %v2614
      %v2616 = vsel %vm204, %v2579, 0.0
      %v2617 = vadd.f32 %v2615, %v2616
      %v2618 = vsel %vm204, %v2580, 0.0
      %v2619 = vadd.f32 %v2617, %v2618
      %v2620 = vsel %vm204, %v2581, 0.0
      %v2621 = vadd.f32 %v2619, %v2620
      %v2622 = vsel %vm204, %v2582, 0.0
      %v2623 = vadd.f32 %v2621, %v2622
      %v2624 = vsel %vm204, %v2583, 0.0
      %v2625 = vadd.f32 %v2623, %v2624
      %v2626 = vsel %vm204, %v2584, 0.0
      %v2627 = vadd.f32 %v2625, %v2626
      %v2628 = vsel %vm204, %v2585, 0.0
      %v2629 = vadd.f32 %v2627, %v2628
      %v2630 = vsel %vm204, %v2586, 0.0
      %v2631 = vadd.f32 %v2629, %v2630
      %v2632 = vsel %vm204, %v2587, 0.0
      %v2633 = vadd.f32 %v2631, %v2632
      %v2634 = vsel %vm204, %v2588, 0.0
      %v2635 = vadd.f32 %v2633, %v2634
      %v2636 = vsel %vm204, %v2589, 0.0
      %v2637 = vadd.f32 %v2635, %v2636
      %v2638 = vsel %vm204, %v2590, 0.0
      %v2639 = vadd.f32 %v2637, %v2638
      %v2640 = vsel %vm204, %v2591, 0.0
      %v2641 = vadd.f32 %v2639, %v2640
      %v2642 = vsel %vm204, %v2592, 0.0
      %v2643 = vadd.f32 %v2641, %v2642
      %v2644 = vsel %vm204, %v2593, 0.0
      %v2645 = vadd.f32 %v2643, %v2644
      %v2646 = vsel %vm204, %v2594, 0.0
      %v2647 = vadd.f32 %v2645, %v2646
      %v2648 = vsel %vm204, %v2595, 0.0
      %v2649 = vadd.f32 %v2647, %v2648
      %v2650 = vsel %vm204, %v2596, 0.0
      %v2651 = vadd.f32 %v2649, %v2650
      %v2652 = vsel %vm204, %v2597, 0.0
      %v2653 = vadd.f32 %v2651, %v2652
      %v2654 = vsel %vm204, %v2598, 0.0
      %v2655 = vadd.f32 %v2653, %v2654
      %v2656 = vsel %vm204, %v2599, 0.0
      %v2657 = vadd.f32 %v2655, %v2656
      %v2658 = vsel %vm204, %v2600, 0.0
      %v2659 = vadd.f32 %v2657, %v2658
      %v2660 = vsel %vm204, %v2601, 0.0
      %v2661 = vadd.f32 %v2659, %v2660
      %v2662 = vsel %vm204, %v2602, 0.0
      %v2663 = vadd.f32 %v2661, %v2662
      %v2664 = vsel %vm204, %v2603, 0.0
      %v2665 = vadd.f32 %v2663, %v2664
      %v2666 = vsel %vm204, %v2604, 0.0
      %v2667 = vadd.f32 %v2665, %v2666
      %v2668 = vrot.slane %v2667, 4
      %v2669 = vadd.f32 %v2667, %v2668
      %v2670 = vrot.slane %v2669, 2
      %v2671 = vadd.f32 %v2669, %v2670
      %v2672 = vrot.slane %v2671, 1
      %v2673 = vadd.f32 %v2671, %v2672
      %v2674 = vmul.f32 %v2673, 0.00390625
      %v2675 = vmul.f32 %v2573, %v2573
      %v2676 = vmul.f32 %v2574, %v2574
      %v2677 = vmul.f32 %v2575, %v2575
      %v2678 = vmul.f32 %v2576, %v2576
      %v2679 = vmul.f32 %v2577, %v2577
      %v2680 = vmul.f32 %v2578, %v2578
      %v2681 = vmul.f32 %v2579, %v2579
      %v2682 = vmul.f32 %v2580, %v2580
      %v2683 = vmul.f32 %v2581, %v2581
      %v2684 = vmul.f32 %v2582, %v2582
      %v2685 = vmul.f32 %v2583, %v2583
      %v2686 = vmul.f32 %v2584, %v2584
      %v2687 = vmul.f32 %v2585, %v2585
      %v2688 = vmul.f32 %v2586, %v2586
      %v2689 = vmul.f32 %v2587, %v2587
      %v2690 = vmul.f32 %v2588, %v2588
      %v2691 = vmul.f32 %v2589, %v2589
      %v2692 = vmul.f32 %v2590, %v2590
      %v2693 = vmul.f32 %v2591, %v2591
      %v2694 = vmul.f32 %v2592, %v2592
      %v2695 = vmul.f32 %v2593, %v2593
      %v2696 = vmul.f32 %v2594, %v2594
      %v2697 = vmul.f32 %v2595, %v2595
      %v2698 = vmul.f32 %v2596, %v2596
      %v2699 = vmul.f32 %v2597, %v2597
      %v2700 = vmul.f32 %v2598, %v2598
      %v2701 = vmul.f32 %v2599, %v2599
      %v2702 = vmul.f32 %v2600, %v2600
      %v2703 = vmul.f32 %v2601, %v2601
      %v2704 = vmul.f32 %v2602, %v2602
      %v2705 = vmul.f32 %v2603, %v2603
      %v2706 = vmul.f32 %v2604, %v2604
      %v2707 = vsel %vm204, %v2675, 0.0
      %v2708 = vsel %vm204, %v2676, 0.0
      %v2709 = vadd.f32 %v2707, %v2708
      %v2710 = vsel %vm204, %v2677, 0.0
      %v2711 = vadd.f32 %v2709, %v2710
      %v2712 = vsel %vm204, %v2678, 0.0
      %v2713 = vadd.f32 %v2711, %v2712
      %v2714 = vsel %vm204, %v2679, 0.0
      %v2715 = vadd.f32 %v2713, %v2714
      %v2716 = vsel %vm204, %v2680, 0.0
      %v2717 = vadd.f32 %v2715, %v2716
      %v2718 = vsel %vm204, %v2681, 0.0
      %v2719 = vadd.f32 %v2717, %v2718
      %v2720 = vsel %vm204, %v2682, 0.0
      %v2721 = vadd.f32 %v2719, %v2720
      %v2722 = vsel %vm204, %v2683, 0.0
      %v2723 = vadd.f32 %v2721, %v2722
      %v2724 = vsel %vm204, %v2684, 0.0
      %v2725 = vadd.f32 %v2723, %v2724
      %v2726 = vsel %vm204, %v2685, 0.0
      %v2727 = vadd.f32 %v2725, %v2726
      %v2728 = vsel %vm204, %v2686, 0.0
      %v2729 = vadd.f32 %v2727, %v2728
      %v2730 = vsel %vm204, %v2687, 0.0
      %v2731 = vadd.f32 %v2729, %v2730
      %v2732 = vsel %vm204, %v2688, 0.0
      %v2733 = vadd.f32 %v2731, %v2732
      %v2734 = vsel %vm204, %v2689, 0.0
      %v2735 = vadd.f32 %v2733, %v2734
      %v2736 = vsel %vm204, %v2690, 0.0
      %v2737 = vadd.f32 %v2735, %v2736
      %v2738 = vsel %vm204, %v2691, 0.0
      %v2739 = vadd.f32 %v2737, %v2738
      %v2740 = vsel %vm204, %v2692, 0.0
      %v2741 = vadd.f32 %v2739, %v2740
      %v2742 = vsel %vm204, %v2693, 0.0
      %v2743 = vadd.f32 %v2741, %v2742
      %v2744 = vsel %vm204, %v2694, 0.0
      %v2745 = vadd.f32 %v2743, %v2744
      %v2746 = vsel %vm204, %v2695, 0.0
      %v2747 = vadd.f32 %v2745, %v2746
      %v2748 = vsel %vm204, %v2696, 0.0
      %v2749 = vadd.f32 %v2747, %v2748
      %v2750 = vsel %vm204, %v2697, 0.0
      %v2751 = vadd.f32 %v2749, %v2750
      %v2752 = vsel %vm204, %v2698, 0.0
      %v2753 = vadd.f32 %v2751, %v2752
      %v2754 = vsel %vm204, %v2699, 0.0
      %v2755 = vadd.f32 %v2753, %v2754
      %v2756 = vsel %vm204, %v2700, 0.0
      %v2757 = vadd.f32 %v2755, %v2756
      %v2758 = vsel %vm204, %v2701, 0.0
      %v2759 = vadd.f32 %v2757, %v2758
      %v2760 = vsel %vm204, %v2702, 0.0
      %v2761 = vadd.f32 %v2759, %v2760
      %v2762 = vsel %vm204, %v2703, 0.0
      %v2763 = vadd.f32 %v2761, %v2762
      %v2764 = vsel %vm204, %v2704, 0.0
      %v2765 = vadd.f32 %v2763, %v2764
      %v2766 = vsel %vm204, %v2705, 0.0
      %v2767 = vadd.f32 %v2765, %v2766
      %v2768 = vsel %vm204, %v2706, 0.0
      %v2769 = vadd.f32 %v2767, %v2768
      %v2770 = vrot.slane %v2769, 4
      %v2771 = vadd.f32 %v2769, %v2770
      %v2772 = vrot.slane %v2771, 2
      %v2773 = vadd.f32 %v2771, %v2772
      %v2774 = vrot.slane %v2773, 1
      %v2775 = vadd.f32 %v2773, %v2774
      %v2776 = vmul.f32 %v2775, 0.00390625
      %v2777 = vmul.f32 %v2674, %v2674
      %v2778 = vsub.f32 %v2776, %v2777
      %v2779 = vsub.f32 %v2573, %v2674
      %v2780 = vsub.f32 %v2574, %v2674
      %v2781 = vsub.f32 %v2575, %v2674
      %v2782 = vsub.f32 %v2576, %v2674
      %v2783 = vsub.f32 %v2577, %v2674
      %v2784 = vsub.f32 %v2578, %v2674
      %v2785 = vsub.f32 %v2579, %v2674
      %v2786 = vsub.f32 %v2580, %v2674
      %v2787 = vsub.f32 %v2581, %v2674
      %v2788 = vsub.f32 %v2582, %v2674
      %v2789 = vsub.f32 %v2583, %v2674
      %v2790 = vsub.f32 %v2584, %v2674
      %v2791 = vsub.f32 %v2585, %v2674
      %v2792 = vsub.f32 %v2586, %v2674
      %v2793 = vsub.f32 %v2587, %v2674
      %v2794 = vsub.f32 %v2588, %v2674
      %v2795 = vsub.f32 %v2589, %v2674
      %v2796 = vsub.f32 %v2590, %v2674
      %v2797 = vsub.f32 %v2591, %v2674
      %v2798 = vsub.f32 %v2592, %v2674
      %v2799 = vsub.f32 %v2593, %v2674
      %v2800 = vsub.f32 %v2594, %v2674
      %v2801 = vsub.f32 %v2595, %v2674
      %v2802 = vsub.f32 %v2596, %v2674
      %v2803 = vsub.f32 %v2597, %v2674
      %v2804 = vsub.f32 %v2598, %v2674
      %v2805 = vsub.f32 %v2599, %v2674
      %v2806 = vsub.f32 %v2600, %v2674
      %v2807 = vsub.f32 %v2601, %v2674
      %v2808 = vsub.f32 %v2602, %v2674
      %v2809 = vsub.f32 %v2603, %v2674
      %v2810 = vsub.f32 %v2604, %v2674
      %v2811 = vadd.f32 %v2778, 1e-05
      %v2812 = vrsqrt.pop %v2811
      %v2813 = vmul.f32 %v2779, %v2812
      %v2814 = vmul.f32 %v2780, %v2812
      %v2815 = vmul.f32 %v2781, %v2812
      %v2816 = vmul.f32 %v2782, %v2812
      %v2817 = vmul.f32 %v2783, %v2812
      %v2818 = vmul.f32 %v2784, %v2812
      %v2819 = vmul.f32 %v2785, %v2812
      %v2820 = vmul.f32 %v2786, %v2812
      %v2821 = vmul.f32 %v2787, %v2812
      %v2822 = vmul.f32 %v2788, %v2812
      %v2823 = vmul.f32 %v2789, %v2812
      %v2824 = vmul.f32 %v2790, %v2812
      %v2825 = vmul.f32 %v2791, %v2812
      %v2826 = vmul.f32 %v2792, %v2812
      %v2827 = vmul.f32 %v2793, %v2812
      %v2828 = vmul.f32 %v2794, %v2812
      %v2829 = vmul.f32 %v2795, %v2812
      %v2830 = vmul.f32 %v2796, %v2812
      %v2831 = vmul.f32 %v2797, %v2812
      %v2832 = vmul.f32 %v2798, %v2812
      %v2833 = vmul.f32 %v2799, %v2812
      %v2834 = vmul.f32 %v2800, %v2812
      %v2835 = vmul.f32 %v2801, %v2812
      %v2836 = vmul.f32 %v2802, %v2812
      %v2837 = vmul.f32 %v2803, %v2812
      %v2838 = vmul.f32 %v2804, %v2812
      %v2839 = vmul.f32 %v2805, %v2812
      %v2840 = vmul.f32 %v2806, %v2812
      %v2841 = vmul.f32 %v2807, %v2812
      %v2842 = vmul.f32 %v2808, %v2812
      %v2843 = vmul.f32 %v2809, %v2812
      %v2844 = vmul.f32 %v2810, %v2812
      %v2845 = vmax.f32 %v2813, 0.0
      %v2846 = vmax.f32 %v2814, 0.0
      %v2847 = vmax.f32 %v2815, 0.0
      %v2848 = vmax.f32 %v2816, 0.0
      %v2849 = vmax.f32 %v2817, 0.0
      %v2850 = vmax.f32 %v2818, 0.0
      %v2851 = vmax.f32 %v2819, 0.0
      %v2852 = vmax.f32 %v2820, 0.0
      %v2853 = vmax.f32 %v2821, 0.0
      %v2854 = vmax.f32 %v2822, 0.0
      %v2855 = vmax.f32 %v2823, 0.0
      %v2856 = vmax.f32 %v2824, 0.0
      %v2857 = vmax.f32 %v2825, 0.0
      %v2858 = vmax.f32 %v2826, 0.0
      %v2859 = vmax.f32 %v2827, 0.0
      %v2860 = vmax.f32 %v2828, 0.0
      %v2861 = vmax.f32 %v2829, 0.0
      %v2862 = vmax.f32 %v2830, 0.0
      %v2863 = vmax.f32 %v2831, 0.0
      %v2864 = vmax.f32 %v2832, 0.0
      %v2865 = vmax.f32 %v2833, 0.0
      %v2866 = vmax.f32 %v2834, 0.0
      %v2867 = vmax.f32 %v2835, 0.0
      %v2868 = vmax.f32 %v2836, 0.0
      %v2869 = vmax.f32 %v2837, 0.0
      %v2870 = vmax.f32 %v2838, 0.0
      %v2871 = vmax.f32 %v2839, 0.0
      %v2872 = vmax.f32 %v2840, 0.0
      %v2873 = vmax.f32 %v2841, 0.0
      %v2874 = vmax.f32 %v2842, 0.0
      %v2875 = vmax.f32 %v2843, 0.0
      %v2876 = vmax.f32 %v2844, 0.0
      %2877 = vst.msk [vmem:[%s203] sm:$0xff] %vm204, %v2845
      %2878 = vst.msk [vmem:[%s203 + $0x8] sm:$0xff] %vm204, %v2846
      %2879 = vst.msk [vmem:[%s203 + $0x10] sm:$0xff] %vm204, %v2847
      %2880 = vst.msk [vmem:[%s203 + $0x18] sm:$0xff] %vm204, %v2848
      %2881 = vst.msk [vmem:[%s203 + $0x20] sm:$0xff] %vm204, %v2849
      %2882 = vst.msk [vmem:[%s203 + $0x28] sm:$0xff] %vm204, %v2850
      %2883 = vst.msk [vmem:[%s203 + $0x30] sm:$0xff] %vm204, %v2851
      %2884 = vst.msk [vmem:[%s203 + $0x38] sm:$0xff] %vm204, %v2852
      %2885 = vst.msk [vmem:[%s203 + $0x40] sm:$0xff] %vm204, %v2853
      %2886 = vst.msk [vmem:[%s203 + $0x48] sm:$0xff] %vm204, %v2854
      %2887 = vst.msk [vmem:[%s203 + $0x50] sm:$0xff] %vm204, %v2855
      %2888 = vst.msk [vmem:[%s203 + $0x58] sm:$0xff] %vm204, %v2856
      %2889 = vst.msk [vmem:[%s203 + $0x60] sm:$0xff] %vm204, %v2857
      %2890 = vst.msk [vmem:[%s203 + $0x68] sm:$0xff] %vm204, %v2858
      %2891 = vst.msk [vmem:[%s203 + $0x70] sm:$0xff] %vm204, %v2859
      %2892 = vst.msk [vmem:[%s203 + $0x78] sm:$0xff] %vm204, %v2860
      %2893 = vst.msk [vmem:[%s203 + $0x80] sm:$0xff] %vm204, %v2861
      %2894 = vst.msk [vmem:[%s203 + $0x88] sm:$0xff] %vm204, %v2862
      %2895 = vst.msk [vmem:[%s203 + $0x90] sm:$0xff] %vm204, %v2863
      %2896 = vst.msk [vmem:[%s203 + $0x98] sm:$0xff] %vm204, %v2864
      %2897 = vst.msk [vmem:[%s203 + $0xa0] sm:$0xff] %vm204, %v2865
      %2898 = vst.msk [vmem:[%s203 + $0xa8] sm:$0xff] %vm204, %v2866
      %2899 = vst.msk [vmem:[%s203 + $0xb0] sm:$0xff] %vm204, %v2867
      %2900 = vst.msk [vmem:[%s203 + $0xb8] sm:$0xff] %vm204, %v2868
      %2901 = vst.msk [vmem:[%s203 + $0xc0] sm:$0xff] %vm204, %v2869
      %2902 = vst.msk [vmem:[%s203 + $0xc8] sm:$0xff] %vm204, %v2870
      %2903 = vst.msk [vmem:[%s203 + $0xd0] sm:$0xff] %vm204, %v2871
      %2904 = vst.msk [vmem:[%s203 + $0xd8] sm:$0xff] %vm204, %v2872
      %2905 = vst.msk [vmem:[%s203 + $0xe0] sm:$0xff] %vm204, %v2873
      %2906 = vst.msk [vmem:[%s203 + $0xe8] sm:$0xff] %vm204, %v2874
      %2907 = vst.msk [vmem:[%s203 + $0xf0] sm:$0xff] %vm204, %v2875
      %2908 = vst.msk [vmem:[%s203 + $0xf8] sm:$0xff] %vm204, %v2876
      %2909 = vst.msk [vmem:[#allocation2] sm:$0xff] %vm204, %v2847
      %2910 = vst.msk [vmem:[#allocation2 + $0x8] sm:$0xff] %vm204, %v2848
      %2911 = vst.msk [vmem:[%s239] sm:$0xff] %vm204, %v2873
      %2912 = vst.msk [vmem:[%s239 + $0x8] sm:$0xff] %vm204, %v2874
      %v2913 = vld [vmem:[#allocation2] sm:$0xff]
      %v2914 = vld [vmem:[#allocation2 + $0x8] sm:$0xff]
      %v2915 = vld [vmem:[#allocation2 + $0x10] sm:$0xff]
      %v2916 = vld [vmem:[#allocation2 + $0x18] sm:$0xff]
      %v2917 = vld [vmem:[#allocation2 + $0x20] sm:$0xff]
      %v2918 = vld [vmem:[#allocation2 + $0x28] sm:$0xff]
      %v2919 = vld [vmem:[#allocation2 + $0x30] sm:$0xff]
      %v2920 = vld [vmem:[#allocation2 + $0x38] sm:$0xff]
      %v2921 = vld [vmem:[#allocation2 + $0x40] sm:$0xff]
      %v2922 = vld [vmem:[#allocation2 + $0x48] sm:$0xff]
      %v2923 = vld [vmem:[#allocation2 + $0x50] sm:$0xff]
      %v2924 = vld [vmem:[#allocation2 + $0x58] sm:$0xff]
      %v2925 = vld [vmem:[#allocation2 + $0x60] sm:$0xff]
      %v2926 = vld [vmem:[#allocation2 + $0x68] sm:$0xff]
      %v2927 = vld [vmem:[#allocation2 + $0x70] sm:$0xff]
      %v2928 = vld [vmem:[#allocation2 + $0x78] sm:$0xff]
      %v2929 = vld [vmem:[#allocation2 + $0x80] sm:$0xff]
      %v2930 = vld [vmem:[#allocation2 + $0x88] sm:$0xff]
      %v2931 = vld [vmem:[#allocation2 + $0x90] sm:$0xff]
      %v2932 = vld [vmem:[#allocation2 + $0x98] sm:$0xff]
      %v2933 = vld [vmem:[#allocation2 + $0xa0] sm:$0xff]
      %v2934 = vld [vmem:[#allocation2 + $0xa8] sm:$0xff]
      %v2935 = vld [vmem:[#allocation2 + $0xb0] sm:$0xff]
      %v2936 = vld [vmem:[#allocation2 + $0xb8] sm:$0xff]
      %v2937 = vld [vmem:[#allocation2 + $0xc0] sm:$0xff]
      %v2938 = vld [vmem:[#allocation2 + $0xc8] sm:$0xff]
      %v2939 = vld [vmem:[#allocation2 + $0xd0] sm:$0xff]
      %v2940 = vld [vmem:[#allocation2 + $0xd8] sm:$0xff]
      %v2941 = vld [vmem:[#allocation2 + $0xe0] sm:$0xff]
      %v2942 = vld [vmem:[#allocation2 + $0xe8] sm:$0xff]
      %v2943 = vld [vmem:[#allocation2 + $0xf0] sm:$0xff]
      %v2944 = vld [vmem:[#allocation2 + $0xf8] sm:$0xff]
      %v2945 = vld [vmem:[#allocation2 + $0x100] sm:$0xff]
      %v2946 = vld [vmem:[#allocation2 + $0x108] sm:$0xff]
      %v2947 = vld [vmem:[#allocation2 + $0x110] sm:$0xff]
      %v2948 = vld [vmem:[#allocation2 + $0x118] sm:$0xff]
      %v2967 = vrot.slane %v2913, 1
      %v2968 = vrot.slane %v2915, 1
      %v2969 = vrot.slane %v2917, 1
      %v2970 = vrot.slane %v2919, 1
      %v2971 = vrot.slane %v2921, 1
      %v2972 = vrot.slane %v2923, 1
      %v2973 = vrot.slane %v2925, 1
      %v2974 = vrot.slane %v2927, 1
      %v2975 = vrot.slane %v2929, 1
      %v2976 = vrot.slane %v2931, 1
      %v2977 = vrot.slane %v2933, 1
      %v2978 = vrot.slane %v2935, 1
      %v2979 = vrot.slane %v2937, 1
      %v2980 = vrot.slane %v2939, 1
      %v2981 = vrot.slane %v2941, 1
      %v2982 = vrot.slane %v2943, 1
      %v2983 = vrot.slane %v2945, 1
      %v2984 = vrot.slane %v2947, 1
      %v3021 = vrot.slane %v2913, 7
      %v3022 = vrot.slane %v2914, 7
      %v3023 = vsel %vm350, %v3021, %v3022
      %v3024 = vrot.slane %v2915, 7
      %v3025 = vrot.slane %v2916, 7
      %v3026 = vsel %vm350, %v3024, %v3025
      %v3027 = vrot.slane %v2917, 7
      %v3028 = vrot.slane %v2918, 7
      %v3029 = vsel %vm350, %v3027, %v3028
      %v3030 = vrot.slane %v2919, 7
      %v3031 = vrot.slane %v2920, 7
      %v3032 = vsel %vm350, %v3030, %v3031
      %v3033 = vrot.slane %v2921, 7
      %v3034 = vrot.slane %v2922, 7
      %v3035 = vsel %vm350, %v3033, %v3034
      %v3036 = vrot.slane %v2923, 7
      %v3037 = vrot.slane %v2924, 7
      %v3038 = vsel %vm350, %v3036, %v3037
      %v3039 = vrot.slane %v2925, 7
      %v3040 = vrot.slane %v2926, 7
      %v3041 = vsel %vm350, %v3039, %v3040
      %v3042 = vrot.slane %v2927, 7
      %v3043 = vrot.slane %v2928, 7
      %v3044 = vsel %vm350, %v3042, %v3043
      %v3045 = vrot.slane %v2929, 7
      %v3046 = vrot.slane %v2930, 7
      %v3047 = vsel %vm350, %v3045, %v3046
      %v3048 = vrot.slane %v2931, 7
      %v3049 = vrot.slane %v2932, 7
      %v3050 = vsel %vm350, %v3048, %v3049
      %v3051 = vrot.slane %v2933, 7
      %v3052 = vrot.slane %v2934, 7
      %v3053 = vsel %vm350, %v3051, %v3052
      %v3054 = vrot.slane %v2935, 7
      %v3055 = vrot.slane %v2936, 7
      %v3056 = vsel %vm350, %v3054, %v3055
      %v3057 = vrot.slane %v2937, 7
      %v3058 = vrot.slane %v2938, 7
      %v3059 = vsel %vm350, %v3057, %v3058
      %v3060 = vrot.slane %v2939, 7
      %v3061 = vrot.slane %v2940, 7
      %v3062 = vsel %vm350, %v3060, %v3061
      %v3063 = vrot.slane %v2941, 7
      %v3064 = vrot.slane %v2942, 7
      %v3065 = vsel %vm350, %v3063, %v3064
      %v3066 = vrot.slane %v2943, 7
      %v3067 = vrot.slane %v2944, 7
      %v3068 = vsel %vm350, %v3066, %v3067
      %v3069 = vrot.slane %v2945, 7
      %v3070 = vrot.slane %v2946, 7
      %v3071 = vsel %vm350, %v3069, %v3070
      %v3072 = vrot.slane %v2947, 7
      %v3073 = vrot.slane %v2948, 7
      %v3074 = vsel %vm350, %v3072, %v3073
      %v3109 = vsel %vm350, %v2967, %v3021
      %v3110 = vsel %vm350, %v2968, %v3024
      %v3111 = vsel %vm350, %v2969, %v3027
      %v3112 = vsel %vm350, %v2970, %v3030
      %v3113 = vsel %vm350, %v2971, %v3033
      %v3114 = vsel %vm350, %v2972, %v3036
      %v3115 = vsel %vm350, %v2973, %v3039
      %v3116 = vsel %vm350, %v2974, %v3042
      %v3117 = vsel %vm350, %v2975, %v3045
      %v3118 = vsel %vm350, %v2976, %v3048
      %v3119 = vsel %vm350, %v2977, %v3051
      %v3120 = vsel %vm350, %v2978, %v3054
      %v3121 = vsel %vm350, %v2979, %v3057
      %v3122 = vsel %vm350, %v2980, %v3060
      %v3123 = vsel %vm350, %v2981, %v3063
      %v3124 = vsel %vm350, %v2982, %v3066
      %v3125 = vsel %vm350, %v2983, %v3069
      %v3126 = vsel %vm350, %v2984, %v3072
      %3143 = vrot.lane.b32.xlu0 %v3110, 4
      %v3144 = vpop.permute.xlu0 %3143
      %3145 = vrot.lane.b32.xlu0 %v3026, 4
      %v3146 = vpop.permute.xlu0 %3145
      %3147 = vrot.lane.b32.xlu0 %v3111, 4
      %v3148 = vpop.permute.xlu0 %3147
      %3149 = vrot.lane.b32.xlu0 %v3029, 4
      %v3150 = vpop.permute.xlu0 %3149
      %3151 = vrot.lane.b32.xlu0 %v3112, 4
      %v3152 = vpop.permute.xlu0 %3151
      %3153 = vrot.lane.b32.xlu0 %v3032, 4
      %v3154 = vpop.permute.xlu0 %3153
      %3155 = vrot.lane.b32.xlu0 %v3113, 4
      %v3156 = vpop.permute.xlu0 %3155
      %3157 = vrot.lane.b32.xlu0 %v3035, 4
      %v3158 = vpop.permute.xlu0 %3157
      %3159 = vrot.lane.b32.xlu0 %v3114, 4
      %v3160 = vpop.permute.xlu0 %3159
      %3161 = vrot.lane.b32.xlu0 %v3038, 4
      %v3162 = vpop.permute.xlu0 %3161
      %3163 = vrot.lane.b32.xlu0 %v3115, 4
      %v3164 = vpop.permute.xlu0 %3163
      %3165 = vrot.lane.b32.xlu0 %v3041, 4
      %v3166 = vpop.permute.xlu0 %3165
      %3167 = vrot.lane.b32.xlu0 %v3116, 4
      %v3168 = vpop.permute.xlu0 %3167
      %3169 = vrot.lane.b32.xlu0 %v3044, 4
      %v3170 = vpop.permute.xlu0 %3169
      %3171 = vrot.lane.b32.xlu0 %v3117, 4
      %v3172 = vpop.permute.xlu0 %3171
      %3173 = vrot.lane.b32.xlu0 %v3047, 4
      %v3174 = vpop.permute.xlu0 %3173
      %3175 = vrot.lane.b32.xlu0 %v3118, 4
      %v3176 = vpop.permute.xlu0 %3175
      %3177 = vrot.lane.b32.xlu0 %v3050, 4
      %v3178 = vpop.permute.xlu0 %3177
      %3179 = vrot.lane.b32.xlu0 %v3119, 4
      %v3180 = vpop.permute.xlu0 %3179
      %3181 = vrot.lane.b32.xlu0 %v3053, 4
      %v3182 = vpop.permute.xlu0 %3181
      %3183 = vrot.lane.b32.xlu0 %v3120, 4
      %v3184 = vpop.permute.xlu0 %3183
      %3185 = vrot.lane.b32.xlu0 %v3056, 4
      %v3186 = vpop.permute.xlu0 %3185
      %3187 = vrot.lane.b32.xlu0 %v3121, 4
      %v3188 = vpop.permute.xlu0 %3187
      %3189 = vrot.lane.b32.xlu0 %v3059, 4
      %v3190 = vpop.permute.xlu0 %3189
      %3191 = vrot.lane.b32.xlu0 %v3122, 4
      %v3192 = vpop.permute.xlu0 %3191
      %3193 = vrot.lane.b32.xlu0 %v3062, 4
      %v3194 = vpop.permute.xlu0 %3193
      %3195 = vrot.lane.b32.xlu0 %v3123, 4
      %v3196 = vpop.permute.xlu0 %3195
      %3197 = vrot.lane.b32.xlu0 %v3065, 4
      %v3198 = vpop.permute.xlu0 %3197
      %3199 = vrot.lane.b32.xlu0 %v3124, 4
      %v3200 = vpop.permute.xlu0 %3199
      %3201 = vrot.lane.b32.xlu0 %v3068, 4
      %v3202 = vpop.permute.xlu0 %3201
      %3203 = vrot.lane.b32.xlu0 %v3125, 4
      %v3204 = vpop.permute.xlu0 %3203
      %3205 = vrot.lane.b32.xlu0 %v3071, 4
      %v3206 = vpop.permute.xlu0 %3205
      %3240 = vrot.lane.b32.xlu0 %v3111, 8
      %v3241 = vpop.permute.xlu0 %3240
      %3242 = vrot.lane.b32.xlu0 %v3029, 8
      %v3243 = vpop.permute.xlu0 %3242
      %3244 = vrot.lane.b32.xlu0 %v3112, 8
      %v3245 = vpop.permute.xlu0 %3244
      %3246 = vrot.lane.b32.xlu0 %v3032, 8
      %v3247 = vpop.permute.xlu0 %3246
      %3248 = vrot.lane.b32.xlu0 %v3113, 8
      %v3249 = vpop.permute.xlu0 %3248
      %3250 = vrot.lane.b32.xlu0 %v3035, 8
      %v3251 = vpop.permute.xlu0 %3250
      %3252 = vrot.lane.b32.xlu0 %v3114, 8
      %v3253 = vpop.permute.xlu0 %3252
      %3254 = vrot.lane.b32.xlu0 %v3038, 8
      %v3255 = vpop.permute.xlu0 %3254
      %3256 = vrot.lane.b32.xlu0 %v3115, 8
      %v3257 = vpop.permute.xlu0 %3256
      %3258 = vrot.lane.b32.xlu0 %v3041, 8
      %v3259 = vpop.permute.xlu0 %3258
      %3260 = vrot.lane.b32.xlu0 %v3116, 8
      %v3261 = vpop.permute.xlu0 %3260
      %3262 = vrot.lane.b32.xlu0 %v3044, 8
      %v3263 = vpop.permute.xlu0 %3262
      %3264 = vrot.lane.b32.xlu0 %v3117, 8
      %v3265 = vpop.permute.xlu0 %3264
      %3266 = vrot.lane.b32.xlu0 %v3047, 8
      %v3267 = vpop.permute.xlu0 %3266
      %3268 = vrot.lane.b32.xlu0 %v3118, 8
      %v3269 = vpop.permute.xlu0 %3268
      %3270 = vrot.lane.b32.xlu0 %v3050, 8
      %v3271 = vpop.permute.xlu0 %3270
      %3272 = vrot.lane.b32.xlu0 %v3119, 8
      %v3273 = vpop.permute.xlu0 %3272
      %3274 = vrot.lane.b32.xlu0 %v3053, 8
      %v3275 = vpop.permute.xlu0 %3274
      %3276 = vrot.lane.b32.xlu0 %v3120, 8
      %v3277 = vpop.permute.xlu0 %3276
      %3278 = vrot.lane.b32.xlu0 %v3056, 8
      %v3279 = vpop.permute.xlu0 %3278
      %3280 = vrot.lane.b32.xlu0 %v3121, 8
      %v3281 = vpop.permute.xlu0 %3280
      %3282 = vrot.lane.b32.xlu0 %v3059, 8
      %v3283 = vpop.permute.xlu0 %3282
      %3284 = vrot.lane.b32.xlu0 %v3122, 8
      %v3285 = vpop.permute.xlu0 %3284
      %3286 = vrot.lane.b32.xlu0 %v3062, 8
      %v3287 = vpop.permute.xlu0 %3286
      %3288 = vrot.lane.b32.xlu0 %v3123, 8
      %v3289 = vpop.permute.xlu0 %3288
      %3290 = vrot.lane.b32.xlu0 %v3065, 8
      %v3291 = vpop.permute.xlu0 %3290
      %3292 = vrot.lane.b32.xlu0 %v3124, 8
      %v3293 = vpop.permute.xlu0 %3292
      %3294 = vrot.lane.b32.xlu0 %v3068, 8
      %v3295 = vpop.permute.xlu0 %3294
      %3296 = vrot.lane.b32.xlu0 %v3125, 8
      %v3297 = vpop.permute.xlu0 %3296
      %3298 = vrot.lane.b32.xlu0 %v3071, 8
      %v3299 = vpop.permute.xlu0 %3298
      %3300 = vrot.lane.b32.xlu0 %v3126, 8
      %v3301 = vpop.permute.xlu0 %3300
      %3302 = vrot.lane.b32.xlu0 %v3074, 8
      %v3303 = vpop.permute.xlu0 %3302
      %v3336 = vsel %vm204, %v3109, %v3144
      %v3337 = vsel %vm204, %v3023, %v3146
      %v3338 = vsel %vm204, %v3110, %v3148
      %v3339 = vsel %vm204, %v3026, %v3150
      %v3340 = vsel %vm204, %v3111, %v3152
      %v3341 = vsel %vm204, %v3029, %v3154
      %v3342 = vsel %vm204, %v3112, %v3156
      %v3343 = vsel %vm204, %v3032, %v3158
      %v3344 = vsel %vm204, %v3113, %v3160
      %v3345 = vsel %vm204, %v3035, %v3162
      %v3346 = vsel %vm204, %v3114, %v3164
      %v3347 = vsel %vm204, %v3038, %v3166
      %v3348 = vsel %vm204, %v3115, %v3168
      %v3349 = vsel %vm204, %v3041, %v3170
      %v3350 = vsel %vm204, %v3116, %v3172
      %v3351 = vsel %vm204, %v3044, %v3174
      %v3352 = vsel %vm204, %v3117, %v3176
      %v3353 = vsel %vm204, %v3047, %v3178
      %v3354 = vsel %vm204, %v3118, %v3180
      %v3355 = vsel %vm204, %v3050, %v3182
      %v3356 = vsel %vm204, %v3119, %v3184
      %v3357 = vsel %vm204, %v3053, %v3186
      %v3358 = vsel %vm204, %v3120, %v3188
      %v3359 = vsel %vm204, %v3056, %v3190
      %v3360 = vsel %vm204, %v3121, %v3192
      %v3361 = vsel %vm204, %v3059, %v3194
      %v3362 = vsel %vm204, %v3122, %v3196
      %v3363 = vsel %vm204, %v3062, %v3198
      %v3364 = vsel %vm204, %v3123, %v3200
      %v3365 = vsel %vm204, %v3065, %v3202
      %v3366 = vsel %vm204, %v3124, %v3204
      %v3367 = vsel %vm204, %v3068, %v3206
      %v3368 = vsel %vm698, %v3336, %v3241
      %v3369 = vsel %vm698, %v3337, %v3243
      %v3370 = vsel %vm698, %v3338, %v3245
      %v3371 = vsel %vm698, %v3339, %v3247
      %v3372 = vsel %vm698, %v3340, %v3249
      %v3373 = vsel %vm698, %v3341, %v3251
      %v3374 = vsel %vm698, %v3342, %v3253
      %v3375 = vsel %vm698, %v3343, %v3255
      %v3376 = vsel %vm698, %v3344, %v3257
      %v3377 = vsel %vm698, %v3345, %v3259
      %v3378 = vsel %vm698, %v3346, %v3261
      %v3379 = vsel %vm698, %v3347, %v3263
      %v3380 = vsel %vm698, %v3348, %v3265
      %v3381 = vsel %vm698, %v3349, %v3267
      %v3382 = vsel %vm698, %v3350, %v3269
      %v3383 = vsel %vm698, %v3351, %v3271
      %v3384 = vsel %vm698, %v3352, %v3273
      %v3385 = vsel %vm698, %v3353, %v3275
      %v3386 = vsel %vm698, %v3354, %v3277
      %v3387 = vsel %vm698, %v3355, %v3279
      %v3388 = vsel %vm698, %v3356, %v3281
      %v3389 = vsel %vm698, %v3357, %v3283
      %v3390 = vsel %vm698, %v3358, %v3285
      %v3391 = vsel %vm698, %v3359, %v3287
      %v3392 = vsel %vm698, %v3360, %v3289
      %v3393 = vsel %vm698, %v3361, %v3291
      %v3394 = vsel %vm698, %v3362, %v3293
      %v3395 = vsel %vm698, %v3363, %v3295
      %v3396 = vsel %vm698, %v3364, %v3297
      %v3397 = vsel %vm698, %v3365, %v3299
      %v3398 = vsel %vm698, %v3366, %v3301
      %v3399 = vsel %vm698, %v3367, %v3303
      %v3400 = vld [vmem:[%s2] sm:$0xff]
      %v3401 = vld [vmem:[%s2 + $0x8] sm:$0xf]
      %v3403 = vsel %vm733, %v3368, 0
      %v3406 = vsel %vm733, %v3369, 0
      %v3409 = vsel %vm733, %v3370, 0
      %v3412 = vsel %vm733, %v3371, 0
      %v3415 = vsel %vm733, %v3372, 0
      %v3418 = vsel %vm733, %v3373, 0
      %v3421 = vsel %vm733, %v3374, 0
      %v3424 = vsel %vm733, %v3375, 0
      %v3427 = vsel %vm733, %v3376, 0
      %v3430 = vsel %vm733, %v3377, 0
      %v3433 = vsel %vm733, %v3378, 0
      %v3436 = vsel %vm733, %v3379, 0
      %v3439 = vsel %vm733, %v3380, 0
      %v3442 = vsel %vm733, %v3381, 0
      %v3445 = vsel %vm733, %v3382, 0
      %v3448 = vsel %vm733, %v3383, 0
      %v3451 = vsel %vm733, %v3384, 0
      %v3454 = vsel %vm733, %v3385, 0
      %v3457 = vsel %vm733, %v3386, 0
      %v3460 = vsel %vm733, %v3387, 0
      %v3463 = vsel %vm733, %v3388, 0
      %v3466 = vsel %vm733, %v3389, 0
      %v3469 = vsel %vm733, %v3390, 0
      %v3472 = vsel %vm733, %v3391, 0
      %v3475 = vsel %vm733, %v3392, 0
      %v3478 = vsel %vm733, %v3393, 0
      %v3481 = vsel %vm733, %v3394, 0
      %v3484 = vsel %vm733, %v3395, 0
      %v3487 = vsel %vm733, %v3396, 0
      %v3490 = vsel %vm733, %v3397, 0
      %v3493 = vsel %vm733, %v3398, 0
      %v3496 = vsel %vm733, %v3399, 0
      %v3499 = vsel %vm830, %v3401, 0
      %3501 = vmatprep.subr.mxu0 0.0
      %3502 = vmatpush1.msra.mxu0 0.0
      %3503 = vmatprep.subr.mxu0 0.0
      %3504 = vmatpush1.msra.mxu0 0.0
      %3505 = vmatprep.subr.mxu0 0.0
      %3506 = vmatpush1.msra.mxu0 0.0
      %3507 = vmatprep.subr.mxu0 0.0
      %3508 = vmatpush1.msra.mxu0 0.0
      %3509 = vmatprep.subr.mxu0 0.0
      %3510 = vmatpush1.msra.mxu0 0.0
      %3511 = vmatprep.subr.mxu0 0.0
      %3512 = vmatpush1.msra.mxu0 0.0
      %3513 = vmatprep.subr.mxu0 0.0
      %3514 = vmatpush1.msra.mxu0 0.0
      %3515 = vmatprep.subr.mxu0 0.0
      %3516 = vmatpush1.msra.mxu0 0.0
      %3517 = vmatprep.subr.mxu0 0.0
      %3518 = vmatpush1.msra.mxu0 0.0
      %3519 = vmatprep.subr.mxu0 0.0
      %3520 = vmatpush1.msra.mxu0 0.0
      %3521 = vmatprep.subr.mxu0 0.0
      %3522 = vmatpush1.msra.mxu0 0.0
      %3523 = vmatprep.subr.mxu0 0.0
      %3524 = vmatpush1.msra.mxu0 0.0
      %3525 = vmatprep.subr.mxu0 0.0
      %3526 = vmatpush1.msra.mxu0 0.0
      %3527 = vmatprep.subr.mxu0 0.0
      %3528 = vmatpush1.msra.mxu0 0.0
      %3529 = vmatprep.subr.mxu0 0.0
      %3530 = vmatpush1.msra.mxu0 %v3499
      %3531 = vmatprep.subr.mxu0 0.0
      %3532 = vmatpush1.msra.mxu0 %v3400
      %3533 = vmatprep.subr.mxu0 0.0
      %3534 = vmatpush2.msra.mxu0 0.0
      %3535 = vmatprep.subr.mxu0 0.0
      %3536 = vmatpush2.msra.mxu0 0.0
      %3537 = vmatprep.subr.mxu0 0.0
      %3538 = vmatpush2.msra.mxu0 0.0
      %3539 = vmatprep.subr.mxu0 0.0
      %3540 = vmatpush2.msra.mxu0 0.0
      %3541 = vmatprep.subr.mxu0 0.0
      %3542 = vmatpush2.msra.mxu0 0.0
      %3543 = vmatprep.subr.mxu0 0.0
      %3544 = vmatpush2.msra.mxu0 0.0
      %3545 = vmatprep.subr.mxu0 0.0
      %3546 = vmatpush2.msra.mxu0 0.0
      %3547 = vmatprep.subr.mxu0 0.0
      %3548 = vmatpush2.msra.mxu0 0.0
      %3549 = vmatprep.subr.mxu0 0.0
      %3550 = vmatpush2.msra.mxu0 0.0
      %3551 = vmatprep.subr.mxu0 0.0
      %3552 = vmatpush2.msra.mxu0 0.0
      %3553 = vmatprep.subr.mxu0 0.0
      %3554 = vmatpush2.msra.mxu0 0.0
      %3555 = vmatprep.subr.mxu0 0.0
      %3556 = vmatpush2.msra.mxu0 0.0
      %3557 = vmatprep.subr.mxu0 0.0
      %3558 = vmatpush2.msra.mxu0 0.0
      %3559 = vmatprep.subr.mxu0 0.0
      %3560 = vmatpush2.msra.mxu0 0.0
      %3561 = vmatprep.subr.mxu0 0.0
      %3562 = vmatpush2.msra.mxu0 0.0
      %3563 = vmatprep.subr.mxu0 0.0
      %3564 = vmatpush2.msra.mxu0 0.0
      %3565 = vmatprep.mubr.f32.mxu0 0.0
      %3566 = vmatmul.mubr.f32.gmra.mxu0 %v3403
      %v3567 = vpop.f32.mrf.mxu0
      %v3568 = vadd.f32 0.0, %v3567
      %v3569 = vpop.f32.mrf.mxu0
      %3570 = vmatprep.mubr.f32.mxu0 0.0
      %3571 = vmatmul.mubr.f32.gmra.mxu0 %v3406
      %v3572 = vpop.f32.mrf.mxu0
      %v3573 = vadd.f32 0.0, %v3572
      %v3574 = vpop.f32.mrf.mxu0
      %3575 = vmatprep.mubr.f32.mxu0 0.0
      %3576 = vmatmul.mubr.f32.gmra.mxu0 %v3409
      %v3577 = vpop.f32.mrf.mxu0
      %v3578 = vadd.f32 0.0, %v3577
      %v3579 = vpop.f32.mrf.mxu0
      %3580 = vmatprep.mubr.f32.mxu0 0.0
      %3581 = vmatmul.mubr.f32.gmra.mxu0 %v3412
      %v3582 = vpop.f32.mrf.mxu0
      %v3583 = vadd.f32 0.0, %v3582
      %v3584 = vpop.f32.mrf.mxu0
      %3585 = vmatprep.mubr.f32.mxu0 0.0
      %3586 = vmatmul.mubr.f32.gmra.mxu0 %v3415
      %v3587 = vpop.f32.mrf.mxu0
      %v3588 = vadd.f32 0.0, %v3587
      %v3589 = vpop.f32.mrf.mxu0
      %3590 = vmatprep.mubr.f32.mxu0 0.0
      %3591 = vmatmul.mubr.f32.gmra.mxu0 %v3418
      %v3592 = vpop.f32.mrf.mxu0
      %v3593 = vadd.f32 0.0, %v3592
      %v3594 = vpop.f32.mrf.mxu0
      %3595 = vmatprep.mubr.f32.mxu0 0.0
      %3596 = vmatmul.mubr.f32.gmra.mxu0 %v3421
      %v3597 = vpop.f32.mrf.mxu0
      %v3598 = vadd.f32 0.0, %v3597
      %v3599 = vpop.f32.mrf.mxu0
      %3600 = vmatprep.mubr.f32.mxu0 0.0
      %3601 = vmatmul.mubr.f32.gmra.mxu0 %v3424
      %v3602 = vpop.f32.mrf.mxu0
      %v3603 = vadd.f32 0.0, %v3602
      %v3604 = vpop.f32.mrf.mxu0
      %3605 = vmatprep.mubr.f32.mxu0 0.0
      %3606 = vmatmul.mubr.f32.gmra.mxu0 %v3427
      %v3607 = vpop.f32.mrf.mxu0
      %v3608 = vadd.f32 0.0, %v3607
      %v3609 = vpop.f32.mrf.mxu0
      %3610 = vmatprep.mubr.f32.mxu0 0.0
      %3611 = vmatmul.mubr.f32.gmra.mxu0 %v3430
      %v3612 = vpop.f32.mrf.mxu0
      %v3613 = vadd.f32 0.0, %v3612
      %v3614 = vpop.f32.mrf.mxu0
      %3615 = vmatprep.mubr.f32.mxu0 0.0
      %3616 = vmatmul.mubr.f32.gmra.mxu0 %v3433
      %v3617 = vpop.f32.mrf.mxu0
      %v3618 = vadd.f32 0.0, %v3617
      %v3619 = vpop.f32.mrf.mxu0
      %3620 = vmatprep.mubr.f32.mxu0 0.0
      %3621 = vmatmul.mubr.f32.gmra.mxu0 %v3436
      %v3622 = vpop.f32.mrf.mxu0
      %v3623 = vadd.f32 0.0, %v3622
      %v3624 = vpop.f32.mrf.mxu0
      %3625 = vmatprep.mubr.f32.mxu0 0.0
      %3626 = vmatmul.mubr.f32.gmra.mxu0 %v3439
      %v3627 = vpop.f32.mrf.mxu0
      %v3628 = vadd.f32 0.0, %v3627
      %v3629 = vpop.f32.mrf.mxu0
      %3630 = vmatprep.mubr.f32.mxu0 0.0
      %3631 = vmatmul.mubr.f32.gmra.mxu0 %v3442
      %v3632 = vpop.f32.mrf.mxu0
      %v3633 = vadd.f32 0.0, %v3632
      %v3634 = vpop.f32.mrf.mxu0
      %3635 = vmatprep.mubr.f32.mxu0 0.0
      %3636 = vmatmul.mubr.f32.gmra.mxu0 %v3445
      %v3637 = vpop.f32.mrf.mxu0
      %v3638 = vadd.f32 0.0, %v3637
      %v3639 = vpop.f32.mrf.mxu0
      %3640 = vmatprep.mubr.f32.mxu0 0.0
      %3641 = vmatmul.mubr.f32.gmra.mxu0 %v3448
      %v3642 = vpop.f32.mrf.mxu0
      %v3643 = vadd.f32 0.0, %v3642
      %v3644 = vpop.f32.mrf.mxu0
      %3645 = vmatprep.mubr.f32.mxu0 0.0
      %3646 = vmatmul.mubr.f32.gmra.mxu0 %v3451
      %v3647 = vpop.f32.mrf.mxu0
      %v3648 = vadd.f32 0.0, %v3647
      %v3649 = vpop.f32.mrf.mxu0
      %3650 = vmatprep.mubr.f32.mxu0 0.0
      %3651 = vmatmul.mubr.f32.gmra.mxu0 %v3454
      %v3652 = vpop.f32.mrf.mxu0
      %v3653 = vadd.f32 0.0, %v3652
      %v3654 = vpop.f32.mrf.mxu0
      %3655 = vmatprep.mubr.f32.mxu0 0.0
      %3656 = vmatmul.mubr.f32.gmra.mxu0 %v3457
      %v3657 = vpop.f32.mrf.mxu0
      %v3658 = vadd.f32 0.0, %v3657
      %v3659 = vpop.f32.mrf.mxu0
      %3660 = vmatprep.mubr.f32.mxu0 0.0
      %3661 = vmatmul.mubr.f32.gmra.mxu0 %v3460
      %v3662 = vpop.f32.mrf.mxu0
      %v3663 = vadd.f32 0.0, %v3662
      %v3664 = vpop.f32.mrf.mxu0
      %3665 = vmatprep.mubr.f32.mxu0 0.0
      %3666 = vmatmul.mubr.f32.gmra.mxu0 %v3463
      %v3667 = vpop.f32.mrf.mxu0
      %v3668 = vadd.f32 0.0, %v3667
      %v3669 = vpop.f32.mrf.mxu0
      %3670 = vmatprep.mubr.f32.mxu0 0.0
      %3671 = vmatmul.mubr.f32.gmra.mxu0 %v3466
      %v3672 = vpop.f32.mrf.mxu0
      %v3673 = vadd.f32 0.0, %v3672
      %v3674 = vpop.f32.mrf.mxu0
      %3675 = vmatprep.mubr.f32.mxu0 0.0
      %3676 = vmatmul.mubr.f32.gmra.mxu0 %v3469
      %v3677 = vpop.f32.mrf.mxu0
      %v3678 = vadd.f32 0.0, %v3677
      %v3679 = vpop.f32.mrf.mxu0
      %3680 = vmatprep.mubr.f32.mxu0 0.0
      %3681 = vmatmul.mubr.f32.gmra.mxu0 %v3472
      %v3682 = vpop.f32.mrf.mxu0
      %v3683 = vadd.f32 0.0, %v3682
      %v3684 = vpop.f32.mrf.mxu0
      %3685 = vmatprep.mubr.f32.mxu0 0.0
      %3686 = vmatmul.mubr.f32.gmra.mxu0 %v3475
      %v3687 = vpop.f32.mrf.mxu0
      %v3688 = vadd.f32 0.0, %v3687
      %v3689 = vpop.f32.mrf.mxu0
      %3690 = vmatprep.mubr.f32.mxu0 0.0
      %3691 = vmatmul.mubr.f32.gmra.mxu0 %v3478
      %v3692 = vpop.f32.mrf.mxu0
      %v3693 = vadd.f32 0.0, %v3692
      %v3694 = vpop.f32.mrf.mxu0
      %3695 = vmatprep.mubr.f32.mxu0 0.0
      %3696 = vmatmul.mubr.f32.gmra.mxu0 %v3481
      %v3697 = vpop.f32.mrf.mxu0
      %v3698 = vadd.f32 0.0, %v3697
      %v3699 = vpop.f32.mrf.mxu0
      %3700 = vmatprep.mubr.f32.mxu0 0.0
      %3701 = vmatmul.mubr.f32.gmra.mxu0 %v3484
      %v3702 = vpop.f32.mrf.mxu0
      %v3703 = vadd.f32 0.0, %v3702
      %v3704 = vpop.f32.mrf.mxu0
      %3705 = vmatprep.mubr.f32.mxu0 0.0
      %3706 = vmatmul.mubr.f32.gmra.mxu0 %v3487
      %v3707 = vpop.f32.mrf.mxu0
      %v3708 = vadd.f32 0.0, %v3707
      %v3709 = vpop.f32.mrf.mxu0
      %3710 = vmatprep.mubr.f32.mxu0 0.0
      %3711 = vmatmul.mubr.f32.gmra.mxu0 %v3490
      %v3712 = vpop.f32.mrf.mxu0
      %v3713 = vadd.f32 0.0, %v3712
      %v3714 = vpop.f32.mrf.mxu0
      %3715 = vmatprep.mubr.f32.mxu0 0.0
      %3716 = vmatmul.mubr.f32.gmra.mxu0 %v3493
      %v3717 = vpop.f32.mrf.mxu0
      %v3718 = vadd.f32 0.0, %v3717
      %v3719 = vpop.f32.mrf.mxu0
      %3720 = vmatprep.mubr.f32.mxu0 0.0
      %3721 = vmatmul.mubr.f32.gmra.mxu0 %v3496
      %v3722 = vpop.f32.mrf.mxu0
      %v3723 = vadd.f32 0.0, %v3722
      %v3724 = vpop.f32.mrf.mxu0
      %3725 = vdwg.mxu0
      %3726 = vst.msk [vmem:[#allocation3] sm:$0xff] %vm204, %v3568
      %3727 = vst.msk [vmem:[#allocation3 + $0x8] sm:$0xff] %vm204, %v3573
      %3728 = vst.msk [vmem:[#allocation3 + $0x10] sm:$0xff] %vm204, %v3578
      %3729 = vst.msk [vmem:[#allocation3 + $0x18] sm:$0xff] %vm204, %v3583
      %3730 = vst.msk [vmem:[#allocation3 + $0x20] sm:$0xff] %vm204, %v3588
      %3731 = vst.msk [vmem:[#allocation3 + $0x28] sm:$0xff] %vm204, %v3593
      %3732 = vst.msk [vmem:[#allocation3 + $0x30] sm:$0xff] %vm204, %v3598
      %3733 = vst.msk [vmem:[#allocation3 + $0x38] sm:$0xff] %vm204, %v3603
      %3734 = vst.msk [vmem:[#allocation3 + $0x40] sm:$0xff] %vm204, %v3608
      %3735 = vst.msk [vmem:[#allocation3 + $0x48] sm:$0xff] %vm204, %v3613
      %3736 = vst.msk [vmem:[#allocation3 + $0x50] sm:$0xff] %vm204, %v3618
      %3737 = vst.msk [vmem:[#allocation3 + $0x58] sm:$0xff] %vm204, %v3623
      %3738 = vst.msk [vmem:[#allocation3 + $0x60] sm:$0xff] %vm204, %v3628
      %3739 = vst.msk [vmem:[#allocation3 + $0x68] sm:$0xff] %vm204, %v3633
      %3740 = vst.msk [vmem:[#allocation3 + $0x70] sm:$0xff] %vm204, %v3638
      %3741 = vst.msk [vmem:[#allocation3 + $0x78] sm:$0xff] %vm204, %v3643
      %3742 = vst.msk [vmem:[#allocation3 + $0x80] sm:$0xff] %vm204, %v3648
      %3743 = vst.msk [vmem:[#allocation3 + $0x88] sm:$0xff] %vm204, %v3653
      %3744 = vst.msk [vmem:[#allocation3 + $0x90] sm:$0xff] %vm204, %v3658
      %3745 = vst.msk [vmem:[#allocation3 + $0x98] sm:$0xff] %vm204, %v3663
      %3746 = vst.msk [vmem:[#allocation3 + $0xa0] sm:$0xff] %vm204, %v3668
      %3747 = vst.msk [vmem:[#allocation3 + $0xa8] sm:$0xff] %vm204, %v3673
      %3748 = vst.msk [vmem:[#allocation3 + $0xb0] sm:$0xff] %vm204, %v3678
      %3749 = vst.msk [vmem:[#allocation3 + $0xb8] sm:$0xff] %vm204, %v3683
      %3750 = vst.msk [vmem:[#allocation3 + $0xc0] sm:$0xff] %vm204, %v3688
      %3751 = vst.msk [vmem:[#allocation3 + $0xc8] sm:$0xff] %vm204, %v3693
      %3752 = vst.msk [vmem:[#allocation3 + $0xd0] sm:$0xff] %vm204, %v3698
      %3753 = vst.msk [vmem:[#allocation3 + $0xd8] sm:$0xff] %vm204, %v3703
      %3754 = vst.msk [vmem:[#allocation3 + $0xe0] sm:$0xff] %vm204, %v3708
      %3755 = vst.msk [vmem:[#allocation3 + $0xe8] sm:$0xff] %vm204, %v3713
      %3756 = vst.msk [vmem:[#allocation3 + $0xf0] sm:$0xff] %vm204, %v3718
      %3757 = vst.msk [vmem:[#allocation3 + $0xf8] sm:$0xff] %vm204, %v3723
      %3758 = vrot.lane.b32.xlu0 %v2915, 4
      %v3759 = vpop.permute.xlu0 %3758
      %3760 = vrot.lane.b32.xlu0 %v2916, 4
      %v3761 = vpop.permute.xlu0 %3760
      %3762 = vrot.lane.b32.xlu0 %v2917, 4
      %v3763 = vpop.permute.xlu0 %3762
      %3764 = vrot.lane.b32.xlu0 %v2918, 4
      %v3765 = vpop.permute.xlu0 %3764
      %3766 = vrot.lane.b32.xlu0 %v2919, 4
      %v3767 = vpop.permute.xlu0 %3766
      %3768 = vrot.lane.b32.xlu0 %v2920, 4
      %v3769 = vpop.permute.xlu0 %3768
      %3770 = vrot.lane.b32.xlu0 %v2921, 4
      %v3771 = vpop.permute.xlu0 %3770
      %3772 = vrot.lane.b32.xlu0 %v2922, 4
      %v3773 = vpop.permute.xlu0 %3772
      %3774 = vrot.lane.b32.xlu0 %v2923, 4
      %v3775 = vpop.permute.xlu0 %3774
      %3776 = vrot.lane.b32.xlu0 %v2924, 4
      %v3777 = vpop.permute.xlu0 %3776
      %3778 = vrot.lane.b32.xlu0 %v2925, 4
      %v3779 = vpop.permute.xlu0 %3778
      %3780 = vrot.lane.b32.xlu0 %v2926, 4
      %v3781 = vpop.permute.xlu0 %3780
      %3782 = vrot.lane.b32.xlu0 %v2927, 4
      %v3783 = vpop.permute.xlu0 %3782
      %3784 = vrot.lane.b32.xlu0 %v2928, 4
      %v3785 = vpop.permute.xlu0 %3784
      %3786 = vrot.lane.b32.xlu0 %v2929, 4
      %v3787 = vpop.permute.xlu0 %3786
      %3788 = vrot.lane.b32.xlu0 %v2930, 4
      %v3789 = vpop.permute.xlu0 %3788
      %3790 = vrot.lane.b32.xlu0 %v2931, 4
      %v3791 = vpop.permute.xlu0 %3790
      %3792 = vrot.lane.b32.xlu0 %v2932, 4
      %v3793 = vpop.permute.xlu0 %3792
      %3794 = vrot.lane.b32.xlu0 %v2933, 4
      %v3795 = vpop.permute.xlu0 %3794
      %3796 = vrot.lane.b32.xlu0 %v2934, 4
      %v3797 = vpop.permute.xlu0 %3796
      %3798 = vrot.lane.b32.xlu0 %v2935, 4
      %v3799 = vpop.permute.xlu0 %3798
      %3800 = vrot.lane.b32.xlu0 %v2936, 4
      %v3801 = vpop.permute.xlu0 %3800
      %3802 = vrot.lane.b32.xlu0 %v2937, 4
      %v3803 = vpop.permute.xlu0 %3802
      %3804 = vrot.lane.b32.xlu0 %v2938, 4
      %v3805 = vpop.permute.xlu0 %3804
      %3806 = vrot.lane.b32.xlu0 %v2939, 4
      %v3807 = vpop.permute.xlu0 %3806
      %3808 = vrot.lane.b32.xlu0 %v2940, 4
      %v3809 = vpop.permute.xlu0 %3808
      %3810 = vrot.lane.b32.xlu0 %v2941, 4
      %v3811 = vpop.permute.xlu0 %3810
      %3812 = vrot.lane.b32.xlu0 %v2942, 4
      %v3813 = vpop.permute.xlu0 %3812
      %3814 = vrot.lane.b32.xlu0 %v2943, 4
      %v3815 = vpop.permute.xlu0 %3814
      %3816 = vrot.lane.b32.xlu0 %v2944, 4
      %v3817 = vpop.permute.xlu0 %3816
      %3818 = vrot.lane.b32.xlu0 %v2945, 4
      %v3819 = vpop.permute.xlu0 %3818
      %3820 = vrot.lane.b32.xlu0 %v2946, 4
      %v3821 = vpop.permute.xlu0 %3820
      %3854 = vrot.lane.b32.xlu0 %v2917, 8
      %v3855 = vpop.permute.xlu0 %3854
      %3856 = vrot.lane.b32.xlu0 %v2918, 8
      %v3857 = vpop.permute.xlu0 %3856
      %3858 = vrot.lane.b32.xlu0 %v2919, 8
      %v3859 = vpop.permute.xlu0 %3858
      %3860 = vrot.lane.b32.xlu0 %v2920, 8
      %v3861 = vpop.permute.xlu0 %3860
      %3862 = vrot.lane.b32.xlu0 %v2921, 8
      %v3863 = vpop.permute.xlu0 %3862
      %3864 = vrot.lane.b32.xlu0 %v2922, 8
      %v3865 = vpop.permute.xlu0 %3864
      %3866 = vrot.lane.b32.xlu0 %v2923, 8
      %v3867 = vpop.permute.xlu0 %3866
      %3868 = vrot.lane.b32.xlu0 %v2924, 8
      %v3869 = vpop.permute.xlu0 %3868
      %3870 = vrot.lane.b32.xlu0 %v2925, 8
      %v3871 = vpop.permute.xlu0 %3870
      %3872 = vrot.lane.b32.xlu0 %v2926, 8
      %v3873 = vpop.permute.xlu0 %3872
      %3874 = vrot.lane.b32.xlu0 %v2927, 8
      %v3875 = vpop.permute.xlu0 %3874
      %3876 = vrot.lane.b32.xlu0 %v2928, 8
      %v3877 = vpop.permute.xlu0 %3876
      %3878 = vrot.lane.b32.xlu0 %v2929, 8
      %v3879 = vpop.permute.xlu0 %3878
      %3880 = vrot.lane.b32.xlu0 %v2930, 8
      %v3881 = vpop.permute.xlu0 %3880
      %3882 = vrot.lane.b32.xlu0 %v2931, 8
      %v3883 = vpop.permute.xlu0 %3882
      %3884 = vrot.lane.b32.xlu0 %v2932, 8
      %v3885 = vpop.permute.xlu0 %3884
      %3886 = vrot.lane.b32.xlu0 %v2933, 8
      %v3887 = vpop.permute.xlu0 %3886
      %3888 = vrot.lane.b32.xlu0 %v2934, 8
      %v3889 = vpop.permute.xlu0 %3888
      %3890 = vrot.lane.b32.xlu0 %v2935, 8
      %v3891 = vpop.permute.xlu0 %3890
      %3892 = vrot.lane.b32.xlu0 %v2936, 8
      %v3893 = vpop.permute.xlu0 %3892
      %3894 = vrot.lane.b32.xlu0 %v2937, 8
      %v3895 = vpop.permute.xlu0 %3894
      %3896 = vrot.lane.b32.xlu0 %v2938, 8
      %v3897 = vpop.permute.xlu0 %3896
      %3898 = vrot.lane.b32.xlu0 %v2939, 8
      %v3899 = vpop.permute.xlu0 %3898
      %3900 = vrot.lane.b32.xlu0 %v2940, 8
      %v3901 = vpop.permute.xlu0 %3900
      %3902 = vrot.lane.b32.xlu0 %v2941, 8
      %v3903 = vpop.permute.xlu0 %3902
      %3904 = vrot.lane.b32.xlu0 %v2942, 8
      %v3905 = vpop.permute.xlu0 %3904
      %3906 = vrot.lane.b32.xlu0 %v2943, 8
      %v3907 = vpop.permute.xlu0 %3906
      %3908 = vrot.lane.b32.xlu0 %v2944, 8
      %v3909 = vpop.permute.xlu0 %3908
      %3910 = vrot.lane.b32.xlu0 %v2945, 8
      %v3911 = vpop.permute.xlu0 %3910
      %3912 = vrot.lane.b32.xlu0 %v2946, 8
      %v3913 = vpop.permute.xlu0 %3912
      %3914 = vrot.lane.b32.xlu0 %v2947, 8
      %v3915 = vpop.permute.xlu0 %3914
      %3916 = vrot.lane.b32.xlu0 %v2948, 8
      %v3917 = vpop.permute.xlu0 %3916
      %v3950 = vsel %vm204, %v2913, %v3759
      %v3951 = vsel %vm204, %v2914, %v3761
      %v3952 = vsel %vm204, %v2915, %v3763
      %v3953 = vsel %vm204, %v2916, %v3765
      %v3954 = vsel %vm204, %v2917, %v3767
      %v3955 = vsel %vm204, %v2918, %v3769
      %v3956 = vsel %vm204, %v2919, %v3771
      %v3957 = vsel %vm204, %v2920, %v3773
      %v3958 = vsel %vm204, %v2921, %v3775
      %v3959 = vsel %vm204, %v2922, %v3777
      %v3960 = vsel %vm204, %v2923, %v3779
      %v3961 = vsel %vm204, %v2924, %v3781
      %v3962 = vsel %vm204, %v2925, %v3783
      %v3963 = vsel %vm204, %v2926, %v3785
      %v3964 = vsel %vm204, %v2927, %v3787
      %v3965 = vsel %vm204, %v2928, %v3789
      %v3966 = vsel %vm204, %v2929, %v3791
      %v3967 = vsel %vm204, %v2930, %v3793
      %v3968 = vsel %vm204, %v2931, %v3795
      %v3969 = vsel %vm204, %v2932, %v3797
      %v3970 = vsel %vm204, %v2933, %v3799
      %v3971 = vsel %vm204, %v2934, %v3801
      %v3972 = vsel %vm204, %v2935, %v3803
      %v3973 = vsel %vm204, %v2936, %v3805
      %v3974 = vsel %vm204, %v2937, %v3807
      %v3975 = vsel %vm204, %v2938, %v3809
      %v3976 = vsel %vm204, %v2939, %v3811
      %v3977 = vsel %vm204, %v2940, %v3813
      %v3978 = vsel %vm204, %v2941, %v3815
      %v3979 = vsel %vm204, %v2942, %v3817
      %v3980 = vsel %vm204, %v2943, %v3819
      %v3981 = vsel %vm204, %v2944, %v3821
      %v3982 = vsel %vm698, %v3950, %v3855
      %v3983 = vsel %vm698, %v3951, %v3857
      %v3984 = vsel %vm698, %v3952, %v3859
      %v3985 = vsel %vm698, %v3953, %v3861
      %v3986 = vsel %vm698, %v3954, %v3863
      %v3987 = vsel %vm698, %v3955, %v3865
      %v3988 = vsel %vm698, %v3956, %v3867
      %v3989 = vsel %vm698, %v3957, %v3869
      %v3990 = vsel %vm698, %v3958, %v3871
      %v3991 = vsel %vm698, %v3959, %v3873
      %v3992 = vsel %vm698, %v3960, %v3875
      %v3993 = vsel %vm698, %v3961, %v3877
      %v3994 = vsel %vm698, %v3962, %v3879
      %v3995 = vsel %vm698, %v3963, %v3881
      %v3996 = vsel %vm698, %v3964, %v3883
      %v3997 = vsel %vm698, %v3965, %v3885
      %v3998 = vsel %vm698, %v3966, %v3887
      %v3999 = vsel %vm698, %v3967, %v3889
      %v4000 = vsel %vm698, %v3968, %v3891
      %v4001 = vsel %vm698, %v3969, %v3893
      %v4002 = vsel %vm698, %v3970, %v3895
      %v4003 = vsel %vm698, %v3971, %v3897
      %v4004 = vsel %vm698, %v3972, %v3899
      %v4005 = vsel %vm698, %v3973, %v3901
      %v4006 = vsel %vm698, %v3974, %v3903
      %v4007 = vsel %vm698, %v3975, %v3905
      %v4008 = vsel %vm698, %v3976, %v3907
      %v4009 = vsel %vm698, %v3977, %v3909
      %v4010 = vsel %vm698, %v3978, %v3911
      %v4011 = vsel %vm698, %v3979, %v3913
      %v4012 = vsel %vm698, %v3980, %v3915
      %v4013 = vsel %vm698, %v3981, %v3917
      %s4014 = scalar_lea.vmem %s2, 16
      %v4015 = vld [vmem:[%s4014] sm:$0xff]
      %v4016 = vld [vmem:[%s4014 + $0x8] sm:$0xf]
      %v4018 = vsel %vm733, %v3982, 0
      %v4021 = vsel %vm733, %v3983, 0
      %v4024 = vsel %vm733, %v3984, 0
      %v4027 = vsel %vm733, %v3985, 0
      %v4030 = vsel %vm733, %v3986, 0
      %v4033 = vsel %vm733, %v3987, 0
      %v4036 = vsel %vm733, %v3988, 0
      %v4039 = vsel %vm733, %v3989, 0
      %v4042 = vsel %vm733, %v3990, 0
      %v4045 = vsel %vm733, %v3991, 0
      %v4048 = vsel %vm733, %v3992, 0
      %v4051 = vsel %vm733, %v3993, 0
      %v4054 = vsel %vm733, %v3994, 0
      %v4057 = vsel %vm733, %v3995, 0
      %v4060 = vsel %vm733, %v3996, 0
      %v4063 = vsel %vm733, %v3997, 0
      %v4066 = vsel %vm733, %v3998, 0
      %v4069 = vsel %vm733, %v3999, 0
      %v4072 = vsel %vm733, %v4000, 0
      %v4075 = vsel %vm733, %v4001, 0
      %v4078 = vsel %vm733, %v4002, 0
      %v4081 = vsel %vm733, %v4003, 0
      %v4084 = vsel %vm733, %v4004, 0
      %v4087 = vsel %vm733, %v4005, 0
      %v4090 = vsel %vm733, %v4006, 0
      %v4093 = vsel %vm733, %v4007, 0
      %v4096 = vsel %vm733, %v4008, 0
      %v4099 = vsel %vm733, %v4009, 0
      %v4102 = vsel %vm733, %v4010, 0
      %v4105 = vsel %vm733, %v4011, 0
      %v4108 = vsel %vm733, %v4012, 0
      %v4111 = vsel %vm733, %v4013, 0
      %v4114 = vsel %vm830, %v4016, 0
      %4116 = vmatprep.subr.mxu0 0.0
      %4117 = vmatpush1.msra.mxu0 0.0
      %4118 = vmatprep.subr.mxu0 0.0
      %4119 = vmatpush1.msra.mxu0 0.0
      %4120 = vmatprep.subr.mxu0 0.0
      %4121 = vmatpush1.msra.mxu0 0.0
      %4122 = vmatprep.subr.mxu0 0.0
      %4123 = vmatpush1.msra.mxu0 0.0
      %4124 = vmatprep.subr.mxu0 0.0
      %4125 = vmatpush1.msra.mxu0 0.0
      %4126 = vmatprep.subr.mxu0 0.0
      %4127 = vmatpush1.msra.mxu0 0.0
      %4128 = vmatprep.subr.mxu0 0.0
      %4129 = vmatpush1.msra.mxu0 0.0
      %4130 = vmatprep.subr.mxu0 0.0
      %4131 = vmatpush1.msra.mxu0 0.0
      %4132 = vmatprep.subr.mxu0 0.0
      %4133 = vmatpush1.msra.mxu0 0.0
      %4134 = vmatprep.subr.mxu0 0.0
      %4135 = vmatpush1.msra.mxu0 0.0
      %4136 = vmatprep.subr.mxu0 0.0
      %4137 = vmatpush1.msra.mxu0 0.0
      %4138 = vmatprep.subr.mxu0 0.0
      %4139 = vmatpush1.msra.mxu0 0.0
      %4140 = vmatprep.subr.mxu0 0.0
      %4141 = vmatpush1.msra.mxu0 0.0
      %4142 = vmatprep.subr.mxu0 0.0
      %4143 = vmatpush1.msra.mxu0 0.0
      %4144 = vmatprep.subr.mxu0 0.0
      %4145 = vmatpush1.msra.mxu0 %v4114
      %4146 = vmatprep.subr.mxu0 0.0
      %4147 = vmatpush1.msra.mxu0 %v4015
      %4148 = vmatprep.subr.mxu0 0.0
      %4149 = vmatpush2.msra.mxu0 0.0
      %4150 = vmatprep.subr.mxu0 0.0
      %4151 = vmatpush2.msra.mxu0 0.0
      %4152 = vmatprep.subr.mxu0 0.0
      %4153 = vmatpush2.msra.mxu0 0.0
      %4154 = vmatprep.subr.mxu0 0.0
      %4155 = vmatpush2.msra.mxu0 0.0
      %4156 = vmatprep.subr.mxu0 0.0
      %4157 = vmatpush2.msra.mxu0 0.0
      %4158 = vmatprep.subr.mxu0 0.0
      %4159 = vmatpush2.msra.mxu0 0.0
      %4160 = vmatprep.subr.mxu0 0.0
      %4161 = vmatpush2.msra.mxu0 0.0
      %4162 = vmatprep.subr.mxu0 0.0
      %4163 = vmatpush2.msra.mxu0 0.0
      %4164 = vmatprep.subr.mxu0 0.0
      %4165 = vmatpush2.msra.mxu0 0.0
      %4166 = vmatprep.subr.mxu0 0.0
      %4167 = vmatpush2.msra.mxu0 0.0
      %4168 = vmatprep.subr.mxu0 0.0
      %4169 = vmatpush2.msra.mxu0 0.0
      %4170 = vmatprep.subr.mxu0 0.0
      %4171 = vmatpush2.msra.mxu0 0.0
      %4172 = vmatprep.subr.mxu0 0.0
      %4173 = vmatpush2.msra.mxu0 0.0
      %4174 = vmatprep.subr.mxu0 0.0
      %4175 = vmatpush2.msra.mxu0 0.0
      %4176 = vmatprep.subr.mxu0 0.0
      %4177 = vmatpush2.msra.mxu0 0.0
      %4178 = vmatprep.subr.mxu0 0.0
      %4179 = vmatpush2.msra.mxu0 0.0
      %4180 = vmatprep.mubr.f32.mxu0 0.0
      %4181 = vmatmul.mubr.f32.gmra.mxu0 %v4018
      %v4182 = vpop.f32.mrf.mxu0
      %v4183 = vadd.f32 0.0, %v4182
      %v4184 = vpop.f32.mrf.mxu0
      %4185 = vmatprep.mubr.f32.mxu0 0.0
      %4186 = vmatmul.mubr.f32.gmra.mxu0 %v4021
      %v4187 = vpop.f32.mrf.mxu0
      %v4188 = vadd.f32 0.0, %v4187
      %v4189 = vpop.f32.mrf.mxu0
      %4190 = vmatprep.mubr.f32.mxu0 0.0
      %4191 = vmatmul.mubr.f32.gmra.mxu0 %v4024
      %v4192 = vpop.f32.mrf.mxu0
      %v4193 = vadd.f32 0.0, %v4192
      %v4194 = vpop.f32.mrf.mxu0
      %4195 = vmatprep.mubr.f32.mxu0 0.0
      %4196 = vmatmul.mubr.f32.gmra.mxu0 %v4027
      %v4197 = vpop.f32.mrf.mxu0
      %v4198 = vadd.f32 0.0, %v4197
      %v4199 = vpop.f32.mrf.mxu0
      %4200 = vmatprep.mubr.f32.mxu0 0.0
      %4201 = vmatmul.mubr.f32.gmra.mxu0 %v4030
      %v4202 = vpop.f32.mrf.mxu0
      %v4203 = vadd.f32 0.0, %v4202
      %v4204 = vpop.f32.mrf.mxu0
      %4205 = vmatprep.mubr.f32.mxu0 0.0
      %4206 = vmatmul.mubr.f32.gmra.mxu0 %v4033
      %v4207 = vpop.f32.mrf.mxu0
      %v4208 = vadd.f32 0.0, %v4207
      %v4209 = vpop.f32.mrf.mxu0
      %4210 = vmatprep.mubr.f32.mxu0 0.0
      %4211 = vmatmul.mubr.f32.gmra.mxu0 %v4036
      %v4212 = vpop.f32.mrf.mxu0
      %v4213 = vadd.f32 0.0, %v4212
      %v4214 = vpop.f32.mrf.mxu0
      %4215 = vmatprep.mubr.f32.mxu0 0.0
      %4216 = vmatmul.mubr.f32.gmra.mxu0 %v4039
      %v4217 = vpop.f32.mrf.mxu0
      %v4218 = vadd.f32 0.0, %v4217
      %v4219 = vpop.f32.mrf.mxu0
      %4220 = vmatprep.mubr.f32.mxu0 0.0
      %4221 = vmatmul.mubr.f32.gmra.mxu0 %v4042
      %v4222 = vpop.f32.mrf.mxu0
      %v4223 = vadd.f32 0.0, %v4222
      %v4224 = vpop.f32.mrf.mxu0
      %4225 = vmatprep.mubr.f32.mxu0 0.0
      %4226 = vmatmul.mubr.f32.gmra.mxu0 %v4045
      %v4227 = vpop.f32.mrf.mxu0
      %v4228 = vadd.f32 0.0, %v4227
      %v4229 = vpop.f32.mrf.mxu0
      %4230 = vmatprep.mubr.f32.mxu0 0.0
      %4231 = vmatmul.mubr.f32.gmra.mxu0 %v4048
      %v4232 = vpop.f32.mrf.mxu0
      %v4233 = vadd.f32 0.0, %v4232
      %v4234 = vpop.f32.mrf.mxu0
      %4235 = vmatprep.mubr.f32.mxu0 0.0
      %4236 = vmatmul.mubr.f32.gmra.mxu0 %v4051
      %v4237 = vpop.f32.mrf.mxu0
      %v4238 = vadd.f32 0.0, %v4237
      %v4239 = vpop.f32.mrf.mxu0
      %4240 = vmatprep.mubr.f32.mxu0 0.0
      %4241 = vmatmul.mubr.f32.gmra.mxu0 %v4054
      %v4242 = vpop.f32.mrf.mxu0
      %v4243 = vadd.f32 0.0, %v4242
      %v4244 = vpop.f32.mrf.mxu0
      %4245 = vmatprep.mubr.f32.mxu0 0.0
      %4246 = vmatmul.mubr.f32.gmra.mxu0 %v4057
      %v4247 = vpop.f32.mrf.mxu0
      %v4248 = vadd.f32 0.0, %v4247
      %v4249 = vpop.f32.mrf.mxu0
      %4250 = vmatprep.mubr.f32.mxu0 0.0
      %4251 = vmatmul.mubr.f32.gmra.mxu0 %v4060
      %v4252 = vpop.f32.mrf.mxu0
      %v4253 = vadd.f32 0.0, %v4252
      %v4254 = vpop.f32.mrf.mxu0
      %4255 = vmatprep.mubr.f32.mxu0 0.0
      %4256 = vmatmul.mubr.f32.gmra.mxu0 %v4063
      %v4257 = vpop.f32.mrf.mxu0
      %v4258 = vadd.f32 0.0, %v4257
      %v4259 = vpop.f32.mrf.mxu0
      %4260 = vmatprep.mubr.f32.mxu0 0.0
      %4261 = vmatmul.mubr.f32.gmra.mxu0 %v4066
      %v4262 = vpop.f32.mrf.mxu0
      %v4263 = vadd.f32 0.0, %v4262
      %v4264 = vpop.f32.mrf.mxu0
      %4265 = vmatprep.mubr.f32.mxu0 0.0
      %4266 = vmatmul.mubr.f32.gmra.mxu0 %v4069
      %v4267 = vpop.f32.mrf.mxu0
      %v4268 = vadd.f32 0.0, %v4267
      %v4269 = vpop.f32.mrf.mxu0
      %4270 = vmatprep.mubr.f32.mxu0 0.0
      %4271 = vmatmul.mubr.f32.gmra.mxu0 %v4072
      %v4272 = vpop.f32.mrf.mxu0
      %v4273 = vadd.f32 0.0, %v4272
      %v4274 = vpop.f32.mrf.mxu0
      %4275 = vmatprep.mubr.f32.mxu0 0.0
      %4276 = vmatmul.mubr.f32.gmra.mxu0 %v4075
      %v4277 = vpop.f32.mrf.mxu0
      %v4278 = vadd.f32 0.0, %v4277
      %v4279 = vpop.f32.mrf.mxu0
      %4280 = vmatprep.mubr.f32.mxu0 0.0
      %4281 = vmatmul.mubr.f32.gmra.mxu0 %v4078
      %v4282 = vpop.f32.mrf.mxu0
      %v4283 = vadd.f32 0.0, %v4282
      %v4284 = vpop.f32.mrf.mxu0
      %4285 = vmatprep.mubr.f32.mxu0 0.0
      %4286 = vmatmul.mubr.f32.gmra.mxu0 %v4081
      %v4287 = vpop.f32.mrf.mxu0
      %v4288 = vadd.f32 0.0, %v4287
      %v4289 = vpop.f32.mrf.mxu0
      %4290 = vmatprep.mubr.f32.mxu0 0.0
      %4291 = vmatmul.mubr.f32.gmra.mxu0 %v4084
      %v4292 = vpop.f32.mrf.mxu0
      %v4293 = vadd.f32 0.0, %v4292
      %v4294 = vpop.f32.mrf.mxu0
      %4295 = vmatprep.mubr.f32.mxu0 0.0
      %4296 = vmatmul.mubr.f32.gmra.mxu0 %v4087
      %v4297 = vpop.f32.mrf.mxu0
      %v4298 = vadd.f32 0.0, %v4297
      %v4299 = vpop.f32.mrf.mxu0
      %4300 = vmatprep.mubr.f32.mxu0 0.0
      %4301 = vmatmul.mubr.f32.gmra.mxu0 %v4090
      %v4302 = vpop.f32.mrf.mxu0
      %v4303 = vadd.f32 0.0, %v4302
      %v4304 = vpop.f32.mrf.mxu0
      %4305 = vmatprep.mubr.f32.mxu0 0.0
      %4306 = vmatmul.mubr.f32.gmra.mxu0 %v4093
      %v4307 = vpop.f32.mrf.mxu0
      %v4308 = vadd.f32 0.0, %v4307
      %v4309 = vpop.f32.mrf.mxu0
      %4310 = vmatprep.mubr.f32.mxu0 0.0
      %4311 = vmatmul.mubr.f32.gmra.mxu0 %v4096
      %v4312 = vpop.f32.mrf.mxu0
      %v4313 = vadd.f32 0.0, %v4312
      %v4314 = vpop.f32.mrf.mxu0
      %4315 = vmatprep.mubr.f32.mxu0 0.0
      %4316 = vmatmul.mubr.f32.gmra.mxu0 %v4099
      %v4317 = vpop.f32.mrf.mxu0
      %v4318 = vadd.f32 0.0, %v4317
      %v4319 = vpop.f32.mrf.mxu0
      %4320 = vmatprep.mubr.f32.mxu0 0.0
      %4321 = vmatmul.mubr.f32.gmra.mxu0 %v4102
      %v4322 = vpop.f32.mrf.mxu0
      %v4323 = vadd.f32 0.0, %v4322
      %v4324 = vpop.f32.mrf.mxu0
      %4325 = vmatprep.mubr.f32.mxu0 0.0
      %4326 = vmatmul.mubr.f32.gmra.mxu0 %v4105
      %v4327 = vpop.f32.mrf.mxu0
      %v4328 = vadd.f32 0.0, %v4327
      %v4329 = vpop.f32.mrf.mxu0
      %4330 = vmatprep.mubr.f32.mxu0 0.0
      %4331 = vmatmul.mubr.f32.gmra.mxu0 %v4108
      %v4332 = vpop.f32.mrf.mxu0
      %v4333 = vadd.f32 0.0, %v4332
      %v4334 = vpop.f32.mrf.mxu0
      %4335 = vmatprep.mubr.f32.mxu0 0.0
      %4336 = vmatmul.mubr.f32.gmra.mxu0 %v4111
      %v4337 = vpop.f32.mrf.mxu0
      %v4338 = vadd.f32 0.0, %v4337
      %v4339 = vpop.f32.mrf.mxu0
      %4340 = vdwg.mxu0
      %v4341 = vld [vmem:[#allocation3] sm:$0xff]
      %v4342 = vld [vmem:[#allocation3 + $0x8] sm:$0xff]
      %v4343 = vld [vmem:[#allocation3 + $0x10] sm:$0xff]
      %v4344 = vld [vmem:[#allocation3 + $0x18] sm:$0xff]
      %v4345 = vld [vmem:[#allocation3 + $0x20] sm:$0xff]
      %v4346 = vld [vmem:[#allocation3 + $0x28] sm:$0xff]
      %v4347 = vld [vmem:[#allocation3 + $0x30] sm:$0xff]
      %v4348 = vld [vmem:[#allocation3 + $0x38] sm:$0xff]
      %v4349 = vld [vmem:[#allocation3 + $0x40] sm:$0xff]
      %v4350 = vld [vmem:[#allocation3 + $0x48] sm:$0xff]
      %v4351 = vld [vmem:[#allocation3 + $0x50] sm:$0xff]
      %v4352 = vld [vmem:[#allocation3 + $0x58] sm:$0xff]
      %v4353 = vld [vmem:[#allocation3 + $0x60] sm:$0xff]
      %v4354 = vld [vmem:[#allocation3 + $0x68] sm:$0xff]
      %v4355 = vld [vmem:[#allocation3 + $0x70] sm:$0xff]
      %v4356 = vld [vmem:[#allocation3 + $0x78] sm:$0xff]
      %v4357 = vld [vmem:[#allocation3 + $0x80] sm:$0xff]
      %v4358 = vld [vmem:[#allocation3 + $0x88] sm:$0xff]
      %v4359 = vld [vmem:[#allocation3 + $0x90] sm:$0xff]
      %v4360 = vld [vmem:[#allocation3 + $0x98] sm:$0xff]
      %v4361 = vld [vmem:[#allocation3 + $0xa0] sm:$0xff]
      %v4362 = vld [vmem:[#allocation3 + $0xa8] sm:$0xff]
      %v4363 = vld [vmem:[#allocation3 + $0xb0] sm:$0xff]
      %v4364 = vld [vmem:[#allocation3 + $0xb8] sm:$0xff]
      %v4365 = vld [vmem:[#allocation3 + $0xc0] sm:$0xff]
      %v4366 = vld [vmem:[#allocation3 + $0xc8] sm:$0xff]
      %v4367 = vld [vmem:[#allocation3 + $0xd0] sm:$0xff]
      %v4368 = vld [vmem:[#allocation3 + $0xd8] sm:$0xff]
      %v4369 = vld [vmem:[#allocation3 + $0xe0] sm:$0xff]
      %v4370 = vld [vmem:[#allocation3 + $0xe8] sm:$0xff]
      %v4371 = vld [vmem:[#allocation3 + $0xf0] sm:$0xff]
      %v4372 = vld [vmem:[#allocation3 + $0xf8] sm:$0xff]
      %v4373 = vadd.f32 %v4341, %v4183
      %v4374 = vadd.f32 %v4342, %v4188
      %v4375 = vadd.f32 %v4343, %v4193
      %v4376 = vadd.f32 %v4344, %v4198
      %v4377 = vadd.f32 %v4345, %v4203
      %v4378 = vadd.f32 %v4346, %v4208
      %v4379 = vadd.f32 %v4347, %v4213
      %v4380 = vadd.f32 %v4348, %v4218
      %v4381 = vadd.f32 %v4349, %v4223
      %v4382 = vadd.f32 %v4350, %v4228
      %v4383 = vadd.f32 %v4351, %v4233
      %v4384 = vadd.f32 %v4352, %v4238
      %v4385 = vadd.f32 %v4353, %v4243
      %v4386 = vadd.f32 %v4354, %v4248
      %v4387 = vadd.f32 %v4355, %v4253
      %v4388 = vadd.f32 %v4356, %v4258
      %v4389 = vadd.f32 %v4357, %v4263
      %v4390 = vadd.f32 %v4358, %v4268
      %v4391 = vadd.f32 %v4359, %v4273
      %v4392 = vadd.f32 %v4360, %v4278
      %v4393 = vadd.f32 %v4361, %v4283
      %v4394 = vadd.f32 %v4362, %v4288
      %v4395 = vadd.f32 %v4363, %v4293
      %v4396 = vadd.f32 %v4364, %v4298
      %v4397 = vadd.f32 %v4365, %v4303
      %v4398 = vadd.f32 %v4366, %v4308
      %v4399 = vadd.f32 %v4367, %v4313
      %v4400 = vadd.f32 %v4368, %v4318
      %v4401 = vadd.f32 %v4369, %v4323
      %v4402 = vadd.f32 %v4370, %v4328
      %v4403 = vadd.f32 %v4371, %v4333
      %v4404 = vadd.f32 %v4372, %v4338
      %4405 = vst.msk [vmem:[#allocation3] sm:$0xff] %vm204, %v4373
      %4406 = vst.msk [vmem:[#allocation3 + $0x8] sm:$0xff] %vm204, %v4374
      %4407 = vst.msk [vmem:[#allocation3 + $0x10] sm:$0xff] %vm204, %v4375
      %4408 = vst.msk [vmem:[#allocation3 + $0x18] sm:$0xff] %vm204, %v4376
      %4409 = vst.msk [vmem:[#allocation3 + $0x20] sm:$0xff] %vm204, %v4377
      %4410 = vst.msk [vmem:[#allocation3 + $0x28] sm:$0xff] %vm204, %v4378
      %4411 = vst.msk [vmem:[#allocation3 + $0x30] sm:$0xff] %vm204, %v4379
      %4412 = vst.msk [vmem:[#allocation3 + $0x38] sm:$0xff] %vm204, %v4380
      %4413 = vst.msk [vmem:[#allocation3 + $0x40] sm:$0xff] %vm204, %v4381
      %4414 = vst.msk [vmem:[#allocation3 + $0x48] sm:$0xff] %vm204, %v4382
      %4415 = vst.msk [vmem:[#allocation3 + $0x50] sm:$0xff] %vm204, %v4383
      %4416 = vst.msk [vmem:[#allocation3 + $0x58] sm:$0xff] %vm204, %v4384
      %4417 = vst.msk [vmem:[#allocation3 + $0x60] sm:$0xff] %vm204, %v4385
      %4418 = vst.msk [vmem:[#allocation3 + $0x68] sm:$0xff] %vm204, %v4386
      %4419 = vst.msk [vmem:[#allocation3 + $0x70] sm:$0xff] %vm204, %v4387
      %4420 = vst.msk [vmem:[#allocation3 + $0x78] sm:$0xff] %vm204, %v4388
      %4421 = vst.msk [vmem:[#allocation3 + $0x80] sm:$0xff] %vm204, %v4389
      %4422 = vst.msk [vmem:[#allocation3 + $0x88] sm:$0xff] %vm204, %v4390
      %4423 = vst.msk [vmem:[#allocation3 + $0x90] sm:$0xff] %vm204, %v4391
      %4424 = vst.msk [vmem:[#allocation3 + $0x98] sm:$0xff] %vm204, %v4392
      %4425 = vst.msk [vmem:[#allocation3 + $0xa0] sm:$0xff] %vm204, %v4393
      %4426 = vst.msk [vmem:[#allocation3 + $0xa8] sm:$0xff] %vm204, %v4394
      %4427 = vst.msk [vmem:[#allocation3 + $0xb0] sm:$0xff] %vm204, %v4395
      %4428 = vst.msk [vmem:[#allocation3 + $0xb8] sm:$0xff] %vm204, %v4396
      %4429 = vst.msk [vmem:[#allocation3 + $0xc0] sm:$0xff] %vm204, %v4397
      %4430 = vst.msk [vmem:[#allocation3 + $0xc8] sm:$0xff] %vm204, %v4398
      %4431 = vst.msk [vmem:[#allocation3 + $0xd0] sm:$0xff] %vm204, %v4399
      %4432 = vst.msk [vmem:[#allocation3 + $0xd8] sm:$0xff] %vm204, %v4400
      %4433 = vst.msk [vmem:[#allocation3 + $0xe0] sm:$0xff] %vm204, %v4401
      %4434 = vst.msk [vmem:[#allocation3 + $0xe8] sm:$0xff] %vm204, %v4402
      %4435 = vst.msk [vmem:[#allocation3 + $0xf0] sm:$0xff] %vm204, %v4403
      %4436 = vst.msk [vmem:[#allocation3 + $0xf8] sm:$0xff] %vm204, %v4404
      %v4437 = vrot.slane %v2914, 1
      %v4438 = vsel %vm1770, %v2967, %v4437
      %v4439 = vrot.slane %v2916, 1
      %v4440 = vsel %vm1770, %v2968, %v4439
      %v4441 = vrot.slane %v2918, 1
      %v4442 = vsel %vm1770, %v2969, %v4441
      %v4443 = vrot.slane %v2920, 1
      %v4444 = vsel %vm1770, %v2970, %v4443
      %v4445 = vrot.slane %v2922, 1
      %v4446 = vsel %vm1770, %v2971, %v4445
      %v4447 = vrot.slane %v2924, 1
      %v4448 = vsel %vm1770, %v2972, %v4447
      %v4449 = vrot.slane %v2926, 1
      %v4450 = vsel %vm1770, %v2973, %v4449
      %v4451 = vrot.slane %v2928, 1
      %v4452 = vsel %vm1770, %v2974, %v4451
      %v4453 = vrot.slane %v2930, 1
      %v4454 = vsel %vm1770, %v2975, %v4453
      %v4455 = vrot.slane %v2932, 1
      %v4456 = vsel %vm1770, %v2976, %v4455
      %v4457 = vrot.slane %v2934, 1
      %v4458 = vsel %vm1770, %v2977, %v4457
      %v4459 = vrot.slane %v2936, 1
      %v4460 = vsel %vm1770, %v2978, %v4459
      %v4461 = vrot.slane %v2938, 1
      %v4462 = vsel %vm1770, %v2979, %v4461
      %v4463 = vrot.slane %v2940, 1
      %v4464 = vsel %vm1770, %v2980, %v4463
      %v4465 = vrot.slane %v2942, 1
      %v4466 = vsel %vm1770, %v2981, %v4465
      %v4467 = vrot.slane %v2944, 1
      %v4468 = vsel %vm1770, %v2982, %v4467
      %v4469 = vrot.slane %v2946, 1
      %v4470 = vsel %vm1770, %v2983, %v4469
      %v4471 = vrot.slane %v2948, 1
      %v4472 = vsel %vm1770, %v2984, %v4471
      %v4525 = vsel %vm1770, %v4437, %v3022
      %v4526 = vsel %vm1770, %v4439, %v3025
      %v4527 = vsel %vm1770, %v4441, %v3028
      %v4528 = vsel %vm1770, %v4443, %v3031
      %v4529 = vsel %vm1770, %v4445, %v3034
      %v4530 = vsel %vm1770, %v4447, %v3037
      %v4531 = vsel %vm1770, %v4449, %v3040
      %v4532 = vsel %vm1770, %v4451, %v3043
      %v4533 = vsel %vm1770, %v4453, %v3046
      %v4534 = vsel %vm1770, %v4455, %v3049
      %v4535 = vsel %vm1770, %v4457, %v3052
      %v4536 = vsel %vm1770, %v4459, %v3055
      %v4537 = vsel %vm1770, %v4461, %v3058
      %v4538 = vsel %vm1770, %v4463, %v3061
      %v4539 = vsel %vm1770, %v4465, %v3064
      %v4540 = vsel %vm1770, %v4467, %v3067
      %v4541 = vsel %vm1770, %v4469, %v3070
      %v4542 = vsel %vm1770, %v4471, %v3073
      %4559 = vrot.lane.b32.xlu0 %v4440, 4
      %v4560 = vpop.permute.xlu0 %4559
      %4561 = vrot.lane.b32.xlu0 %v4526, 4
      %v4562 = vpop.permute.xlu0 %4561
      %4563 = vrot.lane.b32.xlu0 %v4442, 4
      %v4564 = vpop.permute.xlu0 %4563
      %4565 = vrot.lane.b32.xlu0 %v4527, 4
      %v4566 = vpop.permute.xlu0 %4565
      %4567 = vrot.lane.b32.xlu0 %v4444, 4
      %v4568 = vpop.permute.xlu0 %4567
      %4569 = vrot.lane.b32.xlu0 %v4528, 4
      %v4570 = vpop.permute.xlu0 %4569
      %4571 = vrot.lane.b32.xlu0 %v4446, 4
      %v4572 = vpop.permute.xlu0 %4571
      %4573 = vrot.lane.b32.xlu0 %v4529, 4
      %v4574 = vpop.permute.xlu0 %4573
      %4575 = vrot.lane.b32.xlu0 %v4448, 4
      %v4576 = vpop.permute.xlu0 %4575
      %4577 = vrot.lane.b32.xlu0 %v4530, 4
      %v4578 = vpop.permute.xlu0 %4577
      %4579 = vrot.lane.b32.xlu0 %v4450, 4
      %v4580 = vpop.permute.xlu0 %4579
      %4581 = vrot.lane.b32.xlu0 %v4531, 4
      %v4582 = vpop.permute.xlu0 %4581
      %4583 = vrot.lane.b32.xlu0 %v4452, 4
      %v4584 = vpop.permute.xlu0 %4583
      %4585 = vrot.lane.b32.xlu0 %v4532, 4
      %v4586 = vpop.permute.xlu0 %4585
      %4587 = vrot.lane.b32.xlu0 %v4454, 4
      %v4588 = vpop.permute.xlu0 %4587
      %4589 = vrot.lane.b32.xlu0 %v4533, 4
      %v4590 = vpop.permute.xlu0 %4589
      %4591 = vrot.lane.b32.xlu0 %v4456, 4
      %v4592 = vpop.permute.xlu0 %4591
      %4593 = vrot.lane.b32.xlu0 %v4534, 4
      %v4594 = vpop.permute.xlu0 %4593
      %4595 = vrot.lane.b32.xlu0 %v4458, 4
      %v4596 = vpop.permute.xlu0 %4595
      %4597 = vrot.lane.b32.xlu0 %v4535, 4
      %v4598 = vpop.permute.xlu0 %4597
      %4599 = vrot.lane.b32.xlu0 %v4460, 4
      %v4600 = vpop.permute.xlu0 %4599
      %4601 = vrot.lane.b32.xlu0 %v4536, 4
      %v4602 = vpop.permute.xlu0 %4601
      %4603 = vrot.lane.b32.xlu0 %v4462, 4
      %v4604 = vpop.permute.xlu0 %4603
      %4605 = vrot.lane.b32.xlu0 %v4537, 4
      %v4606 = vpop.permute.xlu0 %4605
      %4607 = vrot.lane.b32.xlu0 %v4464, 4
      %v4608 = vpop.permute.xlu0 %4607
      %4609 = vrot.lane.b32.xlu0 %v4538, 4
      %v4610 = vpop.permute.xlu0 %4609
      %4611 = vrot.lane.b32.xlu0 %v4466, 4
      %v4612 = vpop.permute.xlu0 %4611
      %4613 = vrot.lane.b32.xlu0 %v4539, 4
      %v4614 = vpop.permute.xlu0 %4613
      %4615 = vrot.lane.b32.xlu0 %v4468, 4
      %v4616 = vpop.permute.xlu0 %4615
      %4617 = vrot.lane.b32.xlu0 %v4540, 4
      %v4618 = vpop.permute.xlu0 %4617
      %4619 = vrot.lane.b32.xlu0 %v4470, 4
      %v4620 = vpop.permute.xlu0 %4619
      %4621 = vrot.lane.b32.xlu0 %v4541, 4
      %v4622 = vpop.permute.xlu0 %4621
      %4656 = vrot.lane.b32.xlu0 %v4442, 8
      %v4657 = vpop.permute.xlu0 %4656
      %4658 = vrot.lane.b32.xlu0 %v4527, 8
      %v4659 = vpop.permute.xlu0 %4658
      %4660 = vrot.lane.b32.xlu0 %v4444, 8
      %v4661 = vpop.permute.xlu0 %4660
      %4662 = vrot.lane.b32.xlu0 %v4528, 8
      %v4663 = vpop.permute.xlu0 %4662
      %4664 = vrot.lane.b32.xlu0 %v4446, 8
      %v4665 = vpop.permute.xlu0 %4664
      %4666 = vrot.lane.b32.xlu0 %v4529, 8
      %v4667 = vpop.permute.xlu0 %4666
      %4668 = vrot.lane.b32.xlu0 %v4448, 8
      %v4669 = vpop.permute.xlu0 %4668
      %4670 = vrot.lane.b32.xlu0 %v4530, 8
      %v4671 = vpop.permute.xlu0 %4670
      %4672 = vrot.lane.b32.xlu0 %v4450, 8
      %v4673 = vpop.permute.xlu0 %4672
      %4674 = vrot.lane.b32.xlu0 %v4531, 8
      %v4675 = vpop.permute.xlu0 %4674
      %4676 = vrot.lane.b32.xlu0 %v4452, 8
      %v4677 = vpop.permute.xlu0 %4676
      %4678 = vrot.lane.b32.xlu0 %v4532, 8
      %v4679 = vpop.permute.xlu0 %4678
      %4680 = vrot.lane.b32.xlu0 %v4454, 8
      %v4681 = vpop.permute.xlu0 %4680
      %4682 = vrot.lane.b32.xlu0 %v4533, 8
      %v4683 = vpop.permute.xlu0 %4682
      %4684 = vrot.lane.b32.xlu0 %v4456, 8
      %v4685 = vpop.permute.xlu0 %4684
      %4686 = vrot.lane.b32.xlu0 %v4534, 8
      %v4687 = vpop.permute.xlu0 %4686
      %4688 = vrot.lane.b32.xlu0 %v4458, 8
      %v4689 = vpop.permute.xlu0 %4688
      %4690 = vrot.lane.b32.xlu0 %v4535, 8
      %v4691 = vpop.permute.xlu0 %4690
      %4692 = vrot.lane.b32.xlu0 %v4460, 8
      %v4693 = vpop.permute.xlu0 %4692
      %4694 = vrot.lane.b32.xlu0 %v4536, 8
      %v4695 = vpop.permute.xlu0 %4694
      %4696 = vrot.lane.b32.xlu0 %v4462, 8
      %v4697 = vpop.permute.xlu0 %4696
      %4698 = vrot.lane.b32.xlu0 %v4537, 8
      %v4699 = vpop.permute.xlu0 %4698
      %4700 = vrot.lane.b32.xlu0 %v4464, 8
      %v4701 = vpop.permute.xlu0 %4700
      %4702 = vrot.lane.b32.xlu0 %v4538, 8
      %v4703 = vpop.permute.xlu0 %4702
      %4704 = vrot.lane.b32.xlu0 %v4466, 8
      %v4705 = vpop.permute.xlu0 %4704
      %4706 = vrot.lane.b32.xlu0 %v4539, 8
      %v4707 = vpop.permute.xlu0 %4706
      %4708 = vrot.lane.b32.xlu0 %v4468, 8
      %v4709 = vpop.permute.xlu0 %4708
      %4710 = vrot.lane.b32.xlu0 %v4540, 8
      %v4711 = vpop.permute.xlu0 %4710
      %4712 = vrot.lane.b32.xlu0 %v4470, 8
      %v4713 = vpop.permute.xlu0 %4712
      %4714 = vrot.lane.b32.xlu0 %v4541, 8
      %v4715 = vpop.permute.xlu0 %4714
      %4716 = vrot.lane.b32.xlu0 %v4472, 8
      %v4717 = vpop.permute.xlu0 %4716
      %4718 = vrot.lane.b32.xlu0 %v4542, 8
      %v4719 = vpop.permute.xlu0 %4718
      %v4752 = vsel %vm204, %v4438, %v4560
      %v4753 = vsel %vm204, %v4525, %v4562
      %v4754 = vsel %vm204, %v4440, %v4564
      %v4755 = vsel %vm204, %v4526, %v4566
      %v4756 = vsel %vm204, %v4442, %v4568
      %v4757 = vsel %vm204, %v4527, %v4570
      %v4758 = vsel %vm204, %v4444, %v4572
      %v4759 = vsel %vm204, %v4528, %v4574
      %v4760 = vsel %vm204, %v4446, %v4576
      %v4761 = vsel %vm204, %v4529, %v4578
      %v4762 = vsel %vm204, %v4448, %v4580
      %v4763 = vsel %vm204, %v4530, %v4582
      %v4764 = vsel %vm204, %v4450, %v4584
      %v4765 = vsel %vm204, %v4531, %v4586
      %v4766 = vsel %vm204, %v4452, %v4588
      %v4767 = vsel %vm204, %v4532, %v4590
      %v4768 = vsel %vm204, %v4454, %v4592
      %v4769 = vsel %vm204, %v4533, %v4594
      %v4770 = vsel %vm204, %v4456, %v4596
      %v4771 = vsel %vm204, %v4534, %v4598
      %v4772 = vsel %vm204, %v4458, %v4600
      %v4773 = vsel %vm204, %v4535, %v4602
      %v4774 = vsel %vm204, %v4460, %v4604
      %v4775 = vsel %vm204, %v4536, %v4606
      %v4776 = vsel %vm204, %v4462, %v4608
      %v4777 = vsel %vm204, %v4537, %v4610
      %v4778 = vsel %vm204, %v4464, %v4612
      %v4779 = vsel %vm204, %v4538, %v4614
      %v4780 = vsel %vm204, %v4466, %v4616
      %v4781 = vsel %vm204, %v4539, %v4618
      %v4782 = vsel %vm204, %v4468, %v4620
      %v4783 = vsel %vm204, %v4540, %v4622
      %v4784 = vsel %vm698, %v4752, %v4657
      %v4785 = vsel %vm698, %v4753, %v4659
      %v4786 = vsel %vm698, %v4754, %v4661
      %v4787 = vsel %vm698, %v4755, %v4663
      %v4788 = vsel %vm698, %v4756, %v4665
      %v4789 = vsel %vm698, %v4757, %v4667
      %v4790 = vsel %vm698, %v4758, %v4669
      %v4791 = vsel %vm698, %v4759, %v4671
      %v4792 = vsel %vm698, %v4760, %v4673
      %v4793 = vsel %vm698, %v4761, %v4675
      %v4794 = vsel %vm698, %v4762, %v4677
      %v4795 = vsel %vm698, %v4763, %v4679
      %v4796 = vsel %vm698, %v4764, %v4681
      %v4797 = vsel %vm698, %v4765, %v4683
      %v4798 = vsel %vm698, %v4766, %v4685
      %v4799 = vsel %vm698, %v4767, %v4687
      %v4800 = vsel %vm698, %v4768, %v4689
      %v4801 = vsel %vm698, %v4769, %v4691
      %v4802 = vsel %vm698, %v4770, %v4693
      %v4803 = vsel %vm698, %v4771, %v4695
      %v4804 = vsel %vm698, %v4772, %v4697
      %v4805 = vsel %vm698, %v4773, %v4699
      %v4806 = vsel %vm698, %v4774, %v4701
      %v4807 = vsel %vm698, %v4775, %v4703
      %v4808 = vsel %vm698, %v4776, %v4705
      %v4809 = vsel %vm698, %v4777, %v4707
      %v4810 = vsel %vm698, %v4778, %v4709
      %v4811 = vsel %vm698, %v4779, %v4711
      %v4812 = vsel %vm698, %v4780, %v4713
      %v4813 = vsel %vm698, %v4781, %v4715
      %v4814 = vsel %vm698, %v4782, %v4717
      %v4815 = vsel %vm698, %v4783, %v4719
      %s4816 = scalar_lea.vmem %s2, 32
      %v4817 = vld [vmem:[%s4816] sm:$0xff]
      %v4818 = vld [vmem:[%s4816 + $0x8] sm:$0xf]
      %v4820 = vsel %vm733, %v4784, 0
      %v4823 = vsel %vm733, %v4785, 0
      %v4826 = vsel %vm733, %v4786, 0
      %v4829 = vsel %vm733, %v4787, 0
      %v4832 = vsel %vm733, %v4788, 0
      %v4835 = vsel %vm733, %v4789, 0
      %v4838 = vsel %vm733, %v4790, 0
      %v4841 = vsel %vm733, %v4791, 0
      %v4844 = vsel %vm733, %v4792, 0
      %v4847 = vsel %vm733, %v4793, 0
      %v4850 = vsel %vm733, %v4794, 0
      %v4853 = vsel %vm733, %v4795, 0
      %v4856 = vsel %vm733, %v4796, 0
      %v4859 = vsel %vm733, %v4797, 0
      %v4862 = vsel %vm733, %v4798, 0
      %v4865 = vsel %vm733, %v4799, 0
      %v4868 = vsel %vm733, %v4800, 0
      %v4871 = vsel %vm733, %v4801, 0
      %v4874 = vsel %vm733, %v4802, 0
      %v4877 = vsel %vm733, %v4803, 0
      %v4880 = vsel %vm733, %v4804, 0
      %v4883 = vsel %vm733, %v4805, 0
      %v4886 = vsel %vm733, %v4806, 0
      %v4889 = vsel %vm733, %v4807, 0
      %v4892 = vsel %vm733, %v4808, 0
      %v4895 = vsel %vm733, %v4809, 0
      %v4898 = vsel %vm733, %v4810, 0
      %v4901 = vsel %vm733, %v4811, 0
      %v4904 = vsel %vm733, %v4812, 0
      %v4907 = vsel %vm733, %v4813, 0
      %v4910 = vsel %vm733, %v4814, 0
      %v4913 = vsel %vm733, %v4815, 0
      %v4916 = vsel %vm830, %v4818, 0
      %4918 = vmatprep.subr.mxu0 0.0
      %4919 = vmatpush1.msra.mxu0 0.0
      %4920 = vmatprep.subr.mxu0 0.0
      %4921 = vmatpush1.msra.mxu0 0.0
      %4922 = vmatprep.subr.mxu0 0.0
      %4923 = vmatpush1.msra.mxu0 0.0
      %4924 = vmatprep.subr.mxu0 0.0
      %4925 = vmatpush1.msra.mxu0 0.0
      %4926 = vmatprep.subr.mxu0 0.0
      %4927 = vmatpush1.msra.mxu0 0.0
      %4928 = vmatprep.subr.mxu0 0.0
      %4929 = vmatpush1.msra.mxu0 0.0
      %4930 = vmatprep.subr.mxu0 0.0
      %4931 = vmatpush1.msra.mxu0 0.0
      %4932 = vmatprep.subr.mxu0 0.0
      %4933 = vmatpush1.msra.mxu0 0.0
      %4934 = vmatprep.subr.mxu0 0.0
      %4935 = vmatpush1.msra.mxu0 0.0
      %4936 = vmatprep.subr.mxu0 0.0
      %4937 = vmatpush1.msra.mxu0 0.0
      %4938 = vmatprep.subr.mxu0 0.0
      %4939 = vmatpush1.msra.mxu0 0.0
      %4940 = vmatprep.subr.mxu0 0.0
      %4941 = vmatpush1.msra.mxu0 0.0
      %4942 = vmatprep.subr.mxu0 0.0
      %4943 = vmatpush1.msra.mxu0 0.0
      %4944 = vmatprep.subr.mxu0 0.0
      %4945 = vmatpush1.msra.mxu0 0.0
      %4946 = vmatprep.subr.mxu0 0.0
      %4947 = vmatpush1.msra.mxu0 %v4916
      %4948 = vmatprep.subr.mxu0 0.0
      %4949 = vmatpush1.msra.mxu0 %v4817
      %4950 = vmatprep.subr.mxu0 0.0
      %4951 = vmatpush2.msra.mxu0 0.0
      %4952 = vmatprep.subr.mxu0 0.0
      %4953 = vmatpush2.msra.mxu0 0.0
      %4954 = vmatprep.subr.mxu0 0.0
      %4955 = vmatpush2.msra.mxu0 0.0
      %4956 = vmatprep.subr.mxu0 0.0
      %4957 = vmatpush2.msra.mxu0 0.0
      %4958 = vmatprep.subr.mxu0 0.0
      %4959 = vmatpush2.msra.mxu0 0.0
      %4960 = vmatprep.subr.mxu0 0.0
      %4961 = vmatpush2.msra.mxu0 0.0
      %4962 = vmatprep.subr.mxu0 0.0
      %4963 = vmatpush2.msra.mxu0 0.0
      %4964 = vmatprep.subr.mxu0 0.0
      %4965 = vmatpush2.msra.mxu0 0.0
      %4966 = vmatprep.subr.mxu0 0.0
      %4967 = vmatpush2.msra.mxu0 0.0
      %4968 = vmatprep.subr.mxu0 0.0
      %4969 = vmatpush2.msra.mxu0 0.0
      %4970 = vmatprep.subr.mxu0 0.0
      %4971 = vmatpush2.msra.mxu0 0.0
      %4972 = vmatprep.subr.mxu0 0.0
      %4973 = vmatpush2.msra.mxu0 0.0
      %4974 = vmatprep.subr.mxu0 0.0
      %4975 = vmatpush2.msra.mxu0 0.0
      %4976 = vmatprep.subr.mxu0 0.0
      %4977 = vmatpush2.msra.mxu0 0.0
      %4978 = vmatprep.subr.mxu0 0.0
      %4979 = vmatpush2.msra.mxu0 0.0
      %4980 = vmatprep.subr.mxu0 0.0
      %4981 = vmatpush2.msra.mxu0 0.0
      %4982 = vmatprep.mubr.f32.mxu0 0.0
      %4983 = vmatmul.mubr.f32.gmra.mxu0 %v4820
      %v4984 = vpop.f32.mrf.mxu0
      %v4985 = vadd.f32 0.0, %v4984
      %v4986 = vpop.f32.mrf.mxu0
      %4987 = vmatprep.mubr.f32.mxu0 0.0
      %4988 = vmatmul.mubr.f32.gmra.mxu0 %v4823
      %v4989 = vpop.f32.mrf.mxu0
      %v4990 = vadd.f32 0.0, %v4989
      %v4991 = vpop.f32.mrf.mxu0
      %4992 = vmatprep.mubr.f32.mxu0 0.0
      %4993 = vmatmul.mubr.f32.gmra.mxu0 %v4826
      %v4994 = vpop.f32.mrf.mxu0
      %v4995 = vadd.f32 0.0, %v4994
      %v4996 = vpop.f32.mrf.mxu0
      %4997 = vmatprep.mubr.f32.mxu0 0.0
      %4998 = vmatmul.mubr.f32.gmra.mxu0 %v4829
      %v4999 = vpop.f32.mrf.mxu0
      %v5000 = vadd.f32 0.0, %v4999
      %v5001 = vpop.f32.mrf.mxu0
      %5002 = vmatprep.mubr.f32.mxu0 0.0
      %5003 = vmatmul.mubr.f32.gmra.mxu0 %v4832
      %v5004 = vpop.f32.mrf.mxu0
      %v5005 = vadd.f32 0.0, %v5004
      %v5006 = vpop.f32.mrf.mxu0
      %5007 = vmatprep.mubr.f32.mxu0 0.0
      %5008 = vmatmul.mubr.f32.gmra.mxu0 %v4835
      %v5009 = vpop.f32.mrf.mxu0
      %v5010 = vadd.f32 0.0, %v5009
      %v5011 = vpop.f32.mrf.mxu0
      %5012 = vmatprep.mubr.f32.mxu0 0.0
      %5013 = vmatmul.mubr.f32.gmra.mxu0 %v4838
      %v5014 = vpop.f32.mrf.mxu0
      %v5015 = vadd.f32 0.0, %v5014
      %v5016 = vpop.f32.mrf.mxu0
      %5017 = vmatprep.mubr.f32.mxu0 0.0
      %5018 = vmatmul.mubr.f32.gmra.mxu0 %v4841
      %v5019 = vpop.f32.mrf.mxu0
      %v5020 = vadd.f32 0.0, %v5019
      %v5021 = vpop.f32.mrf.mxu0
      %5022 = vmatprep.mubr.f32.mxu0 0.0
      %5023 = vmatmul.mubr.f32.gmra.mxu0 %v4844
      %v5024 = vpop.f32.mrf.mxu0
      %v5025 = vadd.f32 0.0, %v5024
      %v5026 = vpop.f32.mrf.mxu0
      %5027 = vmatprep.mubr.f32.mxu0 0.0
      %5028 = vmatmul.mubr.f32.gmra.mxu0 %v4847
      %v5029 = vpop.f32.mrf.mxu0
      %v5030 = vadd.f32 0.0, %v5029
      %v5031 = vpop.f32.mrf.mxu0
      %5032 = vmatprep.mubr.f32.mxu0 0.0
      %5033 = vmatmul.mubr.f32.gmra.mxu0 %v4850
      %v5034 = vpop.f32.mrf.mxu0
      %v5035 = vadd.f32 0.0, %v5034
      %v5036 = vpop.f32.mrf.mxu0
      %5037 = vmatprep.mubr.f32.mxu0 0.0
      %5038 = vmatmul.mubr.f32.gmra.mxu0 %v4853
      %v5039 = vpop.f32.mrf.mxu0
      %v5040 = vadd.f32 0.0, %v5039
      %v5041 = vpop.f32.mrf.mxu0
      %5042 = vmatprep.mubr.f32.mxu0 0.0
      %5043 = vmatmul.mubr.f32.gmra.mxu0 %v4856
      %v5044 = vpop.f32.mrf.mxu0
      %v5045 = vadd.f32 0.0, %v5044
      %v5046 = vpop.f32.mrf.mxu0
      %5047 = vmatprep.mubr.f32.mxu0 0.0
      %5048 = vmatmul.mubr.f32.gmra.mxu0 %v4859
      %v5049 = vpop.f32.mrf.mxu0
      %v5050 = vadd.f32 0.0, %v5049
      %v5051 = vpop.f32.mrf.mxu0
      %5052 = vmatprep.mubr.f32.mxu0 0.0
      %5053 = vmatmul.mubr.f32.gmra.mxu0 %v4862
      %v5054 = vpop.f32.mrf.mxu0
      %v5055 = vadd.f32 0.0, %v5054
      %v5056 = vpop.f32.mrf.mxu0
      %5057 = vmatprep.mubr.f32.mxu0 0.0
      %5058 = vmatmul.mubr.f32.gmra.mxu0 %v4865
      %v5059 = vpop.f32.mrf.mxu0
      %v5060 = vadd.f32 0.0, %v5059
      %v5061 = vpop.f32.mrf.mxu0
      %5062 = vmatprep.mubr.f32.mxu0 0.0
      %5063 = vmatmul.mubr.f32.gmra.mxu0 %v4868
      %v5064 = vpop.f32.mrf.mxu0
      %v5065 = vadd.f32 0.0, %v5064
      %v5066 = vpop.f32.mrf.mxu0
      %5067 = vmatprep.mubr.f32.mxu0 0.0
      %5068 = vmatmul.mubr.f32.gmra.mxu0 %v4871
      %v5069 = vpop.f32.mrf.mxu0
      %v5070 = vadd.f32 0.0, %v5069
      %v5071 = vpop.f32.mrf.mxu0
      %5072 = vmatprep.mubr.f32.mxu0 0.0
      %5073 = vmatmul.mubr.f32.gmra.mxu0 %v4874
      %v5074 = vpop.f32.mrf.mxu0
      %v5075 = vadd.f32 0.0, %v5074
      %v5076 = vpop.f32.mrf.mxu0
      %5077 = vmatprep.mubr.f32.mxu0 0.0
      %5078 = vmatmul.mubr.f32.gmra.mxu0 %v4877
      %v5079 = vpop.f32.mrf.mxu0
      %v5080 = vadd.f32 0.0, %v5079
      %v5081 = vpop.f32.mrf.mxu0
      %5082 = vmatprep.mubr.f32.mxu0 0.0
      %5083 = vmatmul.mubr.f32.gmra.mxu0 %v4880
      %v5084 = vpop.f32.mrf.mxu0
      %v5085 = vadd.f32 0.0, %v5084
      %v5086 = vpop.f32.mrf.mxu0
      %5087 = vmatprep.mubr.f32.mxu0 0.0
      %5088 = vmatmul.mubr.f32.gmra.mxu0 %v4883
      %v5089 = vpop.f32.mrf.mxu0
      %v5090 = vadd.f32 0.0, %v5089
      %v5091 = vpop.f32.mrf.mxu0
      %5092 = vmatprep.mubr.f32.mxu0 0.0
      %5093 = vmatmul.mubr.f32.gmra.mxu0 %v4886
      %v5094 = vpop.f32.mrf.mxu0
      %v5095 = vadd.f32 0.0, %v5094
      %v5096 = vpop.f32.mrf.mxu0
      %5097 = vmatprep.mubr.f32.mxu0 0.0
      %5098 = vmatmul.mubr.f32.gmra.mxu0 %v4889
      %v5099 = vpop.f32.mrf.mxu0
      %v5100 = vadd.f32 0.0, %v5099
      %v5101 = vpop.f32.mrf.mxu0
      %5102 = vmatprep.mubr.f32.mxu0 0.0
      %5103 = vmatmul.mubr.f32.gmra.mxu0 %v4892
      %v5104 = vpop.f32.mrf.mxu0
      %v5105 = vadd.f32 0.0, %v5104
      %v5106 = vpop.f32.mrf.mxu0
      %5107 = vmatprep.mubr.f32.mxu0 0.0
      %5108 = vmatmul.mubr.f32.gmra.mxu0 %v4895
      %v5109 = vpop.f32.mrf.mxu0
      %v5110 = vadd.f32 0.0, %v5109
      %v5111 = vpop.f32.mrf.mxu0
      %5112 = vmatprep.mubr.f32.mxu0 0.0
      %5113 = vmatmul.mubr.f32.gmra.mxu0 %v4898
      %v5114 = vpop.f32.mrf.mxu0
      %v5115 = vadd.f32 0.0, %v5114
      %v5116 = vpop.f32.mrf.mxu0
      %5117 = vmatprep.mubr.f32.mxu0 0.0
      %5118 = vmatmul.mubr.f32.gmra.mxu0 %v4901
      %v5119 = vpop.f32.mrf.mxu0
      %v5120 = vadd.f32 0.0, %v5119
      %v5121 = vpop.f32.mrf.mxu0
      %5122 = vmatprep.mubr.f32.mxu0 0.0
      %5123 = vmatmul.mubr.f32.gmra.mxu0 %v4904
      %v5124 = vpop.f32.mrf.mxu0
      %v5125 = vadd.f32 0.0, %v5124
      %v5126 = vpop.f32.mrf.mxu0
      %5127 = vmatprep.mubr.f32.mxu0 0.0
      %5128 = vmatmul.mubr.f32.gmra.mxu0 %v4907
      %v5129 = vpop.f32.mrf.mxu0
      %v5130 = vadd.f32 0.0, %v5129
      %v5131 = vpop.f32.mrf.mxu0
      %5132 = vmatprep.mubr.f32.mxu0 0.0
      %5133 = vmatmul.mubr.f32.gmra.mxu0 %v4910
      %v5134 = vpop.f32.mrf.mxu0
      %v5135 = vadd.f32 0.0, %v5134
      %v5136 = vpop.f32.mrf.mxu0
      %5137 = vmatprep.mubr.f32.mxu0 0.0
      %5138 = vmatmul.mubr.f32.gmra.mxu0 %v4913
      %v5139 = vpop.f32.mrf.mxu0
      %v5140 = vadd.f32 0.0, %v5139
      %v5141 = vpop.f32.mrf.mxu0
      %5142 = vdwg.mxu0
      %v5143 = vld [vmem:[#allocation3] sm:$0xff]
      %v5144 = vld [vmem:[#allocation3 + $0x8] sm:$0xff]
      %v5145 = vld [vmem:[#allocation3 + $0x10] sm:$0xff]
      %v5146 = vld [vmem:[#allocation3 + $0x18] sm:$0xff]
      %v5147 = vld [vmem:[#allocation3 + $0x20] sm:$0xff]
      %v5148 = vld [vmem:[#allocation3 + $0x28] sm:$0xff]
      %v5149 = vld [vmem:[#allocation3 + $0x30] sm:$0xff]
      %v5150 = vld [vmem:[#allocation3 + $0x38] sm:$0xff]
      %v5151 = vld [vmem:[#allocation3 + $0x40] sm:$0xff]
      %v5152 = vld [vmem:[#allocation3 + $0x48] sm:$0xff]
      %v5153 = vld [vmem:[#allocation3 + $0x50] sm:$0xff]
      %v5154 = vld [vmem:[#allocation3 + $0x58] sm:$0xff]
      %v5155 = vld [vmem:[#allocation3 + $0x60] sm:$0xff]
      %v5156 = vld [vmem:[#allocation3 + $0x68] sm:$0xff]
      %v5157 = vld [vmem:[#allocation3 + $0x70] sm:$0xff]
      %v5158 = vld [vmem:[#allocation3 + $0x78] sm:$0xff]
      %v5159 = vld [vmem:[#allocation3 + $0x80] sm:$0xff]
      %v5160 = vld [vmem:[#allocation3 + $0x88] sm:$0xff]
      %v5161 = vld [vmem:[#allocation3 + $0x90] sm:$0xff]
      %v5162 = vld [vmem:[#allocation3 + $0x98] sm:$0xff]
      %v5163 = vld [vmem:[#allocation3 + $0xa0] sm:$0xff]
      %v5164 = vld [vmem:[#allocation3 + $0xa8] sm:$0xff]
      %v5165 = vld [vmem:[#allocation3 + $0xb0] sm:$0xff]
      %v5166 = vld [vmem:[#allocation3 + $0xb8] sm:$0xff]
      %v5167 = vld [vmem:[#allocation3 + $0xc0] sm:$0xff]
      %v5168 = vld [vmem:[#allocation3 + $0xc8] sm:$0xff]
      %v5169 = vld [vmem:[#allocation3 + $0xd0] sm:$0xff]
      %v5170 = vld [vmem:[#allocation3 + $0xd8] sm:$0xff]
      %v5171 = vld [vmem:[#allocation3 + $0xe0] sm:$0xff]
      %v5172 = vld [vmem:[#allocation3 + $0xe8] sm:$0xff]
      %v5173 = vld [vmem:[#allocation3 + $0xf0] sm:$0xff]
      %v5174 = vld [vmem:[#allocation3 + $0xf8] sm:$0xff]
      %v5175 = vadd.f32 %v5143, %v4985
      %v5176 = vadd.f32 %v5144, %v4990
      %v5177 = vadd.f32 %v5145, %v4995
      %v5178 = vadd.f32 %v5146, %v5000
      %v5179 = vadd.f32 %v5147, %v5005
      %v5180 = vadd.f32 %v5148, %v5010
      %v5181 = vadd.f32 %v5149, %v5015
      %v5182 = vadd.f32 %v5150, %v5020
      %v5183 = vadd.f32 %v5151, %v5025
      %v5184 = vadd.f32 %v5152, %v5030
      %v5185 = vadd.f32 %v5153, %v5035
      %v5186 = vadd.f32 %v5154, %v5040
      %v5187 = vadd.f32 %v5155, %v5045
      %v5188 = vadd.f32 %v5156, %v5050
      %v5189 = vadd.f32 %v5157, %v5055
      %v5190 = vadd.f32 %v5158, %v5060
      %v5191 = vadd.f32 %v5159, %v5065
      %v5192 = vadd.f32 %v5160, %v5070
      %v5193 = vadd.f32 %v5161, %v5075
      %v5194 = vadd.f32 %v5162, %v5080
      %v5195 = vadd.f32 %v5163, %v5085
      %v5196 = vadd.f32 %v5164, %v5090
      %v5197 = vadd.f32 %v5165, %v5095
      %v5198 = vadd.f32 %v5166, %v5100
      %v5199 = vadd.f32 %v5167, %v5105
      %v5200 = vadd.f32 %v5168, %v5110
      %v5201 = vadd.f32 %v5169, %v5115
      %v5202 = vadd.f32 %v5170, %v5120
      %v5203 = vadd.f32 %v5171, %v5125
      %v5204 = vadd.f32 %v5172, %v5130
      %v5205 = vadd.f32 %v5173, %v5135
      %v5206 = vadd.f32 %v5174, %v5140
      %5207 = vst.msk [vmem:[#allocation3] sm:$0xff] %vm204, %v5175
      %5208 = vst.msk [vmem:[#allocation3 + $0x8] sm:$0xff] %vm204, %v5176
      %5209 = vst.msk [vmem:[#allocation3 + $0x10] sm:$0xff] %vm204, %v5177
      %5210 = vst.msk [vmem:[#allocation3 + $0x18] sm:$0xff] %vm204, %v5178
      %5211 = vst.msk [vmem:[#allocation3 + $0x20] sm:$0xff] %vm204, %v5179
      %5212 = vst.msk [vmem:[#allocation3 + $0x28] sm:$0xff] %vm204, %v5180
      %5213 = vst.msk [vmem:[#allocation3 + $0x30] sm:$0xff] %vm204, %v5181
      %5214 = vst.msk [vmem:[#allocation3 + $0x38] sm:$0xff] %vm204, %v5182
      %5215 = vst.msk [vmem:[#allocation3 + $0x40] sm:$0xff] %vm204, %v5183
      %5216 = vst.msk [vmem:[#allocation3 + $0x48] sm:$0xff] %vm204, %v5184
      %5217 = vst.msk [vmem:[#allocation3 + $0x50] sm:$0xff] %vm204, %v5185
      %5218 = vst.msk [vmem:[#allocation3 + $0x58] sm:$0xff] %vm204, %v5186
      %5219 = vst.msk [vmem:[#allocation3 + $0x60] sm:$0xff] %vm204, %v5187
      %5220 = vst.msk [vmem:[#allocation3 + $0x68] sm:$0xff] %vm204, %v5188
      %5221 = vst.msk [vmem:[#allocation3 + $0x70] sm:$0xff] %vm204, %v5189
      %5222 = vst.msk [vmem:[#allocation3 + $0x78] sm:$0xff] %vm204, %v5190
      %5223 = vst.msk [vmem:[#allocation3 + $0x80] sm:$0xff] %vm204, %v5191
      %5224 = vst.msk [vmem:[#allocation3 + $0x88] sm:$0xff] %vm204, %v5192
      %5225 = vst.msk [vmem:[#allocation3 + $0x90] sm:$0xff] %vm204, %v5193
      %5226 = vst.msk [vmem:[#allocation3 + $0x98] sm:$0xff] %vm204, %v5194
      %5227 = vst.msk [vmem:[#allocation3 + $0xa0] sm:$0xff] %vm204, %v5195
      %5228 = vst.msk [vmem:[#allocation3 + $0xa8] sm:$0xff] %vm204, %v5196
      %5229 = vst.msk [vmem:[#allocation3 + $0xb0] sm:$0xff] %vm204, %v5197
      %5230 = vst.msk [vmem:[#allocation3 + $0xb8] sm:$0xff] %vm204, %v5198
      %5231 = vst.msk [vmem:[#allocation3 + $0xc0] sm:$0xff] %vm204, %v5199
      %5232 = vst.msk [vmem:[#allocation3 + $0xc8] sm:$0xff] %vm204, %v5200
      %5233 = vst.msk [vmem:[#allocation3 + $0xd0] sm:$0xff] %vm204, %v5201
      %5234 = vst.msk [vmem:[#allocation3 + $0xd8] sm:$0xff] %vm204, %v5202
      %5235 = vst.msk [vmem:[#allocation3 + $0xe0] sm:$0xff] %vm204, %v5203
      %5236 = vst.msk [vmem:[#allocation3 + $0xe8] sm:$0xff] %vm204, %v5204
      %5237 = vst.msk [vmem:[#allocation3 + $0xf0] sm:$0xff] %vm204, %v5205
      %5238 = vst.msk [vmem:[#allocation3 + $0xf8] sm:$0xff] %vm204, %v5206
      %v5239 = vld [vmem:[#allocation3] sm:$0xff]
      %v5240 = vld [vmem:[#allocation3 + $0x8] sm:$0xff]
      %v5241 = vld [vmem:[#allocation3 + $0x10] sm:$0xff]
      %v5242 = vld [vmem:[#allocation3 + $0x18] sm:$0xff]
      %v5243 = vld [vmem:[#allocation3 + $0x20] sm:$0xff]
      %v5244 = vld [vmem:[#allocation3 + $0x28] sm:$0xff]
      %v5245 = vld [vmem:[#allocation3 + $0x30] sm:$0xff]
      %v5246 = vld [vmem:[#allocation3 + $0x38] sm:$0xff]
      %v5247 = vld [vmem:[#allocation3 + $0x40] sm:$0xff]
      %v5248 = vld [vmem:[#allocation3 + $0x48] sm:$0xff]
      %v5249 = vld [vmem:[#allocation3 + $0x50] sm:$0xff]
      %v5250 = vld [vmem:[#allocation3 + $0x58] sm:$0xff]
      %v5251 = vld [vmem:[#allocation3 + $0x60] sm:$0xff]
      %v5252 = vld [vmem:[#allocation3 + $0x68] sm:$0xff]
      %v5253 = vld [vmem:[#allocation3 + $0x70] sm:$0xff]
      %v5254 = vld [vmem:[#allocation3 + $0x78] sm:$0xff]
      %v5255 = vld [vmem:[#allocation3 + $0x80] sm:$0xff]
      %v5256 = vld [vmem:[#allocation3 + $0x88] sm:$0xff]
      %v5257 = vld [vmem:[#allocation3 + $0x90] sm:$0xff]
      %v5258 = vld [vmem:[#allocation3 + $0x98] sm:$0xff]
      %v5259 = vld [vmem:[#allocation3 + $0xa0] sm:$0xff]
      %v5260 = vld [vmem:[#allocation3 + $0xa8] sm:$0xff]
      %v5261 = vld [vmem:[#allocation3 + $0xb0] sm:$0xff]
      %v5262 = vld [vmem:[#allocation3 + $0xb8] sm:$0xff]
      %v5263 = vld [vmem:[#allocation3 + $0xc0] sm:$0xff]
      %v5264 = vld [vmem:[#allocation3 + $0xc8] sm:$0xff]
      %v5265 = vld [vmem:[#allocation3 + $0xd0] sm:$0xff]
      %v5266 = vld [vmem:[#allocation3 + $0xd8] sm:$0xff]
      %v5267 = vld [vmem:[#allocation3 + $0xe0] sm:$0xff]
      %v5268 = vld [vmem:[#allocation3 + $0xe8] sm:$0xff]
      %v5269 = vld [vmem:[#allocation3 + $0xf0] sm:$0xff]
      %v5270 = vld [vmem:[#allocation3 + $0xf8] sm:$0xff]
      %v5271 = vsel %vm204, %v5239, 0.0
      %v5272 = vsel %vm204, %v5240, 0.0
      %v5273 = vadd.f32 %v5271, %v5272
      %v5274 = vsel %vm204, %v5241, 0.0
      %v5275 = vadd.f32 %v5273, %v5274
      %v5276 = vsel %vm204, %v5242, 0.0
      %v5277 = vadd.f32 %v5275, %v5276
      %v5278 = vsel %vm204, %v5243, 0.0
      %v5279 = vadd.f32 %v5277, %v5278
      %v5280 = vsel %vm204, %v5244, 0.0
      %v5281 = vadd.f32 %v5279, %v5280
      %v5282 = vsel %vm204, %v5245, 0.0
      %v5283 = vadd.f32 %v5281, %v5282
      %v5284 = vsel %vm204, %v5246, 0.0
      %v5285 = vadd.f32 %v5283, %v5284
      %v5286 = vsel %vm204, %v5247, 0.0
      %v5287 = vadd.f32 %v5285, %v5286
      %v5288 = vsel %vm204, %v5248, 0.0
      %v5289 = vadd.f32 %v5287, %v5288
      %v5290 = vsel %vm204, %v5249, 0.0
      %v5291 = vadd.f32 %v5289, %v5290
      %v5292 = vsel %vm204, %v5250, 0.0
      %v5293 = vadd.f32 %v5291, %v5292
      %v5294 = vsel %vm204, %v5251, 0.0
      %v5295 = vadd.f32 %v5293, %v5294
      %v5296 = vsel %vm204, %v5252, 0.0
      %v5297 = vadd.f32 %v5295, %v5296
      %v5298 = vsel %vm204, %v5253, 0.0
      %v5299 = vadd.f32 %v5297, %v5298
      %v5300 = vsel %vm204, %v5254, 0.0
      %v5301 = vadd.f32 %v5299, %v5300
      %v5302 = vsel %vm204, %v5255, 0.0
      %v5303 = vadd.f32 %v5301, %v5302
      %v5304 = vsel %vm204, %v5256, 0.0
      %v5305 = vadd.f32 %v5303, %v5304
      %v5306 = vsel %vm204, %v5257, 0.0
      %v5307 = vadd.f32 %v5305, %v5306
      %v5308 = vsel %vm204, %v5258, 0.0
      %v5309 = vadd.f32 %v5307, %v5308
      %v5310 = vsel %vm204, %v5259, 0.0
      %v5311 = vadd.f32 %v5309, %v5310
      %v5312 = vsel %vm204, %v5260, 0.0
      %v5313 = vadd.f32 %v5311, %v5312
      %v5314 = vsel %vm204, %v5261, 0.0
      %v5315 = vadd.f32 %v5313, %v5314
      %v5316 = vsel %vm204, %v5262, 0.0
      %v5317 = vadd.f32 %v5315, %v5316
      %v5318 = vsel %vm204, %v5263, 0.0
      %v5319 = vadd.f32 %v5317, %v5318
      %v5320 = vsel %vm204, %v5264, 0.0
      %v5321 = vadd.f32 %v5319, %v5320
      %v5322 = vsel %vm204, %v5265, 0.0
      %v5323 = vadd.f32 %v5321, %v5322
      %v5324 = vsel %vm204, %v5266, 0.0
      %v5325 = vadd.f32 %v5323, %v5324
      %v5326 = vsel %vm204, %v5267, 0.0
      %v5327 = vadd.f32 %v5325, %v5326
      %v5328 = vsel %vm204, %v5268, 0.0
      %v5329 = vadd.f32 %v5327, %v5328
      %v5330 = vsel %vm204, %v5269, 0.0
      %v5331 = vadd.f32 %v5329, %v5330
      %v5332 = vsel %vm204, %v5270, 0.0
      %v5333 = vadd.f32 %v5331, %v5332
      %v5334 = vrot.slane %v5333, 4
      %v5335 = vadd.f32 %v5333, %v5334
      %v5336 = vrot.slane %v5335, 2
      %v5337 = vadd.f32 %v5335, %v5336
      %v5338 = vrot.slane %v5337, 1
      %v5339 = vadd.f32 %v5337, %v5338
      %v5340 = vmul.f32 %v5339, 0.00390625
      %v5341 = vmul.f32 %v5239, %v5239
      %v5342 = vmul.f32 %v5240, %v5240
      %v5343 = vmul.f32 %v5241, %v5241
      %v5344 = vmul.f32 %v5242, %v5242
      %v5345 = vmul.f32 %v5243, %v5243
      %v5346 = vmul.f32 %v5244, %v5244
      %v5347 = vmul.f32 %v5245, %v5245
      %v5348 = vmul.f32 %v5246, %v5246
      %v5349 = vmul.f32 %v5247, %v5247
      %v5350 = vmul.f32 %v5248, %v5248
      %v5351 = vmul.f32 %v5249, %v5249
      %v5352 = vmul.f32 %v5250, %v5250
      %v5353 = vmul.f32 %v5251, %v5251
      %v5354 = vmul.f32 %v5252, %v5252
      %v5355 = vmul.f32 %v5253, %v5253
      %v5356 = vmul.f32 %v5254, %v5254
      %v5357 = vmul.f32 %v5255, %v5255
      %v5358 = vmul.f32 %v5256, %v5256
      %v5359 = vmul.f32 %v5257, %v5257
      %v5360 = vmul.f32 %v5258, %v5258
      %v5361 = vmul.f32 %v5259, %v5259
      %v5362 = vmul.f32 %v5260, %v5260
      %v5363 = vmul.f32 %v5261, %v5261
      %v5364 = vmul.f32 %v5262, %v5262
      %v5365 = vmul.f32 %v5263, %v5263
      %v5366 = vmul.f32 %v5264, %v5264
      %v5367 = vmul.f32 %v5265, %v5265
      %v5368 = vmul.f32 %v5266, %v5266
      %v5369 = vmul.f32 %v5267, %v5267
      %v5370 = vmul.f32 %v5268, %v5268
      %v5371 = vmul.f32 %v5269, %v5269
      %v5372 = vmul.f32 %v5270, %v5270
      %v5373 = vsel %vm204, %v5341, 0.0
      %v5374 = vsel %vm204, %v5342, 0.0
      %v5375 = vadd.f32 %v5373, %v5374
      %v5376 = vsel %vm204, %v5343, 0.0
      %v5377 = vadd.f32 %v5375, %v5376
      %v5378 = vsel %vm204, %v5344, 0.0
      %v5379 = vadd.f32 %v5377, %v5378
      %v5380 = vsel %vm204, %v5345, 0.0
      %v5381 = vadd.f32 %v5379, %v5380
      %v5382 = vsel %vm204, %v5346, 0.0
      %v5383 = vadd.f32 %v5381, %v5382
      %v5384 = vsel %vm204, %v5347, 0.0
      %v5385 = vadd.f32 %v5383, %v5384
      %v5386 = vsel %vm204, %v5348, 0.0
      %v5387 = vadd.f32 %v5385, %v5386
      %v5388 = vsel %vm204, %v5349, 0.0
      %v5389 = vadd.f32 %v5387, %v5388
      %v5390 = vsel %vm204, %v5350, 0.0
      %v5391 = vadd.f32 %v5389, %v5390
      %v5392 = vsel %vm204, %v5351, 0.0
      %v5393 = vadd.f32 %v5391, %v5392
      %v5394 = vsel %vm204, %v5352, 0.0
      %v5395 = vadd.f32 %v5393, %v5394
      %v5396 = vsel %vm204, %v5353, 0.0
      %v5397 = vadd.f32 %v5395, %v5396
      %v5398 = vsel %vm204, %v5354, 0.0
      %v5399 = vadd.f32 %v5397, %v5398
      %v5400 = vsel %vm204, %v5355, 0.0
      %v5401 = vadd.f32 %v5399, %v5400
      %v5402 = vsel %vm204, %v5356, 0.0
      %v5403 = vadd.f32 %v5401, %v5402
      %v5404 = vsel %vm204, %v5357, 0.0
      %v5405 = vadd.f32 %v5403, %v5404
      %v5406 = vsel %vm204, %v5358, 0.0
      %v5407 = vadd.f32 %v5405, %v5406
      %v5408 = vsel %vm204, %v5359, 0.0
      %v5409 = vadd.f32 %v5407, %v5408
      %v5410 = vsel %vm204, %v5360, 0.0
      %v5411 = vadd.f32 %v5409, %v5410
      %v5412 = vsel %vm204, %v5361, 0.0
      %v5413 = vadd.f32 %v5411, %v5412
      %v5414 = vsel %vm204, %v5362, 0.0
      %v5415 = vadd.f32 %v5413, %v5414
      %v5416 = vsel %vm204, %v5363, 0.0
      %v5417 = vadd.f32 %v5415, %v5416
      %v5418 = vsel %vm204, %v5364, 0.0
      %v5419 = vadd.f32 %v5417, %v5418
      %v5420 = vsel %vm204, %v5365, 0.0
      %v5421 = vadd.f32 %v5419, %v5420
      %v5422 = vsel %vm204, %v5366, 0.0
      %v5423 = vadd.f32 %v5421, %v5422
      %v5424 = vsel %vm204, %v5367, 0.0
      %v5425 = vadd.f32 %v5423, %v5424
      %v5426 = vsel %vm204, %v5368, 0.0
      %v5427 = vadd.f32 %v5425, %v5426
      %v5428 = vsel %vm204, %v5369, 0.0
      %v5429 = vadd.f32 %v5427, %v5428
      %v5430 = vsel %vm204, %v5370, 0.0
      %v5431 = vadd.f32 %v5429, %v5430
      %v5432 = vsel %vm204, %v5371, 0.0
      %v5433 = vadd.f32 %v5431, %v5432
      %v5434 = vsel %vm204, %v5372, 0.0
      %v5435 = vadd.f32 %v5433, %v5434
      %v5436 = vrot.slane %v5435, 4
      %v5437 = vadd.f32 %v5435, %v5436
      %v5438 = vrot.slane %v5437, 2
      %v5439 = vadd.f32 %v5437, %v5438
      %v5440 = vrot.slane %v5439, 1
      %v5441 = vadd.f32 %v5439, %v5440
      %v5442 = vmul.f32 %v5441, 0.00390625
      %v5443 = vmul.f32 %v5340, %v5340
      %v5444 = vsub.f32 %v5442, %v5443
      %v5445 = vsub.f32 %v5239, %v5340
      %v5446 = vsub.f32 %v5240, %v5340
      %v5447 = vsub.f32 %v5241, %v5340
      %v5448 = vsub.f32 %v5242, %v5340
      %v5449 = vsub.f32 %v5243, %v5340
      %v5450 = vsub.f32 %v5244, %v5340
      %v5451 = vsub.f32 %v5245, %v5340
      %v5452 = vsub.f32 %v5246, %v5340
      %v5453 = vsub.f32 %v5247, %v5340
      %v5454 = vsub.f32 %v5248, %v5340
      %v5455 = vsub.f32 %v5249, %v5340
      %v5456 = vsub.f32 %v5250, %v5340
      %v5457 = vsub.f32 %v5251, %v5340
      %v5458 = vsub.f32 %v5252, %v5340
      %v5459 = vsub.f32 %v5253, %v5340
      %v5460 = vsub.f32 %v5254, %v5340
      %v5461 = vsub.f32 %v5255, %v5340
      %v5462 = vsub.f32 %v5256, %v5340
      %v5463 = vsub.f32 %v5257, %v5340
      %v5464 = vsub.f32 %v5258, %v5340
      %v5465 = vsub.f32 %v5259, %v5340
      %v5466 = vsub.f32 %v5260, %v5340
      %v5467 = vsub.f32 %v5261, %v5340
      %v5468 = vsub.f32 %v5262, %v5340
      %v5469 = vsub.f32 %v5263, %v5340
      %v5470 = vsub.f32 %v5264, %v5340
      %v5471 = vsub.f32 %v5265, %v5340
      %v5472 = vsub.f32 %v5266, %v5340
      %v5473 = vsub.f32 %v5267, %v5340
      %v5474 = vsub.f32 %v5268, %v5340
      %v5475 = vsub.f32 %v5269, %v5340
      %v5476 = vsub.f32 %v5270, %v5340
      %v5477 = vadd.f32 %v5444, 1e-05
      %v5478 = vrsqrt.pop %v5477
      %v5479 = vmul.f32 %v5445, %v5478
      %v5480 = vmul.f32 %v5446, %v5478
      %v5481 = vmul.f32 %v5447, %v5478
      %v5482 = vmul.f32 %v5448, %v5478
      %v5483 = vmul.f32 %v5449, %v5478
      %v5484 = vmul.f32 %v5450, %v5478
      %v5485 = vmul.f32 %v5451, %v5478
      %v5486 = vmul.f32 %v5452, %v5478
      %v5487 = vmul.f32 %v5453, %v5478
      %v5488 = vmul.f32 %v5454, %v5478
      %v5489 = vmul.f32 %v5455, %v5478
      %v5490 = vmul.f32 %v5456, %v5478
      %v5491 = vmul.f32 %v5457, %v5478
      %v5492 = vmul.f32 %v5458, %v5478
      %v5493 = vmul.f32 %v5459, %v5478
      %v5494 = vmul.f32 %v5460, %v5478
      %v5495 = vmul.f32 %v5461, %v5478
      %v5496 = vmul.f32 %v5462, %v5478
      %v5497 = vmul.f32 %v5463, %v5478
      %v5498 = vmul.f32 %v5464, %v5478
      %v5499 = vmul.f32 %v5465, %v5478
      %v5500 = vmul.f32 %v5466, %v5478
      %v5501 = vmul.f32 %v5467, %v5478
      %v5502 = vmul.f32 %v5468, %v5478
      %v5503 = vmul.f32 %v5469, %v5478
      %v5504 = vmul.f32 %v5470, %v5478
      %v5505 = vmul.f32 %v5471, %v5478
      %v5506 = vmul.f32 %v5472, %v5478
      %v5507 = vmul.f32 %v5473, %v5478
      %v5508 = vmul.f32 %v5474, %v5478
      %v5509 = vmul.f32 %v5475, %v5478
      %v5510 = vmul.f32 %v5476, %v5478
      %v5511 = vld [vmem:[%s165] sm:$0xff]
      %v5512 = vld [vmem:[%s165 + $0x8] sm:$0xff]
      %v5513 = vld [vmem:[%s165 + $0x10] sm:$0xff]
      %v5514 = vld [vmem:[%s165 + $0x18] sm:$0xff]
      %v5515 = vld [vmem:[%s165 + $0x20] sm:$0xff]
      %v5516 = vld [vmem:[%s165 + $0x28] sm:$0xff]
      %v5517 = vld [vmem:[%s165 + $0x30] sm:$0xff]
      %v5518 = vld [vmem:[%s165 + $0x38] sm:$0xff]
      %v5519 = vld [vmem:[%s165 + $0x40] sm:$0xff]
      %v5520 = vld [vmem:[%s165 + $0x48] sm:$0xff]
      %v5521 = vld [vmem:[%s165 + $0x50] sm:$0xff]
      %v5522 = vld [vmem:[%s165 + $0x58] sm:$0xff]
      %v5523 = vld [vmem:[%s165 + $0x60] sm:$0xff]
      %v5524 = vld [vmem:[%s165 + $0x68] sm:$0xff]
      %v5525 = vld [vmem:[%s165 + $0x70] sm:$0xff]
      %v5526 = vld [vmem:[%s165 + $0x78] sm:$0xff]
      %v5527 = vld [vmem:[%s165 + $0x80] sm:$0xff]
      %v5528 = vld [vmem:[%s165 + $0x88] sm:$0xff]
      %v5529 = vld [vmem:[%s165 + $0x90] sm:$0xff]
      %v5530 = vld [vmem:[%s165 + $0x98] sm:$0xff]
      %v5531 = vld [vmem:[%s165 + $0xa0] sm:$0xff]
      %v5532 = vld [vmem:[%s165 + $0xa8] sm:$0xff]
      %v5533 = vld [vmem:[%s165 + $0xb0] sm:$0xff]
      %v5534 = vld [vmem:[%s165 + $0xb8] sm:$0xff]
      %v5535 = vld [vmem:[%s165 + $0xc0] sm:$0xff]
      %v5536 = vld [vmem:[%s165 + $0xc8] sm:$0xff]
      %v5537 = vld [vmem:[%s165 + $0xd0] sm:$0xff]
      %v5538 = vld [vmem:[%s165 + $0xd8] sm:$0xff]
      %v5539 = vld [vmem:[%s165 + $0xe0] sm:$0xff]
      %v5540 = vld [vmem:[%s165 + $0xe8] sm:$0xff]
      %v5541 = vld [vmem:[%s165 + $0xf0] sm:$0xff]
      %v5542 = vld [vmem:[%s165 + $0xf8] sm:$0xff]
      %v5543 = vadd.f32 %v5479, %v5511
      %v5544 = vadd.f32 %v5480, %v5512
      %v5545 = vadd.f32 %v5481, %v5513
      %v5546 = vadd.f32 %v5482, %v5514
      %v5547 = vadd.f32 %v5483, %v5515
      %v5548 = vadd.f32 %v5484, %v5516
      %v5549 = vadd.f32 %v5485, %v5517
      %v5550 = vadd.f32 %v5486, %v5518
      %v5551 = vadd.f32 %v5487, %v5519
      %v5552 = vadd.f32 %v5488, %v5520
      %v5553 = vadd.f32 %v5489, %v5521
      %v5554 = vadd.f32 %v5490, %v5522
      %v5555 = vadd.f32 %v5491, %v5523
      %v5556 = vadd.f32 %v5492, %v5524
      %v5557 = vadd.f32 %v5493, %v5525
      %v5558 = vadd.f32 %v5494, %v5526
      %v5559 = vadd.f32 %v5495, %v5527
      %v5560 = vadd.f32 %v5496, %v5528
      %v5561 = vadd.f32 %v5497, %v5529
      %v5562 = vadd.f32 %v5498, %v5530
      %v5563 = vadd.f32 %v5499, %v5531
      %v5564 = vadd.f32 %v5500, %v5532
      %v5565 = vadd.f32 %v5501, %v5533
      %v5566 = vadd.f32 %v5502, %v5534
      %v5567 = vadd.f32 %v5503, %v5535
      %v5568 = vadd.f32 %v5504, %v5536
      %v5569 = vadd.f32 %v5505, %v5537
      %v5570 = vadd.f32 %v5506, %v5538
      %v5571 = vadd.f32 %v5507, %v5539
      %v5572 = vadd.f32 %v5508, %v5540
      %v5573 = vadd.f32 %v5509, %v5541
      %v5574 = vadd.f32 %v5510, %v5542
      %5575 = vst.msk [vmem:[%s170] sm:$0xff] %vm204, %v5543
      %5576 = vst.msk [vmem:[%s170 + $0x8] sm:$0xff] %vm204, %v5544
      %5577 = vst.msk [vmem:[%s170 + $0x10] sm:$0xff] %vm204, %v5545
      %5578 = vst.msk [vmem:[%s170 + $0x18] sm:$0xff] %vm204, %v5546
      %5579 = vst.msk [vmem:[%s170 + $0x20] sm:$0xff] %vm204, %v5547
      %5580 = vst.msk [vmem:[%s170 + $0x28] sm:$0xff] %vm204, %v5548
      %5581 = vst.msk [vmem:[%s170 + $0x30] sm:$0xff] %vm204, %v5549
      %5582 = vst.msk [vmem:[%s170 + $0x38] sm:$0xff] %vm204, %v5550
      %5583 = vst.msk [vmem:[%s170 + $0x40] sm:$0xff] %vm204, %v5551
      %5584 = vst.msk [vmem:[%s170 + $0x48] sm:$0xff] %vm204, %v5552
      %5585 = vst.msk [vmem:[%s170 + $0x50] sm:$0xff] %vm204, %v5553
      %5586 = vst.msk [vmem:[%s170 + $0x58] sm:$0xff] %vm204, %v5554
      %5587 = vst.msk [vmem:[%s170 + $0x60] sm:$0xff] %vm204, %v5555
      %5588 = vst.msk [vmem:[%s170 + $0x68] sm:$0xff] %vm204, %v5556
      %5589 = vst.msk [vmem:[%s170 + $0x70] sm:$0xff] %vm204, %v5557
      %5590 = vst.msk [vmem:[%s170 + $0x78] sm:$0xff] %vm204, %v5558
      %5591 = vst.msk [vmem:[%s170 + $0x80] sm:$0xff] %vm204, %v5559
      %5592 = vst.msk [vmem:[%s170 + $0x88] sm:$0xff] %vm204, %v5560
      %5593 = vst.msk [vmem:[%s170 + $0x90] sm:$0xff] %vm204, %v5561
      %5594 = vst.msk [vmem:[%s170 + $0x98] sm:$0xff] %vm204, %v5562
      %5595 = vst.msk [vmem:[%s170 + $0xa0] sm:$0xff] %vm204, %v5563
      %5596 = vst.msk [vmem:[%s170 + $0xa8] sm:$0xff] %vm204, %v5564
      %5597 = vst.msk [vmem:[%s170 + $0xb0] sm:$0xff] %vm204, %v5565
      %5598 = vst.msk [vmem:[%s170 + $0xb8] sm:$0xff] %vm204, %v5566
      %5599 = vst.msk [vmem:[%s170 + $0xc0] sm:$0xff] %vm204, %v5567
      %5600 = vst.msk [vmem:[%s170 + $0xc8] sm:$0xff] %vm204, %v5568
      %5601 = vst.msk [vmem:[%s170 + $0xd0] sm:$0xff] %vm204, %v5569
      %5602 = vst.msk [vmem:[%s170 + $0xd8] sm:$0xff] %vm204, %v5570
      %5603 = vst.msk [vmem:[%s170 + $0xe0] sm:$0xff] %vm204, %v5571
      %5604 = vst.msk [vmem:[%s170 + $0xe8] sm:$0xff] %vm204, %v5572
      %5605 = vst.msk [vmem:[%s170 + $0xf0] sm:$0xff] %vm204, %v5573
      %5606 = vst.msk [vmem:[%s170 + $0xf8] sm:$0xff] %vm204, %v5574
      %p5607 = scmp.lt.s32.totalorder %s14, 1
      %s5608 = scalar_select %p5607, %s14, 1
      %s5609 = smul.addr %s5608, 32
      %s5610 = smul.addr %s5609, 8
      %s5611 = scalar_lea.vmem %s3, %s5610
      // Predicated region
      $region33: #{residual_block_forward.1} parent=31 // pred_check
        %p5612 = pneg %p100
      $region34: #{residual_block_forward.1} parent=31 // pred_check_branch
        %5614 = sbr.rel (%p5612) target = $region36
      $region35: #{residual_block_forward.1} parent=31 // pred_region
        _
      $region36: #{residual_block_forward.1} parent=31 // pred_fallthru
        _
    $region32: #{residual_block_forward.1} parent=5 // pred_fallthru
      _
    %p5615 = scmp.le.s32.totalorder 2, %s9
    // Predicated region
    $region37: #{residual_block_forward.1} parent=5 // pred_check
      %p5616 = pneg %p5615
    $region38: #{residual_block_forward.1} parent=5 // pred_check_branch
      %5618 = sbr.rel (%p5616) target = $region40
    $region39: #{residual_block_forward.1} parent=5 // pred_region
      %s5619 = ssub.s32 %s9, 2
      // Predicated region
      $region41: #{residual_block_forward.1} parent=39 // pred_check
        %p5620 = pneg %p106
      $region42: #{residual_block_forward.1} parent=39 // pred_check_branch
        %5622 = sbr.rel (%p5620) target = $region44
      $region43: #{residual_block_forward.1} parent=39 // pred_region
        %p5623 = scmp.lt.s32.totalorder %s15, 1
        %s5624 = scalar_select %p5623, %s15, 1
        %s5625 = smul.addr %s5624, 32
        %s5626 = smul.addr %s5625, 8
        %s5627 = scalar_lea.vmem %s3, %s5626
      $region44: #{residual_block_forward.1} parent=39 // pred_fallthru
        _
    $region40: #{residual_block_forward.1} parent=5 // pred_fallthru
      _
  $region6: #{residual_block_forward.1} parent=0 // loop_footer
    %s13 = sadd.s32 1, %s9
  $region7: #{residual_block_forward.1} parent=0 // loop_footer_branch
    %8 = sbr.rel target = $region3
  $region8: #{residual_block_forward.1} parent=0 // loop_exit
    _

</llo_original>
